<compile_context>
chip_gen: v7x
topology: tpu7x:2x2x1
jax: 0.10.0
libtpu: 0.0.40
codegen_flags: <defaults>
</compile_context>

<pallas_src>
import functools
import jax
import jax.numpy as jnp
from jax.experimental import pallas as pl
from jax.experimental.pallas import tpu as pltpu

# ---- synthetic "bert_model" config (small, deterministic) ----
VOCAB = 100
MAX_POS = 16
TYPE_VOCAB = 2
HIDDEN = 32
NUM_HEADS = 2
HEAD_DIM = HIDDEN // NUM_HEADS
INTERMEDIATE = 64
NUM_LAYERS = 2
NUM_CLASSES = 3          # BERTClassifier.NUM_CLASSES
CLS_PAD = 128            # classifier output padded to a full 128-lane slab
LN_EPS = 1e-12


def _vmem():
    return pl.BlockSpec(memory_space=pltpu.MemorySpace.VMEM)


def _layernorm(x, g, b, eps=LN_EPS):
    mean = jnp.mean(x, axis=-1, keepdims=True)
    cent = x - mean
    var = jnp.mean(cent * cent, axis=-1, keepdims=True)
    return cent * jax.lax.rsqrt(var + eps) * g + b


# ---------------- fused whole-model Pallas kernel ----------------

def _bert_fused_kernel(emb_ref, mask_ref,
                       emb_g_ref, emb_b_ref,
                       wqkv_ref, bqkv_ref, wo_ref, bo_ref,
                       ln1_g_ref, ln1_b_ref,
                       wfi_ref, bfi_ref, wfo_ref, bfo_ref,
                       ln2_g_ref, ln2_b_ref,
                       pool_w_ref, pool_b_ref, cls_w_ref, cls_b_ref,
                       out_ref, ctx_ref, *, batch, seq):
    scale = 1.0 / (HEAD_DIM ** 0.5)

    # Embedding LayerNorm (embedding sum arrives precomputed; no zeros residual).
    h = _layernorm(emb_ref[...], emb_g_ref[...], emb_b_ref[...])      # (B*S, H)

    for l in range(NUM_LAYERS):
        # Packed QKV projection: one MXU matmul -> (B*S, 3H).
        qkv = jnp.dot(h, wqkv_ref[l], preferred_element_type=jnp.float32) + bqkv_ref[l]

        # Attention, statically unrolled over (batch, head); all VMEM-resident.
        for b in range(batch):
            mrow = mask_ref[b]                                         # (1, S) additive
            r0, r1 = b * seq, (b + 1) * seq
            for hd in range(NUM_HEADS):
                c0, c1 = hd * HEAD_DIM, (hd + 1) * HEAD_DIM
                q = qkv[r0:r1, c0:c1]                                  # (S, Dh)
                k = qkv[r0:r1, HIDDEN + c0:HIDDEN + c1]                # (S, Dh)
                v = qkv[r0:r1, 2 * HIDDEN + c0:2 * HIDDEN + c1]        # (S, Dh)
                s = jax.lax.dot_general(
                    q, k, (((1,), (1,)), ((), ())),
                    preferred_element_type=jnp.float32) * scale + mrow  # (S, S)
                s = s - jnp.max(s, axis=-1, keepdims=True)
                p = jnp.exp(s)
                p = p * pl.reciprocal(jnp.sum(p, axis=-1, keepdims=True), approx=True)
                ctx_ref[r0:r1, c0:c1] = jnp.dot(
                    p, v, preferred_element_type=jnp.float32)

        # Output projection + residual + LN1 (all epilogue, still in VMEM).
        attn = jnp.dot(ctx_ref[...], wo_ref[l],
                       preferred_element_type=jnp.float32) + bo_ref[l]
        h = _layernorm(attn + h, ln1_g_ref[l], ln1_b_ref[l])

        # FFN + residual + LN2.
        ff = jnp.dot(h, wfi_ref[l], preferred_element_type=jnp.float32) + bfi_ref[l]
        ff = jax.nn.gelu(ff, approximate=True)  # TODO(synk): HF BERT uses erf GELU
        ff = jnp.dot(ff, wfo_ref[l], preferred_element_type=jnp.float32) + bfo_ref[l]
        h = _layernorm(ff + h, ln2_g_ref[l], ln2_b_ref[l])

    # Pooler + classifier applied to every token row (cheap at this size) so the
    # only HBM writeback is a lane-dense (B*S, 128) slab; the wrapper selects
    # the CLS row and the real NUM_CLASSES columns.
    pooled = jnp.tanh(jnp.dot(h, pool_w_ref[...],
                              preferred_element_type=jnp.float32) + pool_b_ref[...])
    out_ref[...] = jnp.dot(pooled, cls_w_ref[...],
                           preferred_element_type=jnp.float32) + cls_b_ref[...]


# ---------------- parameter init (deterministic, synthetic) ----------------

def init_params(key):
    keys = iter(jax.random.split(key, 128))

    def dense(kin, kout):
        return {"w": 0.02 * jax.random.normal(next(keys), (kin, kout), jnp.float32),
                "b": jnp.zeros((kout,), jnp.float32)}

    params = {
        "word_emb": 0.02 * jax.random.normal(next(keys), (VOCAB, HIDDEN), jnp.float32),
        "pos_emb":  0.02 * jax.random.normal(next(keys), (MAX_POS, HIDDEN), jnp.float32),
        "type_emb": 0.02 * jax.random.normal(next(keys), (TYPE_VOCAB, HIDDEN), jnp.float32),
        "emb_ln_g": jnp.ones((HIDDEN,), jnp.float32),
        "emb_ln_b": jnp.zeros((HIDDEN,), jnp.float32),
        "layers": [],
        "pooler": dense(HIDDEN, HIDDEN),
        "classifier": dense(HIDDEN, NUM_CLASSES),   # nn.Linear(hidden_size, NUM_CLASSES)
    }
    for _ in range(NUM_LAYERS):
        params["layers"].append({
            "q": dense(HIDDEN, HIDDEN), "k": dense(HIDDEN, HIDDEN),
            "v": dense(HIDDEN, HIDDEN), "o": dense(HIDDEN, HIDDEN),
            "ln1_g": jnp.ones((HIDDEN,), jnp.float32),
            "ln1_b": jnp.zeros((HIDDEN,), jnp.float32),
            "ffn_in": dense(HIDDEN, INTERMEDIATE),
            "ffn_out": dense(INTERMEDIATE, HIDDEN),
            "ln2_g": jnp.ones((HIDDEN,), jnp.float32),
            "ln2_b": jnp.zeros((HIDDEN,), jnp.float32),
        })
    return params


def pack_params(params):
    """Repack into the stacked / fused layout the kernel consumes."""
    def stack(fn):
        return jnp.stack([fn(lp) for lp in params["layers"]], axis=0)

    cls_w = jnp.zeros((HIDDEN, CLS_PAD), jnp.float32).at[:, :NUM_CLASSES].set(
        params["classifier"]["w"])
    cls_b = jnp.zeros((1, CLS_PAD), jnp.float32).at[0, :NUM_CLASSES].set(
        params["classifier"]["b"])

    return {
        "word_emb": params["word_emb"],
        "pos_emb": params["pos_emb"],
        "type_emb": params["type_emb"],
        "emb_ln_g": params["emb_ln_g"].reshape(1, HIDDEN),
        "emb_ln_b": params["emb_ln_b"].reshape(1, HIDDEN),
        # fused QKV weights / biases
        "wqkv": stack(lambda lp: jnp.concatenate(
            [lp["q"]["w"], lp["k"]["w"], lp["v"]["w"]], axis=1)),       # (L, H, 3H)
        "bqkv": stack(lambda lp: jnp.concatenate(
            [lp["q"]["b"], lp["k"]["b"], lp["v"]["b"]])[None, :]),      # (L, 1, 3H)
        "wo": stack(lambda lp: lp["o"]["w"]),                           # (L, H, H)
        "bo": stack(lambda lp: lp["o"]["b"][None, :]),                  # (L, 1, H)
        "ln1_g": stack(lambda lp: lp["ln1_g"][None, :]),                # (L, 1, H)
        "ln1_b": stack(lambda lp: lp["ln1_b"][None, :]),
        "wfi": stack(lambda lp: lp["ffn_in"]["w"]),                     # (L, H, I)
        "bfi": stack(lambda lp: lp["ffn_in"]["b"][None, :]),            # (L, 1, I)
        "wfo": stack(lambda lp: lp["ffn_out"]["w"]),                    # (L, I, H)
        "bfo": stack(lambda lp: lp["ffn_out"]["b"][None, :]),           # (L, 1, H)
        "ln2_g": stack(lambda lp: lp["ln2_g"][None, :]),
        "ln2_b": stack(lambda lp: lp["ln2_b"][None, :]),
        "pool_w": params["pooler"]["w"],                                # (H, H)
        "pool_b": params["pooler"]["b"].reshape(1, HIDDEN),             # (1, H)
        "cls_w": cls_w,                                                 # (H, 128)
        "cls_b": cls_b,                                                 # (1, 128)
    }


# ---------------- forward pass (gathers in JAX, everything else in one kernel) ----------------

def bert_classifier_forward(packed, input_ids, attention_mask):
    B, S = input_ids.shape

    # Embedding gathers are glue (XLA); their sum feeds the fused kernel directly.
    word = jnp.take(packed["word_emb"], input_ids, axis=0)              # (B,S,H)
    pos = packed["pos_emb"][:S][None, :, :]                             # (1,S,H)
    tok = packed["type_emb"][0][None, None, :]                          # (1,1,H)
    emb = (word + pos + tok).reshape(B * S, HIDDEN)

    # Additive mask, (B, 1, S): 0 where attended, -1e9 where padded.
    add_mask = ((1.0 - attention_mask.astype(jnp.float32)) * -1e9).reshape(B, 1, S)

    kern = functools.partial(_bert_fused_kernel, batch=B, seq=S)
    out = pl.pallas_call(
        kern,
        out_shape=jax.ShapeDtypeStruct((B * S, CLS_PAD), jnp.float32),
        in_specs=[_vmem() for _ in range(20)],
        out_specs=_vmem(),
        scratch_shapes=[pltpu.VMEM((B * S, HIDDEN), jnp.float32)],      # attention ctx
    )(emb, add_mask,
      packed["emb_ln_g"], packed["emb_ln_b"],
      packed["wqkv"], packed["bqkv"], packed["wo"], packed["bo"],
      packed["ln1_g"], packed["ln1_b"],
      packed["wfi"], packed["bfi"], packed["wfo"], packed["bfo"],
      packed["ln2_g"], packed["ln2_b"],
      packed["pool_w"], packed["pool_b"], packed["cls_w"], packed["cls_b"])

    # finetune=True path: classifier(pooler_output) — pooler acts on the CLS row.
    return out.reshape(B, S, CLS_PAD)[:, 0, :NUM_CLASSES]               # (B, 3)


if __name__ == "__main__":
    key = jax.random.PRNGKey(0)
    pkey, ikey = jax.random.split(key)
    params = init_params(pkey)
    packed = pack_params(params)

    B, S = 2, 8
    input_ids = jax.random.randint(ikey, (B, S), 0, VOCAB, dtype=jnp.int32)
    attention_mask = jnp.array([[1, 1, 1, 1, 1, 1, 1, 1],
                                [1, 1, 1, 1, 1, 1, 0, 0]], dtype=jnp.int32)

    fwd = jax.jit(lambda ids, m: bert_classifier_forward(packed, ids, m))
    logits = fwd(input_ids, attention_mask)
    jax.block_until_ready(logits)
    assert logits.shape == (B, NUM_CLASSES)
    assert bool(jnp.all(jnp.isfinite(logits)))
    print("KERNEL_OK")
</pallas_src>

<mosaic_0001>
module attributes {stable_mosaic.version = 11 : i64} {
  func.func @_bert_fused_kernel(%arg0: memref<16x32xf32, #tpu.memory_space<vmem>>, %arg1: memref<2x1x8xf32, #tpu.memory_space<vmem>>, %arg2: memref<1x32xf32, #tpu.memory_space<vmem>>, %arg3: memref<1x32xf32, #tpu.memory_space<vmem>>, %arg4: memref<2x32x96xf32, #tpu.memory_space<vmem>>, %arg5: memref<2x1x96xf32, #tpu.memory_space<vmem>>, %arg6: memref<2x32x32xf32, #tpu.memory_space<vmem>>, %arg7: memref<2x1x32xf32, #tpu.memory_space<vmem>>, %arg8: memref<2x1x32xf32, #tpu.memory_space<vmem>>, %arg9: memref<2x1x32xf32, #tpu.memory_space<vmem>>, %arg10: memref<2x32x64xf32, #tpu.memory_space<vmem>>, %arg11: memref<2x1x64xf32, #tpu.memory_space<vmem>>, %arg12: memref<2x64x32xf32, #tpu.memory_space<vmem>>, %arg13: memref<2x1x32xf32, #tpu.memory_space<vmem>>, %arg14: memref<2x1x32xf32, #tpu.memory_space<vmem>>, %arg15: memref<2x1x32xf32, #tpu.memory_space<vmem>>, %arg16: memref<32x32xf32, #tpu.memory_space<vmem>>, %arg17: memref<1x32xf32, #tpu.memory_space<vmem>>, %arg18: memref<32x128xf32, #tpu.memory_space<vmem>>, %arg19: memref<1x128xf32, #tpu.memory_space<vmem>>, %arg20: memref<16x128xf32, #tpu.memory_space<vmem>>, %arg21: memref<16x32xf32, #tpu.memory_space<vmem>>) attributes {dimension_semantics = [], scalar_prefetch = 0 : i64, scratch_operands = 1 : i64, tpu.core_type = #tpu.core_type<tc>} {
    %c0 = arith.constant 0 : index
    %c0_0 = arith.constant 0 : index
    %0 = vector.load %arg0[%c0, %c0_0] : memref<16x32xf32, #tpu.memory_space<vmem>>, vector<16x32xf32>
    %c0_1 = arith.constant 0 : index
    %c0_2 = arith.constant 0 : index
    %1 = vector.load %arg2[%c0_1, %c0_2] : memref<1x32xf32, #tpu.memory_space<vmem>>, vector<1x32xf32>
    %c0_3 = arith.constant 0 : index
    %c0_4 = arith.constant 0 : index
    %2 = vector.load %arg3[%c0_3, %c0_4] : memref<1x32xf32, #tpu.memory_space<vmem>>, vector<1x32xf32>
    %cst = arith.constant dense<0.000000e+00> : vector<16xf32>
    %3 = vector.multi_reduction <add>, %0, %cst [1] : vector<16x32xf32> to vector<16xf32>
    %4 = vector.shape_cast %3 : vector<16xf32> to vector<16x1xf32>
    %cst_5 = arith.constant 3.200000e+01 : f32
    %5 = vector.broadcast %cst_5 : f32 to vector<16x1xf32>
    %6 = arith.divf %4, %5 : vector<16x1xf32>
    %7 = vector.broadcast %6 : vector<16x1xf32> to vector<16x32xf32>
    %8 = arith.subf %0, %7 : vector<16x32xf32>
    %9 = arith.mulf %8, %8 : vector<16x32xf32>
    %cst_6 = arith.constant dense<0.000000e+00> : vector<16xf32>
    %10 = vector.multi_reduction <add>, %9, %cst_6 [1] : vector<16x32xf32> to vector<16xf32>
    %11 = vector.shape_cast %10 : vector<16xf32> to vector<16x1xf32>
    %cst_7 = arith.constant 3.200000e+01 : f32
    %12 = vector.broadcast %cst_7 : f32 to vector<16x1xf32>
    %13 = arith.divf %11, %12 : vector<16x1xf32>
    %cst_8 = arith.constant 9.99999996E-13 : f32
    %14 = vector.broadcast %cst_8 : f32 to vector<16x1xf32>
    %15 = arith.addf %13, %14 : vector<16x1xf32>
    %16 = math.rsqrt %15 : vector<16x1xf32>
    %17 = vector.broadcast %16 : vector<16x1xf32> to vector<16x32xf32>
    %18 = arith.mulf %8, %17 : vector<16x32xf32>
    %19 = vector.broadcast %1 : vector<1x32xf32> to vector<16x32xf32>
    %20 = arith.mulf %18, %19 : vector<16x32xf32>
    %21 = vector.broadcast %2 : vector<1x32xf32> to vector<16x32xf32>
    %22 = arith.addf %20, %21 : vector<16x32xf32>
    %c0_9 = arith.constant 0 : index
    %c0_10 = arith.constant 0 : index
    %c0_11 = arith.constant 0 : index
    %23 = vector.load %arg4[%c0_9, %c0_10, %c0_11] : memref<2x32x96xf32, #tpu.memory_space<vmem>>, vector<1x32x96xf32>
    %24 = vector.shape_cast %23 : vector<1x32x96xf32> to vector<32x96xf32>
    %cst_12 = arith.constant dense<0.000000e+00> : vector<16x96xf32>
    %25 = tpu.matmul %22, %24, %cst_12 {dimension_numbers = #tpu.dot_dimension_numbers<[1], [0], [0], [1], [0, 0, 1, 1], [], []>} : vector<16x32xf32>, vector<32x96xf32>, vector<16x96xf32> -> vector<16x96xf32>
    %c0_13 = arith.constant 0 : index
    %c0_14 = arith.constant 0 : index
    %c0_15 = arith.constant 0 : index
    %26 = vector.load %arg5[%c0_13, %c0_14, %c0_15] : memref<2x1x96xf32, #tpu.memory_space<vmem>>, vector<1x1x96xf32>
    %27 = vector.shape_cast %26 : vector<1x1x96xf32> to vector<1x96xf32>
    %28 = vector.broadcast %27 : vector<1x96xf32> to vector<16x96xf32>
    %29 = arith.addf %25, %28 : vector<16x96xf32>
    %c0_16 = arith.constant 0 : index
    %c0_17 = arith.constant 0 : index
    %c0_18 = arith.constant 0 : index
    %30 = vector.load %arg1[%c0_16, %c0_17, %c0_18] : memref<2x1x8xf32, #tpu.memory_space<vmem>>, vector<1x1x8xf32>
    %31 = vector.shape_cast %30 : vector<1x1x8xf32> to vector<1x8xf32>
    %32 = vector.extract_strided_slice %29 {offsets = [0, 0], sizes = [8, 16], strides = [1, 1]} : vector<16x96xf32> to vector<8x16xf32>
    %33 = vector.extract_strided_slice %29 {offsets = [0, 32], sizes = [8, 16], strides = [1, 1]} : vector<16x96xf32> to vector<8x16xf32>
    %34 = vector.extract_strided_slice %29 {offsets = [0, 64], sizes = [8, 16], strides = [1, 1]} : vector<16x96xf32> to vector<8x16xf32>
    %cst_19 = arith.constant dense<0.000000e+00> : vector<8x8xf32>
    %35 = tpu.matmul %32, %33, %cst_19 {dimension_numbers = #tpu.dot_dimension_numbers<[1], [1], [0], [0], [0, 0, 1, 0], [], []>} : vector<8x16xf32>, vector<8x16xf32>, vector<8x8xf32> -> vector<8x8xf32>
    %cst_20 = arith.constant 2.500000e-01 : f32
    %36 = vector.broadcast %cst_20 : f32 to vector<8x8xf32>
    %37 = arith.mulf %35, %36 : vector<8x8xf32>
    %38 = vector.broadcast %31 : vector<1x8xf32> to vector<8x8xf32>
    %39 = arith.addf %37, %38 : vector<8x8xf32>
    %cst_21 = arith.constant dense<0xFF800000> : vector<8xf32>
    %40 = vector.multi_reduction <maximumf>, %39, %cst_21 [1] : vector<8x8xf32> to vector<8xf32>
    %41 = vector.shape_cast %40 : vector<8xf32> to vector<8x1xf32>
    %42 = vector.broadcast %41 : vector<8x1xf32> to vector<8x8xf32>
    %43 = arith.subf %39, %42 : vector<8x8xf32>
    %44 = math.exp %43 : vector<8x8xf32>
    %cst_22 = arith.constant dense<0.000000e+00> : vector<8xf32>
    %45 = vector.multi_reduction <add>, %44, %cst_22 [1] : vector<8x8xf32> to vector<8xf32>
    %46 = vector.shape_cast %45 : vector<8xf32> to vector<8x1xf32>
    %47 = tpu.reciprocal %46 {approx = true} : vector<8x1xf32> -> vector<8x1xf32>
    %48 = vector.broadcast %47 : vector<8x1xf32> to vector<8x8xf32>
    %49 = arith.mulf %44, %48 : vector<8x8xf32>
    %cst_23 = arith.constant dense<0.000000e+00> : vector<8x16xf32>
    %50 = tpu.matmul %49, %34, %cst_23 {dimension_numbers = #tpu.dot_dimension_numbers<[1], [0], [0], [1], [0, 0, 1, 1], [], []>} : vector<8x8xf32>, vector<8x16xf32>, vector<8x16xf32> -> vector<8x16xf32>
    %c0_24 = arith.constant 0 : index
    %c0_25 = arith.constant 0 : index
    %51 = vector.load %arg21[%c0_24, %c0_25] : memref<16x32xf32, #tpu.memory_space<vmem>>, vector<8x16xf32>
    tpu.vector_store %arg21[%c0_24, %c0_25], %50 {strides = array<i32>} : memref<16x32xf32, #tpu.memory_space<vmem>>, vector<8x16xf32>,
    %52 = vector.extract_strided_slice %29 {offsets = [0, 16], sizes = [8, 16], strides = [1, 1]} : vector<16x96xf32> to vector<8x16xf32>
    %53 = vector.extract_strided_slice %29 {offsets = [0, 48], sizes = [8, 16], strides = [1, 1]} : vector<16x96xf32> to vector<8x16xf32>
    %54 = vector.extract_strided_slice %29 {offsets = [0, 80], sizes = [8, 16], strides = [1, 1]} : vector<16x96xf32> to vector<8x16xf32>
    %cst_26 = arith.constant dense<0.000000e+00> : vector<8x8xf32>
    %55 = tpu.matmul %52, %53, %cst_26 {dimension_numbers = #tpu.dot_dimension_numbers<[1], [1], [0], [0], [0, 0, 1, 0], [], []>} : vector<8x16xf32>, vector<8x16xf32>, vector<8x8xf32> -> vector<8x8xf32>
    %cst_27 = arith.constant 2.500000e-01 : f32
    %56 = vector.broadcast %cst_27 : f32 to vector<8x8xf32>
    %57 = arith.mulf %55, %56 : vector<8x8xf32>
    %58 = vector.broadcast %31 : vector<1x8xf32> to vector<8x8xf32>
    %59 = arith.addf %57, %58 : vector<8x8xf32>
    %cst_28 = arith.constant dense<0xFF800000> : vector<8xf32>
    %60 = vector.multi_reduction <maximumf>, %59, %cst_28 [1] : vector<8x8xf32> to vector<8xf32>
    %61 = vector.shape_cast %60 : vector<8xf32> to vector<8x1xf32>
    %62 = vector.broadcast %61 : vector<8x1xf32> to vector<8x8xf32>
    %63 = arith.subf %59, %62 : vector<8x8xf32>
    %64 = math.exp %63 : vector<8x8xf32>
    %cst_29 = arith.constant dense<0.000000e+00> : vector<8xf32>
    %65 = vector.multi_reduction <add>, %64, %cst_29 [1] : vector<8x8xf32> to vector<8xf32>
    %66 = vector.shape_cast %65 : vector<8xf32> to vector<8x1xf32>
    %67 = tpu.reciprocal %66 {approx = true} : vector<8x1xf32> -> vector<8x1xf32>
    %68 = vector.broadcast %67 : vector<8x1xf32> to vector<8x8xf32>
    %69 = arith.mulf %64, %68 : vector<8x8xf32>
    %cst_30 = arith.constant dense<0.000000e+00> : vector<8x16xf32>
    %70 = tpu.matmul %69, %54, %cst_30 {dimension_numbers = #tpu.dot_dimension_numbers<[1], [0], [0], [1], [0, 0, 1, 1], [], []>} : vector<8x8xf32>, vector<8x16xf32>, vector<8x16xf32> -> vector<8x16xf32>
    %c0_31 = arith.constant 0 : index
    %c16 = arith.constant 16 : index
    %71 = vector.load %arg21[%c0_31, %c16] : memref<16x32xf32, #tpu.memory_space<vmem>>, vector<8x16xf32>
    tpu.vector_store %arg21[%c0_31, %c16], %70 {strides = array<i32>} : memref<16x32xf32, #tpu.memory_space<vmem>>, vector<8x16xf32>,
    %c1 = arith.constant 1 : index
    %c0_32 = arith.constant 0 : index
    %c0_33 = arith.constant 0 : index
    %72 = vector.load %arg1[%c1, %c0_32, %c0_33] : memref<2x1x8xf32, #tpu.memory_space<vmem>>, vector<1x1x8xf32>
    %73 = vector.shape_cast %72 : vector<1x1x8xf32> to vector<1x8xf32>
    %74 = vector.extract_strided_slice %29 {offsets = [8, 0], sizes = [8, 16], strides = [1, 1]} : vector<16x96xf32> to vector<8x16xf32>
    %75 = vector.extract_strided_slice %29 {offsets = [8, 32], sizes = [8, 16], strides = [1, 1]} : vector<16x96xf32> to vector<8x16xf32>
    %76 = vector.extract_strided_slice %29 {offsets = [8, 64], sizes = [8, 16], strides = [1, 1]} : vector<16x96xf32> to vector<8x16xf32>
    %cst_34 = arith.constant dense<0.000000e+00> : vector<8x8xf32>
    %77 = tpu.matmul %74, %75, %cst_34 {dimension_numbers = #tpu.dot_dimension_numbers<[1], [1], [0], [0], [0, 0, 1, 0], [], []>} : vector<8x16xf32>, vector<8x16xf32>, vector<8x8xf32> -> vector<8x8xf32>
    %cst_35 = arith.constant 2.500000e-01 : f32
    %78 = vector.broadcast %cst_35 : f32 to vector<8x8xf32>
    %79 = arith.mulf %77, %78 : vector<8x8xf32>
    %80 = vector.broadcast %73 : vector<1x8xf32> to vector<8x8xf32>
    %81 = arith.addf %79, %80 : vector<8x8xf32>
    %cst_36 = arith.constant dense<0xFF800000> : vector<8xf32>
    %82 = vector.multi_reduction <maximumf>, %81, %cst_36 [1] : vector<8x8xf32> to vector<8xf32>
    %83 = vector.shape_cast %82 : vector<8xf32> to vector<8x1xf32>
    %84 = vector.broadcast %83 : vector<8x1xf32> to vector<8x8xf32>
    %85 = arith.subf %81, %84 : vector<8x8xf32>
    %86 = math.exp %85 : vector<8x8xf32>
    %cst_37 = arith.constant dense<0.000000e+00> : vector<8xf32>
    %87 = vector.multi_reduction <add>, %86, %cst_37 [1] : vector<8x8xf32> to vector<8xf32>
    %88 = vector.shape_cast %87 : vector<8xf32> to vector<8x1xf32>
    %89 = tpu.reciprocal %88 {approx = true} : vector<8x1xf32> -> vector<8x1xf32>
    %90 = vector.broadcast %89 : vector<8x1xf32> to vector<8x8xf32>
    %91 = arith.mulf %86, %90 : vector<8x8xf32>
    %cst_38 = arith.constant dense<0.000000e+00> : vector<8x16xf32>
    %92 = tpu.matmul %91, %76, %cst_38 {dimension_numbers = #tpu.dot_dimension_numbers<[1], [0], [0], [1], [0, 0, 1, 1], [], []>} : vector<8x8xf32>, vector<8x16xf32>, vector<8x16xf32> -> vector<8x16xf32>
    %c8 = arith.constant 8 : index
    %c0_39 = arith.constant 0 : index
    %93 = vector.load %arg21[%c8, %c0_39] : memref<16x32xf32, #tpu.memory_space<vmem>>, vector<8x16xf32>
    tpu.vector_store %arg21[%c8, %c0_39], %92 {strides = array<i32>} : memref<16x32xf32, #tpu.memory_space<vmem>>, vector<8x16xf32>,
    %94 = vector.extract_strided_slice %29 {offsets = [8, 16], sizes = [8, 16], strides = [1, 1]} : vector<16x96xf32> to vector<8x16xf32>
    %95 = vector.extract_strided_slice %29 {offsets = [8, 48], sizes = [8, 16], strides = [1, 1]} : vector<16x96xf32> to vector<8x16xf32>
    %96 = vector.extract_strided_slice %29 {offsets = [8, 80], sizes = [8, 16], strides = [1, 1]} : vector<16x96xf32> to vector<8x16xf32>
    %cst_40 = arith.constant dense<0.000000e+00> : vector<8x8xf32>
    %97 = tpu.matmul %94, %95, %cst_40 {dimension_numbers = #tpu.dot_dimension_numbers<[1], [1], [0], [0], [0, 0, 1, 0], [], []>} : vector<8x16xf32>, vector<8x16xf32>, vector<8x8xf32> -> vector<8x8xf32>
    %cst_41 = arith.constant 2.500000e-01 : f32
    %98 = vector.broadcast %cst_41 : f32 to vector<8x8xf32>
    %99 = arith.mulf %97, %98 : vector<8x8xf32>
    %100 = vector.broadcast %73 : vector<1x8xf32> to vector<8x8xf32>
    %101 = arith.addf %99, %100 : vector<8x8xf32>
    %cst_42 = arith.constant dense<0xFF800000> : vector<8xf32>
    %102 = vector.multi_reduction <maximumf>, %101, %cst_42 [1] : vector<8x8xf32> to vector<8xf32>
    %103 = vector.shape_cast %102 : vector<8xf32> to vector<8x1xf32>
    %104 = vector.broadcast %103 : vector<8x1xf32> to vector<8x8xf32>
    %105 = arith.subf %101, %104 : vector<8x8xf32>
    %106 = math.exp %105 : vector<8x8xf32>
    %cst_43 = arith.constant dense<0.000000e+00> : vector<8xf32>
    %107 = vector.multi_reduction <add>, %106, %cst_43 [1] : vector<8x8xf32> to vector<8xf32>
    %108 = vector.shape_cast %107 : vector<8xf32> to vector<8x1xf32>
    %109 = tpu.reciprocal %108 {approx = true} : vector<8x1xf32> -> vector<8x1xf32>
    %110 = vector.broadcast %109 : vector<8x1xf32> to vector<8x8xf32>
    %111 = arith.mulf %106, %110 : vector<8x8xf32>
    %cst_44 = arith.constant dense<0.000000e+00> : vector<8x16xf32>
    %112 = tpu.matmul %111, %96, %cst_44 {dimension_numbers = #tpu.dot_dimension_numbers<[1], [0], [0], [1], [0, 0, 1, 1], [], []>} : vector<8x8xf32>, vector<8x16xf32>, vector<8x16xf32> -> vector<8x16xf32>
    %c8_45 = arith.constant 8 : index
    %c16_46 = arith.constant 16 : index
    %113 = vector.load %arg21[%c8_45, %c16_46] : memref<16x32xf32, #tpu.memory_space<vmem>>, vector<8x16xf32>
    tpu.vector_store %arg21[%c8_45, %c16_46], %112 {strides = array<i32>} : memref<16x32xf32, #tpu.memory_space<vmem>>, vector<8x16xf32>,
    %c0_47 = arith.constant 0 : index
    %c0_48 = arith.constant 0 : index
    %114 = vector.load %arg21[%c0_47, %c0_48] : memref<16x32xf32, #tpu.memory_space<vmem>>, vector<16x32xf32>
    %c0_49 = arith.constant 0 : index
    %c0_50 = arith.constant 0 : index
    %c0_51 = arith.constant 0 : index
    %115 = vector.load %arg6[%c0_49, %c0_50, %c0_51] : memref<2x32x32xf32, #tpu.memory_space<vmem>>, vector<1x32x32xf32>
    %116 = vector.shape_cast %115 : vector<1x32x32xf32> to vector<32x32xf32>
    %cst_52 = arith.constant dense<0.000000e+00> : vector<16x32xf32>
    %117 = tpu.matmul %114, %116, %cst_52 {dimension_numbers = #tpu.dot_dimension_numbers<[1], [0], [0], [1], [0, 0, 1, 1], [], []>} : vector<16x32xf32>, vector<32x32xf32>, vector<16x32xf32> -> vector<16x32xf32>
    %c0_53 = arith.constant 0 : index
    %c0_54 = arith.constant 0 : index
    %c0_55 = arith.constant 0 : index
    %118 = vector.load %arg7[%c0_53, %c0_54, %c0_55] : memref<2x1x32xf32, #tpu.memory_space<vmem>>, vector<1x1x32xf32>
    %119 = vector.shape_cast %118 : vector<1x1x32xf32> to vector<1x32xf32>
    %120 = vector.broadcast %119 : vector<1x32xf32> to vector<16x32xf32>
    %121 = arith.addf %117, %120 : vector<16x32xf32>
    %122 = arith.addf %121, %22 : vector<16x32xf32>
    %c0_56 = arith.constant 0 : index
    %c0_57 = arith.constant 0 : index
    %c0_58 = arith.constant 0 : index
    %123 = vector.load %arg8[%c0_56, %c0_57, %c0_58] : memref<2x1x32xf32, #tpu.memory_space<vmem>>, vector<1x1x32xf32>
    %124 = vector.shape_cast %123 : vector<1x1x32xf32> to vector<1x32xf32>
    %c0_59 = arith.constant 0 : index
    %c0_60 = arith.constant 0 : index
    %c0_61 = arith.constant 0 : index
    %125 = vector.load %arg9[%c0_59, %c0_60, %c0_61] : memref<2x1x32xf32, #tpu.memory_space<vmem>>, vector<1x1x32xf32>
    %126 = vector.shape_cast %125 : vector<1x1x32xf32> to vector<1x32xf32>
    %cst_62 = arith.constant dense<0.000000e+00> : vector<16xf32>
    %127 = vector.multi_reduction <add>, %122, %cst_62 [1] : vector<16x32xf32> to vector<16xf32>
    %128 = vector.shape_cast %127 : vector<16xf32> to vector<16x1xf32>
    %cst_63 = arith.constant 3.200000e+01 : f32
    %129 = vector.broadcast %cst_63 : f32 to vector<16x1xf32>
    %130 = arith.divf %128, %129 : vector<16x1xf32>
    %131 = vector.broadcast %130 : vector<16x1xf32> to vector<16x32xf32>
    %132 = arith.subf %122, %131 : vector<16x32xf32>
    %133 = arith.mulf %132, %132 : vector<16x32xf32>
    %cst_64 = arith.constant dense<0.000000e+00> : vector<16xf32>
    %134 = vector.multi_reduction <add>, %133, %cst_64 [1] : vector<16x32xf32> to vector<16xf32>
    %135 = vector.shape_cast %134 : vector<16xf32> to vector<16x1xf32>
    %cst_65 = arith.constant 3.200000e+01 : f32
    %136 = vector.broadcast %cst_65 : f32 to vector<16x1xf32>
    %137 = arith.divf %135, %136 : vector<16x1xf32>
    %cst_66 = arith.constant 9.99999996E-13 : f32
    %138 = vector.broadcast %cst_66 : f32 to vector<16x1xf32>
    %139 = arith.addf %137, %138 : vector<16x1xf32>
    %140 = math.rsqrt %139 : vector<16x1xf32>
    %141 = vector.broadcast %140 : vector<16x1xf32> to vector<16x32xf32>
    %142 = arith.mulf %132, %141 : vector<16x32xf32>
    %143 = vector.broadcast %124 : vector<1x32xf32> to vector<16x32xf32>
    %144 = arith.mulf %142, %143 : vector<16x32xf32>
    %145 = vector.broadcast %126 : vector<1x32xf32> to vector<16x32xf32>
    %146 = arith.addf %144, %145 : vector<16x32xf32>
    %c0_67 = arith.constant 0 : index
    %c0_68 = arith.constant 0 : index
    %c0_69 = arith.constant 0 : index
    %147 = vector.load %arg10[%c0_67, %c0_68, %c0_69] : memref<2x32x64xf32, #tpu.memory_space<vmem>>, vector<1x32x64xf32>
    %148 = vector.shape_cast %147 : vector<1x32x64xf32> to vector<32x64xf32>
    %cst_70 = arith.constant dense<0.000000e+00> : vector<16x64xf32>
    %149 = tpu.matmul %146, %148, %cst_70 {dimension_numbers = #tpu.dot_dimension_numbers<[1], [0], [0], [1], [0, 0, 1, 1], [], []>} : vector<16x32xf32>, vector<32x64xf32>, vector<16x64xf32> -> vector<16x64xf32>
    %c0_71 = arith.constant 0 : index
    %c0_72 = arith.constant 0 : index
    %c0_73 = arith.constant 0 : index
    %150 = vector.load %arg11[%c0_71, %c0_72, %c0_73] : memref<2x1x64xf32, #tpu.memory_space<vmem>>, vector<1x1x64xf32>
    %151 = vector.shape_cast %150 : vector<1x1x64xf32> to vector<1x64xf32>
    %152 = vector.broadcast %151 : vector<1x64xf32> to vector<16x64xf32>
    %153 = arith.addf %149, %152 : vector<16x64xf32>
    %154 = arith.mulf %153, %153 : vector<16x64xf32>
    %155 = arith.mulf %153, %154 : vector<16x64xf32>
    %cst_74 = arith.constant 4.471500e-02 : f32
    %156 = vector.broadcast %cst_74 : f32 to vector<16x64xf32>
    %157 = arith.mulf %156, %155 : vector<16x64xf32>
    %158 = arith.addf %153, %157 : vector<16x64xf32>
    %cst_75 = arith.constant 0.797884583 : f32
    %159 = vector.broadcast %cst_75 : f32 to vector<16x64xf32>
    %160 = arith.mulf %159, %158 : vector<16x64xf32>
    %161 = math.tanh %160 : vector<16x64xf32>
    %cst_76 = arith.constant 1.000000e+00 : f32
    %162 = vector.broadcast %cst_76 : f32 to vector<16x64xf32>
    %163 = arith.addf %162, %161 : vector<16x64xf32>
    %cst_77 = arith.constant 5.000000e-01 : f32
    %164 = vector.broadcast %cst_77 : f32 to vector<16x64xf32>
    %165 = arith.mulf %164, %163 : vector<16x64xf32>
    %166 = arith.mulf %153, %165 : vector<16x64xf32>
    %c0_78 = arith.constant 0 : index
    %c0_79 = arith.constant 0 : index
    %c0_80 = arith.constant 0 : index
    %167 = vector.load %arg12[%c0_78, %c0_79, %c0_80] : memref<2x64x32xf32, #tpu.memory_space<vmem>>, vector<1x64x32xf32>
    %168 = vector.shape_cast %167 : vector<1x64x32xf32> to vector<64x32xf32>
    %cst_81 = arith.constant dense<0.000000e+00> : vector<16x32xf32>
    %169 = tpu.matmul %166, %168, %cst_81 {dimension_numbers = #tpu.dot_dimension_numbers<[1], [0], [0], [1], [0, 0, 1, 1], [], []>} : vector<16x64xf32>, vector<64x32xf32>, vector<16x32xf32> -> vector<16x32xf32>
    %c0_82 = arith.constant 0 : index
    %c0_83 = arith.constant 0 : index
    %c0_84 = arith.constant 0 : index
    %170 = vector.load %arg13[%c0_82, %c0_83, %c0_84] : memref<2x1x32xf32, #tpu.memory_space<vmem>>, vector<1x1x32xf32>
    %171 = vector.shape_cast %170 : vector<1x1x32xf32> to vector<1x32xf32>
    %172 = vector.broadcast %171 : vector<1x32xf32> to vector<16x32xf32>
    %173 = arith.addf %169, %172 : vector<16x32xf32>
    %174 = arith.addf %173, %146 : vector<16x32xf32>
    %c0_85 = arith.constant 0 : index
    %c0_86 = arith.constant 0 : index
    %c0_87 = arith.constant 0 : index
    %175 = vector.load %arg14[%c0_85, %c0_86, %c0_87] : memref<2x1x32xf32, #tpu.memory_space<vmem>>, vector<1x1x32xf32>
    %176 = vector.shape_cast %175 : vector<1x1x32xf32> to vector<1x32xf32>
    %c0_88 = arith.constant 0 : index
    %c0_89 = arith.constant 0 : index
    %c0_90 = arith.constant 0 : index
    %177 = vector.load %arg15[%c0_88, %c0_89, %c0_90] : memref<2x1x32xf32, #tpu.memory_space<vmem>>, vector<1x1x32xf32>
    %178 = vector.shape_cast %177 : vector<1x1x32xf32> to vector<1x32xf32>
    %cst_91 = arith.constant dense<0.000000e+00> : vector<16xf32>
    %179 = vector.multi_reduction <add>, %174, %cst_91 [1] : vector<16x32xf32> to vector<16xf32>
    %180 = vector.shape_cast %179 : vector<16xf32> to vector<16x1xf32>
    %cst_92 = arith.constant 3.200000e+01 : f32
    %181 = vector.broadcast %cst_92 : f32 to vector<16x1xf32>
    %182 = arith.divf %180, %181 : vector<16x1xf32>
    %183 = vector.broadcast %182 : vector<16x1xf32> to vector<16x32xf32>
    %184 = arith.subf %174, %183 : vector<16x32xf32>
    %185 = arith.mulf %184, %184 : vector<16x32xf32>
    %cst_93 = arith.constant dense<0.000000e+00> : vector<16xf32>
    %186 = vector.multi_reduction <add>, %185, %cst_93 [1] : vector<16x32xf32> to vector<16xf32>
    %187 = vector.shape_cast %186 : vector<16xf32> to vector<16x1xf32>
    %cst_94 = arith.constant 3.200000e+01 : f32
    %188 = vector.broadcast %cst_94 : f32 to vector<16x1xf32>
    %189 = arith.divf %187, %188 : vector<16x1xf32>
    %cst_95 = arith.constant 9.99999996E-13 : f32
    %190 = vector.broadcast %cst_95 : f32 to vector<16x1xf32>
    %191 = arith.addf %189, %190 : vector<16x1xf32>
    %192 = math.rsqrt %191 : vector<16x1xf32>
    %193 = vector.broadcast %192 : vector<16x1xf32> to vector<16x32xf32>
    %194 = arith.mulf %184, %193 : vector<16x32xf32>
    %195 = vector.broadcast %176 : vector<1x32xf32> to vector<16x32xf32>
    %196 = arith.mulf %194, %195 : vector<16x32xf32>
    %197 = vector.broadcast %178 : vector<1x32xf32> to vector<16x32xf32>
    %198 = arith.addf %196, %197 : vector<16x32xf32>
    %c1_96 = arith.constant 1 : index
    %c0_97 = arith.constant 0 : index
    %c0_98 = arith.constant 0 : index
    %199 = vector.load %arg4[%c1_96, %c0_97, %c0_98] : memref<2x32x96xf32, #tpu.memory_space<vmem>>, vector<1x32x96xf32>
    %200 = vector.shape_cast %199 : vector<1x32x96xf32> to vector<32x96xf32>
    %cst_99 = arith.constant dense<0.000000e+00> : vector<16x96xf32>
    %201 = tpu.matmul %198, %200, %cst_99 {dimension_numbers = #tpu.dot_dimension_numbers<[1], [0], [0], [1], [0, 0, 1, 1], [], []>} : vector<16x32xf32>, vector<32x96xf32>, vector<16x96xf32> -> vector<16x96xf32>
    %c1_100 = arith.constant 1 : index
    %c0_101 = arith.constant 0 : index
    %c0_102 = arith.constant 0 : index
    %202 = vector.load %arg5[%c1_100, %c0_101, %c0_102] : memref<2x1x96xf32, #tpu.memory_space<vmem>>, vector<1x1x96xf32>
    %203 = vector.shape_cast %202 : vector<1x1x96xf32> to vector<1x96xf32>
    %204 = vector.broadcast %203 : vector<1x96xf32> to vector<16x96xf32>
    %205 = arith.addf %201, %204 : vector<16x96xf32>
    %c0_103 = arith.constant 0 : index
    %c0_104 = arith.constant 0 : index
    %c0_105 = arith.constant 0 : index
    %206 = vector.load %arg1[%c0_103, %c0_104, %c0_105] : memref<2x1x8xf32, #tpu.memory_space<vmem>>, vector<1x1x8xf32>
    %207 = vector.shape_cast %206 : vector<1x1x8xf32> to vector<1x8xf32>
    %208 = vector.extract_strided_slice %205 {offsets = [0, 0], sizes = [8, 16], strides = [1, 1]} : vector<16x96xf32> to vector<8x16xf32>
    %209 = vector.extract_strided_slice %205 {offsets = [0, 32], sizes = [8, 16], strides = [1, 1]} : vector<16x96xf32> to vector<8x16xf32>
    %210 = vector.extract_strided_slice %205 {offsets = [0, 64], sizes = [8, 16], strides = [1, 1]} : vector<16x96xf32> to vector<8x16xf32>
    %cst_106 = arith.constant dense<0.000000e+00> : vector<8x8xf32>
    %211 = tpu.matmul %208, %209, %cst_106 {dimension_numbers = #tpu.dot_dimension_numbers<[1], [1], [0], [0], [0, 0, 1, 0], [], []>} : vector<8x16xf32>, vector<8x16xf32>, vector<8x8xf32> -> vector<8x8xf32>
    %cst_107 = arith.constant 2.500000e-01 : f32
    %212 = vector.broadcast %cst_107 : f32 to vector<8x8xf32>
    %213 = arith.mulf %211, %212 : vector<8x8xf32>
    %214 = vector.broadcast %207 : vector<1x8xf32> to vector<8x8xf32>
    %215 = arith.addf %213, %214 : vector<8x8xf32>
    %cst_108 = arith.constant dense<0xFF800000> : vector<8xf32>
    %216 = vector.multi_reduction <maximumf>, %215, %cst_108 [1] : vector<8x8xf32> to vector<8xf32>
    %217 = vector.shape_cast %216 : vector<8xf32> to vector<8x1xf32>
    %218 = vector.broadcast %217 : vector<8x1xf32> to vector<8x8xf32>
    %219 = arith.subf %215, %218 : vector<8x8xf32>
    %220 = math.exp %219 : vector<8x8xf32>
    %cst_109 = arith.constant dense<0.000000e+00> : vector<8xf32>
    %221 = vector.multi_reduction <add>, %220, %cst_109 [1] : vector<8x8xf32> to vector<8xf32>
    %222 = vector.shape_cast %221 : vector<8xf32> to vector<8x1xf32>
    %223 = tpu.reciprocal %222 {approx = true} : vector<8x1xf32> -> vector<8x1xf32>
    %224 = vector.broadcast %223 : vector<8x1xf32> to vector<8x8xf32>
    %225 = arith.mulf %220, %224 : vector<8x8xf32>
    %cst_110 = arith.constant dense<0.000000e+00> : vector<8x16xf32>
    %226 = tpu.matmul %225, %210, %cst_110 {dimension_numbers = #tpu.dot_dimension_numbers<[1], [0], [0], [1], [0, 0, 1, 1], [], []>} : vector<8x8xf32>, vector<8x16xf32>, vector<8x16xf32> -> vector<8x16xf32>
    %c0_111 = arith.constant 0 : index
    %c0_112 = arith.constant 0 : index
    %227 = vector.load %arg21[%c0_111, %c0_112] : memref<16x32xf32, #tpu.memory_space<vmem>>, vector<8x16xf32>
    tpu.vector_store %arg21[%c0_111, %c0_112], %226 {strides = array<i32>} : memref<16x32xf32, #tpu.memory_space<vmem>>, vector<8x16xf32>,
    %228 = vector.extract_strided_slice %205 {offsets = [0, 16], sizes = [8, 16], strides = [1, 1]} : vector<16x96xf32> to vector<8x16xf32>
    %229 = vector.extract_strided_slice %205 {offsets = [0, 48], sizes = [8, 16], strides = [1, 1]} : vector<16x96xf32> to vector<8x16xf32>
    %230 = vector.extract_strided_slice %205 {offsets = [0, 80], sizes = [8, 16], strides = [1, 1]} : vector<16x96xf32> to vector<8x16xf32>
    %cst_113 = arith.constant dense<0.000000e+00> : vector<8x8xf32>
    %231 = tpu.matmul %228, %229, %cst_113 {dimension_numbers = #tpu.dot_dimension_numbers<[1], [1], [0], [0], [0, 0, 1, 0], [], []>} : vector<8x16xf32>, vector<8x16xf32>, vector<8x8xf32> -> vector<8x8xf32>
    %cst_114 = arith.constant 2.500000e-01 : f32
    %232 = vector.broadcast %cst_114 : f32 to vector<8x8xf32>
    %233 = arith.mulf %231, %232 : vector<8x8xf32>
    %234 = vector.broadcast %207 : vector<1x8xf32> to vector<8x8xf32>
    %235 = arith.addf %233, %234 : vector<8x8xf32>
    %cst_115 = arith.constant dense<0xFF800000> : vector<8xf32>
    %236 = vector.multi_reduction <maximumf>, %235, %cst_115 [1] : vector<8x8xf32> to vector<8xf32>
    %237 = vector.shape_cast %236 : vector<8xf32> to vector<8x1xf32>
    %238 = vector.broadcast %237 : vector<8x1xf32> to vector<8x8xf32>
    %239 = arith.subf %235, %238 : vector<8x8xf32>
    %240 = math.exp %239 : vector<8x8xf32>
    %cst_116 = arith.constant dense<0.000000e+00> : vector<8xf32>
    %241 = vector.multi_reduction <add>, %240, %cst_116 [1] : vector<8x8xf32> to vector<8xf32>
    %242 = vector.shape_cast %241 : vector<8xf32> to vector<8x1xf32>
    %243 = tpu.reciprocal %242 {approx = true} : vector<8x1xf32> -> vector<8x1xf32>
    %244 = vector.broadcast %243 : vector<8x1xf32> to vector<8x8xf32>
    %245 = arith.mulf %240, %244 : vector<8x8xf32>
    %cst_117 = arith.constant dense<0.000000e+00> : vector<8x16xf32>
    %246 = tpu.matmul %245, %230, %cst_117 {dimension_numbers = #tpu.dot_dimension_numbers<[1], [0], [0], [1], [0, 0, 1, 1], [], []>} : vector<8x8xf32>, vector<8x16xf32>, vector<8x16xf32> -> vector<8x16xf32>
    %c0_118 = arith.constant 0 : index
    %c16_119 = arith.constant 16 : index
    %247 = vector.load %arg21[%c0_118, %c16_119] : memref<16x32xf32, #tpu.memory_space<vmem>>, vector<8x16xf32>
    tpu.vector_store %arg21[%c0_118, %c16_119], %246 {strides = array<i32>} : memref<16x32xf32, #tpu.memory_space<vmem>>, vector<8x16xf32>,
    %c1_120 = arith.constant 1 : index
    %c0_121 = arith.constant 0 : index
    %c0_122 = arith.constant 0 : index
    %248 = vector.load %arg1[%c1_120, %c0_121, %c0_122] : memref<2x1x8xf32, #tpu.memory_space<vmem>>, vector<1x1x8xf32>
    %249 = vector.shape_cast %248 : vector<1x1x8xf32> to vector<1x8xf32>
    %250 = vector.extract_strided_slice %205 {offsets = [8, 0], sizes = [8, 16], strides = [1, 1]} : vector<16x96xf32> to vector<8x16xf32>
    %251 = vector.extract_strided_slice %205 {offsets = [8, 32], sizes = [8, 16], strides = [1, 1]} : vector<16x96xf32> to vector<8x16xf32>
    %252 = vector.extract_strided_slice %205 {offsets = [8, 64], sizes = [8, 16], strides = [1, 1]} : vector<16x96xf32> to vector<8x16xf32>
    %cst_123 = arith.constant dense<0.000000e+00> : vector<8x8xf32>
    %253 = tpu.matmul %250, %251, %cst_123 {dimension_numbers = #tpu.dot_dimension_numbers<[1], [1], [0], [0], [0, 0, 1, 0], [], []>} : vector<8x16xf32>, vector<8x16xf32>, vector<8x8xf32> -> vector<8x8xf32>
    %cst_124 = arith.constant 2.500000e-01 : f32
    %254 = vector.broadcast %cst_124 : f32 to vector<8x8xf32>
    %255 = arith.mulf %253, %254 : vector<8x8xf32>
    %256 = vector.broadcast %249 : vector<1x8xf32> to vector<8x8xf32>
    %257 = arith.addf %255, %256 : vector<8x8xf32>
    %cst_125 = arith.constant dense<0xFF800000> : vector<8xf32>
    %258 = vector.multi_reduction <maximumf>, %257, %cst_125 [1] : vector<8x8xf32> to vector<8xf32>
    %259 = vector.shape_cast %258 : vector<8xf32> to vector<8x1xf32>
    %260 = vector.broadcast %259 : vector<8x1xf32> to vector<8x8xf32>
    %261 = arith.subf %257, %260 : vector<8x8xf32>
    %262 = math.exp %261 : vector<8x8xf32>
    %cst_126 = arith.constant dense<0.000000e+00> : vector<8xf32>
    %263 = vector.multi_reduction <add>, %262, %cst_126 [1] : vector<8x8xf32> to vector<8xf32>
    %264 = vector.shape_cast %263 : vector<8xf32> to vector<8x1xf32>
    %265 = tpu.reciprocal %264 {approx = true} : vector<8x1xf32> -> vector<8x1xf32>
    %266 = vector.broadcast %265 : vector<8x1xf32> to vector<8x8xf32>
    %267 = arith.mulf %262, %266 : vector<8x8xf32>
    %cst_127 = arith.constant dense<0.000000e+00> : vector<8x16xf32>
    %268 = tpu.matmul %267, %252, %cst_127 {dimension_numbers = #tpu.dot_dimension_numbers<[1], [0], [0], [1], [0, 0, 1, 1], [], []>} : vector<8x8xf32>, vector<8x16xf32>, vector<8x16xf32> -> vector<8x16xf32>
    %c8_128 = arith.constant 8 : index
    %c0_129 = arith.constant 0 : index
    %269 = vector.load %arg21[%c8_128, %c0_129] : memref<16x32xf32, #tpu.memory_space<vmem>>, vector<8x16xf32>
    tpu.vector_store %arg21[%c8_128, %c0_129], %268 {strides = array<i32>} : memref<16x32xf32, #tpu.memory_space<vmem>>, vector<8x16xf32>,
    %270 = vector.extract_strided_slice %205 {offsets = [8, 16], sizes = [8, 16], strides = [1, 1]} : vector<16x96xf32> to vector<8x16xf32>
    %271 = vector.extract_strided_slice %205 {offsets = [8, 48], sizes = [8, 16], strides = [1, 1]} : vector<16x96xf32> to vector<8x16xf32>
    %272 = vector.extract_strided_slice %205 {offsets = [8, 80], sizes = [8, 16], strides = [1, 1]} : vector<16x96xf32> to vector<8x16xf32>
    %cst_130 = arith.constant dense<0.000000e+00> : vector<8x8xf32>
    %273 = tpu.matmul %270, %271, %cst_130 {dimension_numbers = #tpu.dot_dimension_numbers<[1], [1], [0], [0], [0, 0, 1, 0], [], []>} : vector<8x16xf32>, vector<8x16xf32>, vector<8x8xf32> -> vector<8x8xf32>
    %cst_131 = arith.constant 2.500000e-01 : f32
    %274 = vector.broadcast %cst_131 : f32 to vector<8x8xf32>
    %275 = arith.mulf %273, %274 : vector<8x8xf32>
    %276 = vector.broadcast %249 : vector<1x8xf32> to vector<8x8xf32>
    %277 = arith.addf %275, %276 : vector<8x8xf32>
    %cst_132 = arith.constant dense<0xFF800000> : vector<8xf32>
    %278 = vector.multi_reduction <maximumf>, %277, %cst_132 [1] : vector<8x8xf32> to vector<8xf32>
    %279 = vector.shape_cast %278 : vector<8xf32> to vector<8x1xf32>
    %280 = vector.broadcast %279 : vector<8x1xf32> to vector<8x8xf32>
    %281 = arith.subf %277, %280 : vector<8x8xf32>
    %282 = math.exp %281 : vector<8x8xf32>
    %cst_133 = arith.constant dense<0.000000e+00> : vector<8xf32>
    %283 = vector.multi_reduction <add>, %282, %cst_133 [1] : vector<8x8xf32> to vector<8xf32>
    %284 = vector.shape_cast %283 : vector<8xf32> to vector<8x1xf32>
    %285 = tpu.reciprocal %284 {approx = true} : vector<8x1xf32> -> vector<8x1xf32>
    %286 = vector.broadcast %285 : vector<8x1xf32> to vector<8x8xf32>
    %287 = arith.mulf %282, %286 : vector<8x8xf32>
    %cst_134 = arith.constant dense<0.000000e+00> : vector<8x16xf32>
    %288 = tpu.matmul %287, %272, %cst_134 {dimension_numbers = #tpu.dot_dimension_numbers<[1], [0], [0], [1], [0, 0, 1, 1], [], []>} : vector<8x8xf32>, vector<8x16xf32>, vector<8x16xf32> -> vector<8x16xf32>
    %c8_135 = arith.constant 8 : index
    %c16_136 = arith.constant 16 : index
    %289 = vector.load %arg21[%c8_135, %c16_136] : memref<16x32xf32, #tpu.memory_space<vmem>>, vector<8x16xf32>
    tpu.vector_store %arg21[%c8_135, %c16_136], %288 {strides = array<i32>} : memref<16x32xf32, #tpu.memory_space<vmem>>, vector<8x16xf32>,
    %c0_137 = arith.constant 0 : index
    %c0_138 = arith.constant 0 : index
    %290 = vector.load %arg21[%c0_137, %c0_138] : memref<16x32xf32, #tpu.memory_space<vmem>>, vector<16x32xf32>
    %c1_139 = arith.constant 1 : index
    %c0_140 = arith.constant 0 : index
    %c0_141 = arith.constant 0 : index
    %291 = vector.load %arg6[%c1_139, %c0_140, %c0_141] : memref<2x32x32xf32, #tpu.memory_space<vmem>>, vector<1x32x32xf32>
    %292 = vector.shape_cast %291 : vector<1x32x32xf32> to vector<32x32xf32>
    %cst_142 = arith.constant dense<0.000000e+00> : vector<16x32xf32>
    %293 = tpu.matmul %290, %292, %cst_142 {dimension_numbers = #tpu.dot_dimension_numbers<[1], [0], [0], [1], [0, 0, 1, 1], [], []>} : vector<16x32xf32>, vector<32x32xf32>, vector<16x32xf32> -> vector<16x32xf32>
    %c1_143 = arith.constant 1 : index
    %c0_144 = arith.constant 0 : index
    %c0_145 = arith.constant 0 : index
    %294 = vector.load %arg7[%c1_143, %c0_144, %c0_145] : memref<2x1x32xf32, #tpu.memory_space<vmem>>, vector<1x1x32xf32>
    %295 = vector.shape_cast %294 : vector<1x1x32xf32> to vector<1x32xf32>
    %296 = vector.broadcast %295 : vector<1x32xf32> to vector<16x32xf32>
    %297 = arith.addf %293, %296 : vector<16x32xf32>
    %298 = arith.addf %297, %198 : vector<16x32xf32>
    %c1_146 = arith.constant 1 : index
    %c0_147 = arith.constant 0 : index
    %c0_148 = arith.constant 0 : index
    %299 = vector.load %arg8[%c1_146, %c0_147, %c0_148] : memref<2x1x32xf32, #tpu.memory_space<vmem>>, vector<1x1x32xf32>
    %300 = vector.shape_cast %299 : vector<1x1x32xf32> to vector<1x32xf32>
    %c1_149 = arith.constant 1 : index
    %c0_150 = arith.constant 0 : index
    %c0_151 = arith.constant 0 : index
    %301 = vector.load %arg9[%c1_149, %c0_150, %c0_151] : memref<2x1x32xf32, #tpu.memory_space<vmem>>, vector<1x1x32xf32>
    %302 = vector.shape_cast %301 : vector<1x1x32xf32> to vector<1x32xf32>
    %cst_152 = arith.constant dense<0.000000e+00> : vector<16xf32>
    %303 = vector.multi_reduction <add>, %298, %cst_152 [1] : vector<16x32xf32> to vector<16xf32>
    %304 = vector.shape_cast %303 : vector<16xf32> to vector<16x1xf32>
    %cst_153 = arith.constant 3.200000e+01 : f32
    %305 = vector.broadcast %cst_153 : f32 to vector<16x1xf32>
    %306 = arith.divf %304, %305 : vector<16x1xf32>
    %307 = vector.broadcast %306 : vector<16x1xf32> to vector<16x32xf32>
    %308 = arith.subf %298, %307 : vector<16x32xf32>
    %309 = arith.mulf %308, %308 : vector<16x32xf32>
    %cst_154 = arith.constant dense<0.000000e+00> : vector<16xf32>
    %310 = vector.multi_reduction <add>, %309, %cst_154 [1] : vector<16x32xf32> to vector<16xf32>
    %311 = vector.shape_cast %310 : vector<16xf32> to vector<16x1xf32>
    %cst_155 = arith.constant 3.200000e+01 : f32
    %312 = vector.broadcast %cst_155 : f32 to vector<16x1xf32>
    %313 = arith.divf %311, %312 : vector<16x1xf32>
    %cst_156 = arith.constant 9.99999996E-13 : f32
    %314 = vector.broadcast %cst_156 : f32 to vector<16x1xf32>
    %315 = arith.addf %313, %314 : vector<16x1xf32>
    %316 = math.rsqrt %315 : vector<16x1xf32>
    %317 = vector.broadcast %316 : vector<16x1xf32> to vector<16x32xf32>
    %318 = arith.mulf %308, %317 : vector<16x32xf32>
    %319 = vector.broadcast %300 : vector<1x32xf32> to vector<16x32xf32>
    %320 = arith.mulf %318, %319 : vector<16x32xf32>
    %321 = vector.broadcast %302 : vector<1x32xf32> to vector<16x32xf32>
    %322 = arith.addf %320, %321 : vector<16x32xf32>
    %c1_157 = arith.constant 1 : index
    %c0_158 = arith.constant 0 : index
    %c0_159 = arith.constant 0 : index
    %323 = vector.load %arg10[%c1_157, %c0_158, %c0_159] : memref<2x32x64xf32, #tpu.memory_space<vmem>>, vector<1x32x64xf32>
    %324 = vector.shape_cast %323 : vector<1x32x64xf32> to vector<32x64xf32>
    %cst_160 = arith.constant dense<0.000000e+00> : vector<16x64xf32>
    %325 = tpu.matmul %322, %324, %cst_160 {dimension_numbers = #tpu.dot_dimension_numbers<[1], [0], [0], [1], [0, 0, 1, 1], [], []>} : vector<16x32xf32>, vector<32x64xf32>, vector<16x64xf32> -> vector<16x64xf32>
    %c1_161 = arith.constant 1 : index
    %c0_162 = arith.constant 0 : index
    %c0_163 = arith.constant 0 : index
    %326 = vector.load %arg11[%c1_161, %c0_162, %c0_163] : memref<2x1x64xf32, #tpu.memory_space<vmem>>, vector<1x1x64xf32>
    %327 = vector.shape_cast %326 : vector<1x1x64xf32> to vector<1x64xf32>
    %328 = vector.broadcast %327 : vector<1x64xf32> to vector<16x64xf32>
    %329 = arith.addf %325, %328 : vector<16x64xf32>
    %330 = arith.mulf %329, %329 : vector<16x64xf32>
    %331 = arith.mulf %329, %330 : vector<16x64xf32>
    %cst_164 = arith.constant 4.471500e-02 : f32
    %332 = vector.broadcast %cst_164 : f32 to vector<16x64xf32>
    %333 = arith.mulf %332, %331 : vector<16x64xf32>
    %334 = arith.addf %329, %333 : vector<16x64xf32>
    %cst_165 = arith.constant 0.797884583 : f32
    %335 = vector.broadcast %cst_165 : f32 to vector<16x64xf32>
    %336 = arith.mulf %335, %334 : vector<16x64xf32>
    %337 = math.tanh %336 : vector<16x64xf32>
    %cst_166 = arith.constant 1.000000e+00 : f32
    %338 = vector.broadcast %cst_166 : f32 to vector<16x64xf32>
    %339 = arith.addf %338, %337 : vector<16x64xf32>
    %cst_167 = arith.constant 5.000000e-01 : f32
    %340 = vector.broadcast %cst_167 : f32 to vector<16x64xf32>
    %341 = arith.mulf %340, %339 : vector<16x64xf32>
    %342 = arith.mulf %329, %341 : vector<16x64xf32>
    %c1_168 = arith.constant 1 : index
    %c0_169 = arith.constant 0 : index
    %c0_170 = arith.constant 0 : index
    %343 = vector.load %arg12[%c1_168, %c0_169, %c0_170] : memref<2x64x32xf32, #tpu.memory_space<vmem>>, vector<1x64x32xf32>
    %344 = vector.shape_cast %343 : vector<1x64x32xf32> to vector<64x32xf32>
    %cst_171 = arith.constant dense<0.000000e+00> : vector<16x32xf32>
    %345 = tpu.matmul %342, %344, %cst_171 {dimension_numbers = #tpu.dot_dimension_numbers<[1], [0], [0], [1], [0, 0, 1, 1], [], []>} : vector<16x64xf32>, vector<64x32xf32>, vector<16x32xf32> -> vector<16x32xf32>
    %c1_172 = arith.constant 1 : index
    %c0_173 = arith.constant 0 : index
    %c0_174 = arith.constant 0 : index
    %346 = vector.load %arg13[%c1_172, %c0_173, %c0_174] : memref<2x1x32xf32, #tpu.memory_space<vmem>>, vector<1x1x32xf32>
    %347 = vector.shape_cast %346 : vector<1x1x32xf32> to vector<1x32xf32>
    %348 = vector.broadcast %347 : vector<1x32xf32> to vector<16x32xf32>
    %349 = arith.addf %345, %348 : vector<16x32xf32>
    %350 = arith.addf %349, %322 : vector<16x32xf32>
    %c1_175 = arith.constant 1 : index
    %c0_176 = arith.constant 0 : index
    %c0_177 = arith.constant 0 : index
    %351 = vector.load %arg14[%c1_175, %c0_176, %c0_177] : memref<2x1x32xf32, #tpu.memory_space<vmem>>, vector<1x1x32xf32>
    %352 = vector.shape_cast %351 : vector<1x1x32xf32> to vector<1x32xf32>
    %c1_178 = arith.constant 1 : index
    %c0_179 = arith.constant 0 : index
    %c0_180 = arith.constant 0 : index
    %353 = vector.load %arg15[%c1_178, %c0_179, %c0_180] : memref<2x1x32xf32, #tpu.memory_space<vmem>>, vector<1x1x32xf32>
    %354 = vector.shape_cast %353 : vector<1x1x32xf32> to vector<1x32xf32>
    %cst_181 = arith.constant dense<0.000000e+00> : vector<16xf32>
    %355 = vector.multi_reduction <add>, %350, %cst_181 [1] : vector<16x32xf32> to vector<16xf32>
    %356 = vector.shape_cast %355 : vector<16xf32> to vector<16x1xf32>
    %cst_182 = arith.constant 3.200000e+01 : f32
    %357 = vector.broadcast %cst_182 : f32 to vector<16x1xf32>
    %358 = arith.divf %356, %357 : vector<16x1xf32>
    %359 = vector.broadcast %358 : vector<16x1xf32> to vector<16x32xf32>
    %360 = arith.subf %350, %359 : vector<16x32xf32>
    %361 = arith.mulf %360, %360 : vector<16x32xf32>
    %cst_183 = arith.constant dense<0.000000e+00> : vector<16xf32>
    %362 = vector.multi_reduction <add>, %361, %cst_183 [1] : vector<16x32xf32> to vector<16xf32>
    %363 = vector.shape_cast %362 : vector<16xf32> to vector<16x1xf32>
    %cst_184 = arith.constant 3.200000e+01 : f32
    %364 = vector.broadcast %cst_184 : f32 to vector<16x1xf32>
    %365 = arith.divf %363, %364 : vector<16x1xf32>
    %cst_185 = arith.constant 9.99999996E-13 : f32
    %366 = vector.broadcast %cst_185 : f32 to vector<16x1xf32>
    %367 = arith.addf %365, %366 : vector<16x1xf32>
    %368 = math.rsqrt %367 : vector<16x1xf32>
    %369 = vector.broadcast %368 : vector<16x1xf32> to vector<16x32xf32>
    %370 = arith.mulf %360, %369 : vector<16x32xf32>
    %371 = vector.broadcast %352 : vector<1x32xf32> to vector<16x32xf32>
    %372 = arith.mulf %370, %371 : vector<16x32xf32>
    %373 = vector.broadcast %354 : vector<1x32xf32> to vector<16x32xf32>
    %374 = arith.addf %372, %373 : vector<16x32xf32>
    %c0_186 = arith.constant 0 : index
    %c0_187 = arith.constant 0 : index
    %375 = vector.load %arg16[%c0_186, %c0_187] : memref<32x32xf32, #tpu.memory_space<vmem>>, vector<32x32xf32>
    %cst_188 = arith.constant dense<0.000000e+00> : vector<16x32xf32>
    %376 = tpu.matmul %374, %375, %cst_188 {dimension_numbers = #tpu.dot_dimension_numbers<[1], [0], [0], [1], [0, 0, 1, 1], [], []>} : vector<16x32xf32>, vector<32x32xf32>, vector<16x32xf32> -> vector<16x32xf32>
    %c0_189 = arith.constant 0 : index
    %c0_190 = arith.constant 0 : index
    %377 = vector.load %arg17[%c0_189, %c0_190] : memref<1x32xf32, #tpu.memory_space<vmem>>, vector<1x32xf32>
    %378 = vector.broadcast %377 : vector<1x32xf32> to vector<16x32xf32>
    %379 = arith.addf %376, %378 : vector<16x32xf32>
    %380 = math.tanh %379 : vector<16x32xf32>
    %c0_191 = arith.constant 0 : index
    %c0_192 = arith.constant 0 : index
    %381 = vector.load %arg18[%c0_191, %c0_192] : memref<32x128xf32, #tpu.memory_space<vmem>>, vector<32x128xf32>
    %cst_193 = arith.constant dense<0.000000e+00> : vector<16x128xf32>
    %382 = tpu.matmul %380, %381, %cst_193 {dimension_numbers = #tpu.dot_dimension_numbers<[1], [0], [0], [1], [0, 0, 1, 1], [], []>} : vector<16x32xf32>, vector<32x128xf32>, vector<16x128xf32> -> vector<16x128xf32>
    %c0_194 = arith.constant 0 : index
    %c0_195 = arith.constant 0 : index
    %383 = vector.load %arg19[%c0_194, %c0_195] : memref<1x128xf32, #tpu.memory_space<vmem>>, vector<1x128xf32>
    %384 = vector.broadcast %383 : vector<1x128xf32> to vector<16x128xf32>
    %385 = arith.addf %382, %384 : vector<16x128xf32>
    %c0_196 = arith.constant 0 : index
    %c0_197 = arith.constant 0 : index
    %386 = vector.load %arg20[%c0_196, %c0_197] : memref<16x128xf32, #tpu.memory_space<vmem>>, vector<16x128xf32>
    tpu.vector_store %arg20[%c0_196, %c0_197], %385 {strides = array<i32>} : memref<16x128xf32, #tpu.memory_space<vmem>>, vector<16x128xf32>,
    return
  }
}

</mosaic_0001>

<llo_original>
// kernel: _lambda_.1
$region0: #{_lambda_.1}
  #allocation0 [shape = 'u32[]', space=smem, size = 0x4, offset = 0x4, fixed_abs, tag = 'smem constant byte address 0x4 - core index']
  #allocation1 [shape = 'u32[144,128]{1,0:T(1,128)}', space=vmem, size = 0x12000, scoped, tag = 'internal scratch']
  #allocation2 [shape = 'f32[16,32]{1,0:T(8,128)}', space=vmem, size = 0x2000, scoped, tag = 'scratch operand']
  %s0 = inlined_call_operand.vmem [shape: f32[16,32], index: 0, kind: input, shape index: {}]
  %s1 = inlined_call_operand.vmem [shape: f32[2,1,8], index: 1, kind: input, shape index: {}]
  %s2 = inlined_call_operand.vmem [shape: f32[1,32], index: 2, kind: input, shape index: {}]
  %s3 = inlined_call_operand.vmem [shape: f32[1,32], index: 3, kind: input, shape index: {}, may-alias: {3,17}]
  %s4 = inlined_call_operand.hbm [shape: f32[2,32,96], index: 4, kind: input, shape index: {}]
  %s5 = inlined_call_operand.vmem [shape: f32[2,1,96], index: 5, kind: input, shape index: {}]
  %s6 = inlined_call_operand.vmem [shape: f32[2,32,32], index: 6, kind: input, shape index: {}]
  %s7 = inlined_call_operand.vmem [shape: f32[2,1,32], index: 7, kind: input, shape index: {}, may-alias: {7,9,13,15}]
  %s8 = inlined_call_operand.vmem [shape: f32[2,1,32], index: 8, kind: input, shape index: {}, may-alias: {8,14}]
  %s9 = inlined_call_operand.vmem [shape: f32[2,1,32], index: 9, kind: input, shape index: {}, may-alias: {7,9,13,15}]
  %s10 = inlined_call_operand.vmem [shape: f32[2,32,64], index: 10, kind: input, shape index: {}]
  %s11 = inlined_call_operand.vmem [shape: f32[2,1,64], index: 11, kind: input, shape index: {}]
  %s12 = inlined_call_operand.vmem [shape: f32[2,64,32], index: 12, kind: input, shape index: {}]
  %s13 = inlined_call_operand.vmem [shape: f32[2,1,32], index: 13, kind: input, shape index: {}, may-alias: {7,9,13,15}]
  %s14 = inlined_call_operand.vmem [shape: f32[2,1,32], index: 14, kind: input, shape index: {}, may-alias: {8,14}]
  %s15 = inlined_call_operand.vmem [shape: f32[2,1,32], index: 15, kind: input, shape index: {}, may-alias: {7,9,13,15}]
  %s16 = inlined_call_operand.hbm [shape: f32[32,32], index: 16, kind: input, shape index: {}]
  %s17 = inlined_call_operand.vmem [shape: f32[1,32], index: 17, kind: input, shape index: {}, may-alias: {3,17}]
  %s18 = inlined_call_operand.hbm [shape: f32[32,128], index: 18, kind: input, shape index: {}]
  %s19 = inlined_call_operand.vmem [shape: f32[1,128], index: 19, kind: input, shape index: {}]
  %s20 = inlined_call_operand.vmem [shape: f32[16,128], index: 20, kind: output, shape index: {}]
  %s21 = sld [smem:[#allocation0]]
  $region102: #{_lambda_.1} parent=0
    _
  %s23 = ssub.s32 1, %s21
  %s24 = scalar_select 0, %s23, %s21
  $region1: #{_lambda_.1} parent=0
    #allocation3 [shape = 'u8[32768]{0}', space=vmem, size = 0x8000, scoped, tag = 'input window, operand 4, single buffered']
    #allocation4 [shape = 's32[1]{0}', space=sflag, size = 0x4, scoped, tag = 'scoped memory for _lambda_.1']
    #allocation5 [shape = 'u8[16384]{0}', space=vmem, size = 0x4000, scoped, tag = 'input window, operand 16, single buffered']
    #allocation6 [shape = 's32[1]{0}', space=sflag, size = 0x4, scoped, tag = 'scoped memory for _lambda_.1']
    #allocation7 [shape = 'u8[16384]{0}', space=vmem, size = 0x4000, scoped, tag = 'input window, operand 18, single buffered']
    %25 = vsyncpa [#allocation4], 0
    %26 = vsyncpa [#allocation6], 0
    // Predicated region
    $region2: #{_lambda_.1} parent=1 // pred_check
      _
    $region3: #{_lambda_.1} parent=1 // pred_check_branch
      %28 = sbr.rel (0) target = $region5
    $region4: #{_lambda_.1} parent=1 // pred_region
      _
    $region5: #{_lambda_.1} parent=1 // pred_fallthru
      _
    // Predicated region
    $region6: #{_lambda_.1} parent=1 // pred_check
      _
    $region7: #{_lambda_.1} parent=1 // pred_check_branch
      %30 = sbr.rel (0) target = $region9
    $region8: #{_lambda_.1} parent=1 // pred_region
      _
    $region9: #{_lambda_.1} parent=1 // pred_fallthru
      _
    // Predicated region
    $region10: #{_lambda_.1} parent=1 // pred_check
      _
    $region11: #{_lambda_.1} parent=1 // pred_check_branch
      %32 = sbr.rel (0) target = $region13
    $region12: #{_lambda_.1} parent=1 // pred_region
      _
    $region13: #{_lambda_.1} parent=1 // pred_fallthru
      _
    // Predicated region
    $region14: #{_lambda_.1} parent=1 // pred_check
      _
    $region15: #{_lambda_.1} parent=1 // pred_check_branch
      %34 = sbr.rel (0) target = $region17
    $region16: #{_lambda_.1} parent=1 // pred_region
      _
    $region17: #{_lambda_.1} parent=1 // pred_fallthru
      _
    // Predicated region
    $region18: #{_lambda_.1} parent=1 // pred_check
      _
    $region19: #{_lambda_.1} parent=1 // pred_check_branch
      %36 = sbr.rel (0) target = $region21
    $region20: #{_lambda_.1} parent=1 // pred_region
      %s38 = ssub.s32 1024, 1024
      %39 = vsyncadd [#allocation4], %s38
      %s40 = sshll.u32 [#allocation3], 4
      %s41 = int_to_ptr.vmem [resolvable:$true] %s40
      %46 = dma.hbm_to_vmem [thread:$0]  %s4, 1024, %s41, [#allocation4], 128, 128, 8
    $region21: #{_lambda_.1} parent=1 // pred_fallthru
      _
    // Predicated region
    $region22: #{_lambda_.1} parent=1 // pred_check
      _
    $region23: #{_lambda_.1} parent=1 // pred_check_branch
      %48 = sbr.rel (0) target = $region25
    $region24: #{_lambda_.1} parent=1 // pred_region
      _
    $region25: #{_lambda_.1} parent=1 // pred_fallthru
      _
    // Predicated region
    $region26: #{_lambda_.1} parent=1 // pred_check
      _
    $region27: #{_lambda_.1} parent=1 // pred_check_branch
      %50 = sbr.rel (0) target = $region29
    $region28: #{_lambda_.1} parent=1 // pred_region
      _
    $region29: #{_lambda_.1} parent=1 // pred_fallthru
      _
    // Predicated region
    $region30: #{_lambda_.1} parent=1 // pred_check
      _
    $region31: #{_lambda_.1} parent=1 // pred_check_branch
      %52 = sbr.rel (0) target = $region33
    $region32: #{_lambda_.1} parent=1 // pred_region
      _
    $region33: #{_lambda_.1} parent=1 // pred_fallthru
      _
    // Predicated region
    $region34: #{_lambda_.1} parent=1 // pred_check
      _
    $region35: #{_lambda_.1} parent=1 // pred_check_branch
      %54 = sbr.rel (0) target = $region37
    $region36: #{_lambda_.1} parent=1 // pred_region
      _
    $region37: #{_lambda_.1} parent=1 // pred_fallthru
      _
    // Predicated region
    $region38: #{_lambda_.1} parent=1 // pred_check
      _
    $region39: #{_lambda_.1} parent=1 // pred_check_branch
      %56 = sbr.rel (0) target = $region41
    $region40: #{_lambda_.1} parent=1 // pred_region
      _
    $region41: #{_lambda_.1} parent=1 // pred_fallthru
      _
    // Predicated region
    $region42: #{_lambda_.1} parent=1 // pred_check
      _
    $region43: #{_lambda_.1} parent=1 // pred_check_branch
      %58 = sbr.rel (0) target = $region45
    $region44: #{_lambda_.1} parent=1 // pred_region
      _
    $region45: #{_lambda_.1} parent=1 // pred_fallthru
      _
    // Predicated region
    $region46: #{_lambda_.1} parent=1 // pred_check
      _
    $region47: #{_lambda_.1} parent=1 // pred_check_branch
      %60 = sbr.rel (0) target = $region49
    $region48: #{_lambda_.1} parent=1 // pred_region
      _
    $region49: #{_lambda_.1} parent=1 // pred_fallthru
      _
    // Predicated region
    $region50: #{_lambda_.1} parent=1 // pred_check
      _
    $region51: #{_lambda_.1} parent=1 // pred_check_branch
      %62 = sbr.rel (0) target = $region53
    $region52: #{_lambda_.1} parent=1 // pred_region
      _
    $region53: #{_lambda_.1} parent=1 // pred_fallthru
      _
    // Predicated region
    $region54: #{_lambda_.1} parent=1 // pred_check
      _
    $region55: #{_lambda_.1} parent=1 // pred_check_branch
      %64 = sbr.rel (0) target = $region57
    $region56: #{_lambda_.1} parent=1 // pred_region
      _
    $region57: #{_lambda_.1} parent=1 // pred_fallthru
      _
    // Predicated region
    $region58: #{_lambda_.1} parent=1 // pred_check
      _
    $region59: #{_lambda_.1} parent=1 // pred_check_branch
      %66 = sbr.rel (0) target = $region61
    $region60: #{_lambda_.1} parent=1 // pred_region
      _
    $region61: #{_lambda_.1} parent=1 // pred_fallthru
      _
    // Predicated region
    $region62: #{_lambda_.1} parent=1 // pred_check
      _
    $region63: #{_lambda_.1} parent=1 // pred_check_branch
      %68 = sbr.rel (0) target = $region65
    $region64: #{_lambda_.1} parent=1 // pred_region
      _
    $region65: #{_lambda_.1} parent=1 // pred_fallthru
      _
    // Predicated region
    $region66: #{_lambda_.1} parent=1 // pred_check
      _
    $region67: #{_lambda_.1} parent=1 // pred_check_branch
      %70 = sbr.rel (0) target = $region69
    $region68: #{_lambda_.1} parent=1 // pred_region
      %s72 = ssub.s32 512, 512
      %73 = vsyncadd [#allocation6], %s72
      %s74 = sshll.u32 [#allocation5], 4
      %s75 = int_to_ptr.vmem [resolvable:$true] %s74
      %80 = dma.hbm_to_vmem [thread:$0]  %s16, 512, %s75, [#allocation6], 128, 128, 8
    $region69: #{_lambda_.1} parent=1 // pred_fallthru
      _
    // Predicated region
    $region70: #{_lambda_.1} parent=1 // pred_check
      _
    $region71: #{_lambda_.1} parent=1 // pred_check_branch
      %82 = sbr.rel (0) target = $region73
    $region72: #{_lambda_.1} parent=1 // pred_region
      _
    $region73: #{_lambda_.1} parent=1 // pred_fallthru
      _
    // Predicated region
    $region74: #{_lambda_.1} parent=1 // pred_check
      _
    $region75: #{_lambda_.1} parent=1 // pred_check_branch
      %84 = sbr.rel (0) target = $region77
    $region76: #{_lambda_.1} parent=1 // pred_region
      %s86 = ssub.s32 512, 512
      %87 = vsyncadd [#allocation6], %s86
      %s88 = sshll.u32 [#allocation7], 4
      %s89 = int_to_ptr.vmem [resolvable:$true] %s88
      %94 = dma.hbm_to_vmem [thread:$0]  %s18, 512, %s89, [#allocation6], 128, 128, 8
    $region77: #{_lambda_.1} parent=1 // pred_fallthru
      _
    // Predicated region
    $region78: #{_lambda_.1} parent=1 // pred_check
      _
    $region79: #{_lambda_.1} parent=1 // pred_check_branch
      %96 = sbr.rel (0) target = $region81
    $region80: #{_lambda_.1} parent=1 // pred_region
      _
    $region81: #{_lambda_.1} parent=1 // pred_fallthru
      _
    // Predicated region
    $region82: #{_lambda_.1} parent=1 // pred_check
      _
    $region83: #{_lambda_.1} parent=1 // pred_check_branch
      %98 = sbr.rel (0) target = $region85
    $region84: #{_lambda_.1} parent=1 // pred_region
      %99 = dma.done [#allocation4], 1024
    $region85: #{_lambda_.1} parent=1 // pred_fallthru
      _
    // Predicated region
    $region86: #{_lambda_.1} parent=1 // pred_check
      _
    $region87: #{_lambda_.1} parent=1 // pred_check_branch
      %101 = sbr.rel (0) target = $region89
    $region88: #{_lambda_.1} parent=1 // pred_region
      %102 = dma.done [#allocation6], 512
    $region89: #{_lambda_.1} parent=1 // pred_fallthru
      _
    // Predicated region
    $region90: #{_lambda_.1} parent=1 // pred_check
      _
    $region91: #{_lambda_.1} parent=1 // pred_check_branch
      %104 = sbr.rel (0) target = $region93
    $region92: #{_lambda_.1} parent=1 // pred_region
      %105 = dma.done [#allocation6], 512
    $region93: #{_lambda_.1} parent=1 // pred_fallthru
      _
    %v106 = vld [vmem:[%s0] sm:$0xff]
    %v107 = vld [vmem:[%s0 + $0x8] sm:$0xff]
    %v108 = vld [vmem:[%s2] sm:$0x1]
    %v109 = vld [vmem:[%s3] sm:$0x1]
    %vm110 = vcmask 261120
    %v111 = vsel %vm110, %v106, 0.0
    %112 = vadd.xlane.f32.xlu0 %v111
    %v113 = vpop.xlane.xlu0 %112
    %v114 = vsel %vm110, %v107, 0.0
    %115 = vadd.xlane.f32.xlu0 %v114
    %v116 = vpop.xlane.xlu0 %115
    %v117 = vrcp.pop 32.0
    %v118 = vmul.f32 %v113, %v117
    %v119 = vmul.f32 %v116, %v117
    %v120 = vsub.f32 %v106, %v118
    %v121 = vsub.f32 %v107, %v119
    %v122 = vmul.f32 %v120, %v120
    %v123 = vmul.f32 %v121, %v121
    %v124 = vsel %vm110, %v122, 0.0
    %125 = vadd.xlane.f32.xlu0 %v124
    %v126 = vpop.xlane.xlu0 %125
    %v127 = vsel %vm110, %v123, 0.0
    %128 = vadd.xlane.f32.xlu0 %v127
    %v129 = vpop.xlane.xlu0 %128
    %v130 = vmul.f32 %v126, %v117
    %v131 = vmul.f32 %v129, %v117
    %v132 = vadd.f32 %v130, 1e-12
    %v133 = vadd.f32 %v131, 1e-12
    %v134 = vrsqrt.pop %v132
    %v135 = vrsqrt.pop %v133
    %v136 = vmul.f32 %v120, %v134
    %v137 = vmul.f32 %v121, %v135
    %v139 = vlaneseq
    %v140 = vshrl.u32 %v139, 7
    %v141 = vsub.s32 0, %v140
    %v142 = vrot.slane %v108, %v141
    %v144 = vmul.f32 %v136, %v142
    %v145 = vmul.f32 %v137, %v142
    %v147 = vlaneseq
    %v148 = vshrl.u32 %v147, 7
    %v149 = vsub.s32 0, %v148
    %v150 = vrot.slane %v109, %v149
    %v152 = vadd.f32 %v144, %v150
    %v153 = vadd.f32 %v145, %v150
    %v154 = vld [vmem:[#allocation3] sm:$0xff]
    %v155 = vld [vmem:[#allocation3 + $0x8] sm:$0xff]
    %v156 = vld [vmem:[#allocation3 + $0x10] sm:$0xff]
    %v157 = vld [vmem:[#allocation3 + $0x18] sm:$0xff]
    %v158 = vld [vmem:[%s5] sm:$0x1]
    %v160 = vlaneseq
    %v161 = vshrl.u32 %v160, 7
    %v162 = vsub.s32 0, %v161
    %v163 = vrot.slane %v158, %v162
    %v166 = vsel %vm110, %v152, 0
    %v169 = vsel %vm110, %v153, 0
    %171 = vmatprep.subr.mxu0 0.0
    %172 = vmatpush1.msra.mxu0 %v154
    %173 = vmatprep.subr.mxu0 0.0
    %174 = vmatpush1.msra.mxu0 %v155
    %175 = vmatprep.subr.mxu0 0.0
    %176 = vmatpush1.msra.mxu0 %v156
    %177 = vmatprep.subr.mxu0 0.0
    %178 = vmatpush1.msra.mxu0 %v157
    %179 = vmatprep.subr.mxu0 0.0
    %180 = vmatpush1.msra.mxu0 0.0
    %181 = vmatprep.subr.mxu0 0.0
    %182 = vmatpush1.msra.mxu0 0.0
    %183 = vmatprep.subr.mxu0 0.0
    %184 = vmatpush1.msra.mxu0 0.0
    %185 = vmatprep.subr.mxu0 0.0
    %186 = vmatpush1.msra.mxu0 0.0
    %187 = vmatprep.subr.mxu0 0.0
    %188 = vmatpush1.msra.mxu0 0.0
    %189 = vmatprep.subr.mxu0 0.0
    %190 = vmatpush1.msra.mxu0 0.0
    %191 = vmatprep.subr.mxu0 0.0
    %192 = vmatpush1.msra.mxu0 0.0
    %193 = vmatprep.subr.mxu0 0.0
    %194 = vmatpush1.msra.mxu0 0.0
    %195 = vmatprep.subr.mxu0 0.0
    %196 = vmatpush1.msra.mxu0 0.0
    %197 = vmatprep.subr.mxu0 0.0
    %198 = vmatpush1.msra.mxu0 0.0
    %199 = vmatprep.subr.mxu0 0.0
    %200 = vmatpush1.msra.mxu0 0.0
    %201 = vmatprep.subr.mxu0 0.0
    %202 = vmatpush1.msra.mxu0 0.0
    %203 = vmatprep.subr.mxu0 0.0
    %204 = vmatpush1.msra.mxu0 0.0
    %205 = vmatprep.subr.mxu0 0.0
    %206 = vmatpush1.msra.mxu0 0.0
    %207 = vmatprep.subr.mxu0 0.0
    %208 = vmatpush1.msra.mxu0 0.0
    %209 = vmatprep.subr.mxu0 0.0
    %210 = vmatpush1.msra.mxu0 0.0
    %211 = vmatprep.subr.mxu0 0.0
    %212 = vmatpush1.msra.mxu0 0.0
    %213 = vmatprep.subr.mxu0 0.0
    %214 = vmatpush1.msra.mxu0 0.0
    %215 = vmatprep.subr.mxu0 0.0
    %216 = vmatpush1.msra.mxu0 0.0
    %217 = vmatprep.subr.mxu0 0.0
    %218 = vmatpush1.msra.mxu0 0.0
    %219 = vmatprep.subr.mxu0 0.0
    %220 = vmatpush1.msra.mxu0 0.0
    %221 = vmatprep.subr.mxu0 0.0
    %222 = vmatpush1.msra.mxu0 0.0
    %223 = vmatprep.subr.mxu0 0.0
    %224 = vmatpush1.msra.mxu0 0.0
    %225 = vmatprep.subr.mxu0 0.0
    %226 = vmatpush1.msra.mxu0 0.0
    %227 = vmatprep.subr.mxu0 0.0
    %228 = vmatpush1.msra.mxu0 0.0
    %229 = vmatprep.subr.mxu0 0.0
    %230 = vmatpush1.msra.mxu0 0.0
    %231 = vmatprep.subr.mxu0 0.0
    %232 = vmatpush1.msra.mxu0 0.0
    %233 = vmatprep.subr.mxu0 0.0
    %234 = vmatpush1.msra.mxu0 0.0
    %235 = vmatprep.mubr.f32.mxu0 0.0
    %236 = vmatmul.mubr.f32.gmra.mrb[0].mxu0 %v166
    %v237 = vpop.f32.mrb[0].mxu0
    %v238 = vadd.f32 %v163, %v237
    %v239 = vpop.f32.mrb[0].mxu0
    %240 = vmatprep.mubr.f32.mxu0 0.0
    %241 = vmatmul.mubr.f32.gmra.mrb[0].mxu0 %v169
    %v242 = vpop.f32.mrb[0].mxu0
    %v243 = vadd.f32 %v163, %v242
    %v244 = vpop.f32.mrb[0].mxu0
    %245 = vdwg.mxu0
    %v246 = vld [vmem:[%s1] sm:$0x1]
    %248 = vrot.lane.b32.xlu0 %v238, 96
    %v249 = vpop.permute.xlu0 %248
    %vm250 = vcmask 130048
    %v251 = vsel %vm250, %v238, 0
    %v253 = vsel %vm250, %v249, 0
    %255 = vmatprep.subr.mxu0 0.0
    %256 = vmatpush1.xpose.msra.mxu0 %v253
    %257 = vmatprep.subr.mxu0 0.0
    %258 = vmatpush1.xpose.msra.mxu0 0.0
    %259 = vmatprep.subr.mxu0 0.0
    %260 = vmatpush1.xpose.msra.mxu0 0.0
    %261 = vmatprep.subr.mxu0 0.0
    %262 = vmatpush1.xpose.msra.mxu0 0.0
    %263 = vmatprep.subr.mxu0 0.0
    %264 = vmatpush1.xpose.msra.mxu0 0.0
    %265 = vmatprep.subr.mxu0 0.0
    %266 = vmatpush1.xpose.msra.mxu0 0.0
    %267 = vmatprep.subr.mxu0 0.0
    %268 = vmatpush1.xpose.msra.mxu0 0.0
    %269 = vmatprep.subr.mxu0 0.0
    %270 = vmatpush1.xpose.msra.mxu0 0.0
    %271 = vmatprep.subr.mxu0 0.0
    %272 = vmatpush1.xpose.msra.mxu0 0.0
    %273 = vmatprep.subr.mxu0 0.0
    %274 = vmatpush1.xpose.msra.mxu0 0.0
    %275 = vmatprep.subr.mxu0 0.0
    %276 = vmatpush1.xpose.msra.mxu0 0.0
    %277 = vmatprep.subr.mxu0 0.0
    %278 = vmatpush1.xpose.msra.mxu0 0.0
    %279 = vmatprep.subr.mxu0 0.0
    %280 = vmatpush1.xpose.msra.mxu0 0.0
    %281 = vmatprep.subr.mxu0 0.0
    %282 = vmatpush1.xpose.msra.mxu0 0.0
    %283 = vmatprep.subr.mxu0 0.0
    %284 = vmatpush1.xpose.msra.mxu0 0.0
    %285 = vmatprep.subr.mxu0 0.0
    %286 = vmatpush1.xpose.msra.mxu0 0.0
    %287 = vmatprep.subr.mxu0 0.0
    %288 = vmatpush1.xpose.msra.mxu0 0.0
    %289 = vmatprep.subr.mxu0 0.0
    %290 = vmatpush1.xpose.msra.mxu0 0.0
    %291 = vmatprep.subr.mxu0 0.0
    %292 = vmatpush1.xpose.msra.mxu0 0.0
    %293 = vmatprep.subr.mxu0 0.0
    %294 = vmatpush1.xpose.msra.mxu0 0.0
    %295 = vmatprep.subr.mxu0 0.0
    %296 = vmatpush1.xpose.msra.mxu0 0.0
    %297 = vmatprep.subr.mxu0 0.0
    %298 = vmatpush1.xpose.msra.mxu0 0.0
    %299 = vmatprep.subr.mxu0 0.0
    %300 = vmatpush1.xpose.msra.mxu0 0.0
    %301 = vmatprep.subr.mxu0 0.0
    %302 = vmatpush1.xpose.msra.mxu0 0.0
    %303 = vmatprep.subr.mxu0 0.0
    %304 = vmatpush1.xpose.msra.mxu0 0.0
    %305 = vmatprep.subr.mxu0 0.0
    %306 = vmatpush1.xpose.msra.mxu0 0.0
    %307 = vmatprep.subr.mxu0 0.0
    %308 = vmatpush1.xpose.msra.mxu0 0.0
    %309 = vmatprep.subr.mxu0 0.0
    %310 = vmatpush1.xpose.msra.mxu0 0.0
    %311 = vmatprep.subr.mxu0 0.0
    %312 = vmatpush1.xpose.msra.mxu0 0.0
    %313 = vmatprep.subr.mxu0 0.0
    %314 = vmatpush1.xpose.msra.mxu0 0.0
    %315 = vmatprep.subr.mxu0 0.0
    %316 = vmatpush1.xpose.msra.mxu0 0.0
    %317 = vmatprep.subr.mxu0 0.0
    %318 = vmatpush1.xpose.msra.mxu0 0.0
    %319 = vmatprep.mubr.f32.mxu0 0.0
    %320 = vmatmul.mubr.f32.gmra.mrb[0].mxu0 %v251
    %v321 = vpop.f32.mrb[0].mxu0
    %v322 = vadd.f32 0.0, %v321
    %v323 = vpop.f32.mrb[0].mxu0
    %324 = vdwg.mxu0
    %v325 = vmul.f32 %v322, 0.25
    %v327 = vlaneseq
    %v328 = vshrl.u32 %v327, 7
    %v329 = vsub.s32 0, %v328
    %v330 = vrot.slane %v246, %v329
    %v332 = vadd.f32 %v325, %v330
    %vm333 = vcmask 64512
    %v334 = vsel %vm333, %v332, -inf
    %335 = vmax.xlane.f32.xlu0 %v334
    %v336 = vpop.xlane.xlu0 %335
    %v337 = vsub.f32 %v332, %v336
    %v338 = vmul.f32 %v337, 1.442695
    %v339 = vpow.pop %v338
    %v340 = vsel %vm333, %v339, 0.0
    %341 = vadd.xlane.f32.xlu0 %v340
    %v342 = vpop.xlane.xlu0 %341
    %v343 = vrcp.pop %v342
    %v344 = vmul.f32 %v339, %v343
    %345 = vrot.lane.b32.xlu0 %v238, 64
    %v346 = vpop.permute.xlu0 %345
    %v349 = vsel %vm333, %v344, 0
    %351 = vmatprep.subr.mxu0 0.0
    %352 = vmatpush1.msra.mxu0 %v346
    %353 = vmatprep.subr.mxu0 0.0
    %354 = vmatpush1.msra.mxu0 0.0
    %355 = vmatprep.subr.mxu0 0.0
    %356 = vmatpush1.msra.mxu0 0.0
    %357 = vmatprep.subr.mxu0 0.0
    %358 = vmatpush1.msra.mxu0 0.0
    %359 = vmatprep.subr.mxu0 0.0
    %360 = vmatpush1.msra.mxu0 0.0
    %361 = vmatprep.subr.mxu0 0.0
    %362 = vmatpush1.msra.mxu0 0.0
    %363 = vmatprep.subr.mxu0 0.0
    %364 = vmatpush1.msra.mxu0 0.0
    %365 = vmatprep.subr.mxu0 0.0
    %366 = vmatpush1.msra.mxu0 0.0
    %367 = vmatprep.subr.mxu0 0.0
    %368 = vmatpush1.msra.mxu0 0.0
    %369 = vmatprep.subr.mxu0 0.0
    %370 = vmatpush1.msra.mxu0 0.0
    %371 = vmatprep.subr.mxu0 0.0
    %372 = vmatpush1.msra.mxu0 0.0
    %373 = vmatprep.subr.mxu0 0.0
    %374 = vmatpush1.msra.mxu0 0.0
    %375 = vmatprep.subr.mxu0 0.0
    %376 = vmatpush1.msra.mxu0 0.0
    %377 = vmatprep.subr.mxu0 0.0
    %378 = vmatpush1.msra.mxu0 0.0
    %379 = vmatprep.subr.mxu0 0.0
    %380 = vmatpush1.msra.mxu0 0.0
    %381 = vmatprep.subr.mxu0 0.0
    %382 = vmatpush1.msra.mxu0 0.0
    %383 = vmatprep.subr.mxu0 0.0
    %384 = vmatpush1.msra.mxu0 0.0
    %385 = vmatprep.subr.mxu0 0.0
    %386 = vmatpush1.msra.mxu0 0.0
    %387 = vmatprep.subr.mxu0 0.0
    %388 = vmatpush1.msra.mxu0 0.0
    %389 = vmatprep.subr.mxu0 0.0
    %390 = vmatpush1.msra.mxu0 0.0
    %391 = vmatprep.subr.mxu0 0.0
    %392 = vmatpush1.msra.mxu0 0.0
    %393 = vmatprep.subr.mxu0 0.0
    %394 = vmatpush1.msra.mxu0 0.0
    %395 = vmatprep.subr.mxu0 0.0
    %396 = vmatpush1.msra.mxu0 0.0
    %397 = vmatprep.subr.mxu0 0.0
    %398 = vmatpush1.msra.mxu0 0.0
    %399 = vmatprep.subr.mxu0 0.0
    %400 = vmatpush1.msra.mxu0 0.0
    %401 = vmatprep.subr.mxu0 0.0
    %402 = vmatpush1.msra.mxu0 0.0
    %403 = vmatprep.subr.mxu0 0.0
    %404 = vmatpush1.msra.mxu0 0.0
    %405 = vmatprep.subr.mxu0 0.0
    %406 = vmatpush1.msra.mxu0 0.0
    %407 = vmatprep.subr.mxu0 0.0
    %408 = vmatpush1.msra.mxu0 0.0
    %409 = vmatprep.subr.mxu0 0.0
    %410 = vmatpush1.msra.mxu0 0.0
    %411 = vmatprep.subr.mxu0 0.0
    %412 = vmatpush1.msra.mxu0 0.0
    %413 = vmatprep.subr.mxu0 0.0
    %414 = vmatpush1.msra.mxu0 0.0
    %415 = vmatprep.mubr.f32.mxu0 0.0
    %416 = vmatmul.mubr.f32.gmra.mrb[0].mxu0 %v349
    %v417 = vpop.f32.mrb[0].mxu0
    %v418 = vadd.f32 0.0, %v417
    %v419 = vpop.f32.mrb[0].mxu0
    %420 = vdwg.mxu0
    %421 = vst.msk [vmem:[#allocation2] sm:$0xff] %vm250, %v418
    %422 = vrot.lane.b32.xlu0 %v238, 112
    %v423 = vpop.permute.xlu0 %422
    %424 = vrot.lane.b32.xlu0 %v238, 80
    %v425 = vpop.permute.xlu0 %424
    %v426 = vsel %vm250, %v423, 0
    %v428 = vsel %vm250, %v425, 0
    %430 = vmatprep.subr.mxu0 0.0
    %431 = vmatpush1.xpose.msra.mxu0 %v428
    %432 = vmatprep.subr.mxu0 0.0
    %433 = vmatpush1.xpose.msra.mxu0 0.0
    %434 = vmatprep.subr.mxu0 0.0
    %435 = vmatpush1.xpose.msra.mxu0 0.0
    %436 = vmatprep.subr.mxu0 0.0
    %437 = vmatpush1.xpose.msra.mxu0 0.0
    %438 = vmatprep.subr.mxu0 0.0
    %439 = vmatpush1.xpose.msra.mxu0 0.0
    %440 = vmatprep.subr.mxu0 0.0
    %441 = vmatpush1.xpose.msra.mxu0 0.0
    %442 = vmatprep.subr.mxu0 0.0
    %443 = vmatpush1.xpose.msra.mxu0 0.0
    %444 = vmatprep.subr.mxu0 0.0
    %445 = vmatpush1.xpose.msra.mxu0 0.0
    %446 = vmatprep.subr.mxu0 0.0
    %447 = vmatpush1.xpose.msra.mxu0 0.0
    %448 = vmatprep.subr.mxu0 0.0
    %449 = vmatpush1.xpose.msra.mxu0 0.0
    %450 = vmatprep.subr.mxu0 0.0
    %451 = vmatpush1.xpose.msra.mxu0 0.0
    %452 = vmatprep.subr.mxu0 0.0
    %453 = vmatpush1.xpose.msra.mxu0 0.0
    %454 = vmatprep.subr.mxu0 0.0
    %455 = vmatpush1.xpose.msra.mxu0 0.0
    %456 = vmatprep.subr.mxu0 0.0
    %457 = vmatpush1.xpose.msra.mxu0 0.0
    %458 = vmatprep.subr.mxu0 0.0
    %459 = vmatpush1.xpose.msra.mxu0 0.0
    %460 = vmatprep.subr.mxu0 0.0
    %461 = vmatpush1.xpose.msra.mxu0 0.0
    %462 = vmatprep.subr.mxu0 0.0
    %463 = vmatpush1.xpose.msra.mxu0 0.0
    %464 = vmatprep.subr.mxu0 0.0
    %465 = vmatpush1.xpose.msra.mxu0 0.0
    %466 = vmatprep.subr.mxu0 0.0
    %467 = vmatpush1.xpose.msra.mxu0 0.0
    %468 = vmatprep.subr.mxu0 0.0
    %469 = vmatpush1.xpose.msra.mxu0 0.0
    %470 = vmatprep.subr.mxu0 0.0
    %471 = vmatpush1.xpose.msra.mxu0 0.0
    %472 = vmatprep.subr.mxu0 0.0
    %473 = vmatpush1.xpose.msra.mxu0 0.0
    %474 = vmatprep.subr.mxu0 0.0
    %475 = vmatpush1.xpose.msra.mxu0 0.0
    %476 = vmatprep.subr.mxu0 0.0
    %477 = vmatpush1.xpose.msra.mxu0 0.0
    %478 = vmatprep.subr.mxu0 0.0
    %479 = vmatpush1.xpose.msra.mxu0 0.0
    %480 = vmatprep.subr.mxu0 0.0
    %481 = vmatpush1.xpose.msra.mxu0 0.0
    %482 = vmatprep.subr.mxu0 0.0
    %483 = vmatpush1.xpose.msra.mxu0 0.0
    %484 = vmatprep.subr.mxu0 0.0
    %485 = vmatpush1.xpose.msra.mxu0 0.0
    %486 = vmatprep.subr.mxu0 0.0
    %487 = vmatpush1.xpose.msra.mxu0 0.0
    %488 = vmatprep.subr.mxu0 0.0
    %489 = vmatpush1.xpose.msra.mxu0 0.0
    %490 = vmatprep.subr.mxu0 0.0
    %491 = vmatpush1.xpose.msra.mxu0 0.0
    %492 = vmatprep.subr.mxu0 0.0
    %493 = vmatpush1.xpose.msra.mxu0 0.0
    %494 = vmatprep.mubr.f32.mxu0 0.0
    %495 = vmatmul.mubr.f32.gmra.mrb[0].mxu0 %v426
    %v496 = vpop.f32.mrb[0].mxu0
    %v497 = vadd.f32 0.0, %v496
    %v498 = vpop.f32.mrb[0].mxu0
    %499 = vdwg.mxu0
    %v500 = vmul.f32 %v497, 0.25
    %v501 = vadd.f32 %v500, %v330
    %v502 = vsel %vm333, %v501, -inf
    %503 = vmax.xlane.f32.xlu0 %v502
    %v504 = vpop.xlane.xlu0 %503
    %v505 = vsub.f32 %v501, %v504
    %v506 = vmul.f32 %v505, 1.442695
    %v507 = vpow.pop %v506
    %v508 = vsel %vm333, %v507, 0.0
    %509 = vadd.xlane.f32.xlu0 %v508
    %v510 = vpop.xlane.xlu0 %509
    %v511 = vrcp.pop %v510
    %v512 = vmul.f32 %v507, %v511
    %513 = vrot.lane.b32.xlu0 %v238, 48
    %v514 = vpop.permute.xlu0 %513
    %v517 = vsel %vm333, %v512, 0
    %519 = vmatprep.subr.mxu0 0.0
    %520 = vmatpush1.msra.mxu0 %v514
    %521 = vmatprep.subr.mxu0 0.0
    %522 = vmatpush1.msra.mxu0 0.0
    %523 = vmatprep.subr.mxu0 0.0
    %524 = vmatpush1.msra.mxu0 0.0
    %525 = vmatprep.subr.mxu0 0.0
    %526 = vmatpush1.msra.mxu0 0.0
    %527 = vmatprep.subr.mxu0 0.0
    %528 = vmatpush1.msra.mxu0 0.0
    %529 = vmatprep.subr.mxu0 0.0
    %530 = vmatpush1.msra.mxu0 0.0
    %531 = vmatprep.subr.mxu0 0.0
    %532 = vmatpush1.msra.mxu0 0.0
    %533 = vmatprep.subr.mxu0 0.0
    %534 = vmatpush1.msra.mxu0 0.0
    %535 = vmatprep.subr.mxu0 0.0
    %536 = vmatpush1.msra.mxu0 0.0
    %537 = vmatprep.subr.mxu0 0.0
    %538 = vmatpush1.msra.mxu0 0.0
    %539 = vmatprep.subr.mxu0 0.0
    %540 = vmatpush1.msra.mxu0 0.0
    %541 = vmatprep.subr.mxu0 0.0
    %542 = vmatpush1.msra.mxu0 0.0
    %543 = vmatprep.subr.mxu0 0.0
    %544 = vmatpush1.msra.mxu0 0.0
    %545 = vmatprep.subr.mxu0 0.0
    %546 = vmatpush1.msra.mxu0 0.0
    %547 = vmatprep.subr.mxu0 0.0
    %548 = vmatpush1.msra.mxu0 0.0
    %549 = vmatprep.subr.mxu0 0.0
    %550 = vmatpush1.msra.mxu0 0.0
    %551 = vmatprep.subr.mxu0 0.0
    %552 = vmatpush1.msra.mxu0 0.0
    %553 = vmatprep.subr.mxu0 0.0
    %554 = vmatpush1.msra.mxu0 0.0
    %555 = vmatprep.subr.mxu0 0.0
    %556 = vmatpush1.msra.mxu0 0.0
    %557 = vmatprep.subr.mxu0 0.0
    %558 = vmatpush1.msra.mxu0 0.0
    %559 = vmatprep.subr.mxu0 0.0
    %560 = vmatpush1.msra.mxu0 0.0
    %561 = vmatprep.subr.mxu0 0.0
    %562 = vmatpush1.msra.mxu0 0.0
    %563 = vmatprep.subr.mxu0 0.0
    %564 = vmatpush1.msra.mxu0 0.0
    %565 = vmatprep.subr.mxu0 0.0
    %566 = vmatpush1.msra.mxu0 0.0
    %567 = vmatprep.subr.mxu0 0.0
    %568 = vmatpush1.msra.mxu0 0.0
    %569 = vmatprep.subr.mxu0 0.0
    %570 = vmatpush1.msra.mxu0 0.0
    %571 = vmatprep.subr.mxu0 0.0
    %572 = vmatpush1.msra.mxu0 0.0
    %573 = vmatprep.subr.mxu0 0.0
    %574 = vmatpush1.msra.mxu0 0.0
    %575 = vmatprep.subr.mxu0 0.0
    %576 = vmatpush1.msra.mxu0 0.0
    %577 = vmatprep.subr.mxu0 0.0
    %578 = vmatpush1.msra.mxu0 0.0
    %579 = vmatprep.subr.mxu0 0.0
    %580 = vmatpush1.msra.mxu0 0.0
    %581 = vmatprep.subr.mxu0 0.0
    %582 = vmatpush1.msra.mxu0 0.0
    %583 = vmatprep.mubr.f32.mxu0 0.0
    %584 = vmatmul.mubr.f32.gmra.mrb[0].mxu0 %v517
    %v585 = vpop.f32.mrb[0].mxu0
    %v586 = vadd.f32 0.0, %v585
    %v587 = vpop.f32.mrb[0].mxu0
    %588 = vdwg.mxu0
    %590 = vrot.lane.b32.xlu0 %v586, 16
    %v591 = vpop.permute.xlu0 %590
    %vm593 = vcmask 261248
    %594 = vst.msk [vmem:[#allocation2] sm:$0xff] %vm593, %v591
    %s595 = scalar_lea.vmem %s1, 1
    %v596 = vld [vmem:[%s595] sm:$0x1]
    %598 = vrot.lane.b32.xlu0 %v243, 96
    %v599 = vpop.permute.xlu0 %598
    %v600 = vsel %vm250, %v243, 0
    %v602 = vsel %vm250, %v599, 0
    %604 = vmatprep.subr.mxu0 0.0
    %605 = vmatpush1.xpose.msra.mxu0 %v602
    %606 = vmatprep.subr.mxu0 0.0
    %607 = vmatpush1.xpose.msra.mxu0 0.0
    %608 = vmatprep.subr.mxu0 0.0
    %609 = vmatpush1.xpose.msra.mxu0 0.0
    %610 = vmatprep.subr.mxu0 0.0
    %611 = vmatpush1.xpose.msra.mxu0 0.0
    %612 = vmatprep.subr.mxu0 0.0
    %613 = vmatpush1.xpose.msra.mxu0 0.0
    %614 = vmatprep.subr.mxu0 0.0
    %615 = vmatpush1.xpose.msra.mxu0 0.0
    %616 = vmatprep.subr.mxu0 0.0
    %617 = vmatpush1.xpose.msra.mxu0 0.0
    %618 = vmatprep.subr.mxu0 0.0
    %619 = vmatpush1.xpose.msra.mxu0 0.0
    %620 = vmatprep.subr.mxu0 0.0
    %621 = vmatpush1.xpose.msra.mxu0 0.0
    %622 = vmatprep.subr.mxu0 0.0
    %623 = vmatpush1.xpose.msra.mxu0 0.0
    %624 = vmatprep.subr.mxu0 0.0
    %625 = vmatpush1.xpose.msra.mxu0 0.0
    %626 = vmatprep.subr.mxu0 0.0
    %627 = vmatpush1.xpose.msra.mxu0 0.0
    %628 = vmatprep.subr.mxu0 0.0
    %629 = vmatpush1.xpose.msra.mxu0 0.0
    %630 = vmatprep.subr.mxu0 0.0
    %631 = vmatpush1.xpose.msra.mxu0 0.0
    %632 = vmatprep.subr.mxu0 0.0
    %633 = vmatpush1.xpose.msra.mxu0 0.0
    %634 = vmatprep.subr.mxu0 0.0
    %635 = vmatpush1.xpose.msra.mxu0 0.0
    %636 = vmatprep.subr.mxu0 0.0
    %637 = vmatpush1.xpose.msra.mxu0 0.0
    %638 = vmatprep.subr.mxu0 0.0
    %639 = vmatpush1.xpose.msra.mxu0 0.0
    %640 = vmatprep.subr.mxu0 0.0
    %641 = vmatpush1.xpose.msra.mxu0 0.0
    %642 = vmatprep.subr.mxu0 0.0
    %643 = vmatpush1.xpose.msra.mxu0 0.0
    %644 = vmatprep.subr.mxu0 0.0
    %645 = vmatpush1.xpose.msra.mxu0 0.0
    %646 = vmatprep.subr.mxu0 0.0
    %647 = vmatpush1.xpose.msra.mxu0 0.0
    %648 = vmatprep.subr.mxu0 0.0
    %649 = vmatpush1.xpose.msra.mxu0 0.0
    %650 = vmatprep.subr.mxu0 0.0
    %651 = vmatpush1.xpose.msra.mxu0 0.0
    %652 = vmatprep.subr.mxu0 0.0
    %653 = vmatpush1.xpose.msra.mxu0 0.0
    %654 = vmatprep.subr.mxu0 0.0
    %655 = vmatpush1.xpose.msra.mxu0 0.0
    %656 = vmatprep.subr.mxu0 0.0
    %657 = vmatpush1.xpose.msra.mxu0 0.0
    %658 = vmatprep.subr.mxu0 0.0
    %659 = vmatpush1.xpose.msra.mxu0 0.0
    %660 = vmatprep.subr.mxu0 0.0
    %661 = vmatpush1.xpose.msra.mxu0 0.0
    %662 = vmatprep.subr.mxu0 0.0
    %663 = vmatpush1.xpose.msra.mxu0 0.0
    %664 = vmatprep.subr.mxu0 0.0
    %665 = vmatpush1.xpose.msra.mxu0 0.0
    %666 = vmatprep.subr.mxu0 0.0
    %667 = vmatpush1.xpose.msra.mxu0 0.0
    %668 = vmatprep.mubr.f32.mxu0 0.0
    %669 = vmatmul.mubr.f32.gmra.mrb[0].mxu0 %v600
    %v670 = vpop.f32.mrb[0].mxu0
    %v671 = vadd.f32 0.0, %v670
    %v672 = vpop.f32.mrb[0].mxu0
    %673 = vdwg.mxu0
    %v674 = vmul.f32 %v671, 0.25
    %v676 = vlaneseq
    %v677 = vshrl.u32 %v676, 7
    %v678 = vsub.s32 0, %v677
    %v679 = vrot.slane %v596, %v678
    %v681 = vadd.f32 %v674, %v679
    %v682 = vsel %vm333, %v681, -inf
    %683 = vmax.xlane.f32.xlu0 %v682
    %v684 = vpop.xlane.xlu0 %683
    %v685 = vsub.f32 %v681, %v684
    %v686 = vmul.f32 %v685, 1.442695
    %v687 = vpow.pop %v686
    %v688 = vsel %vm333, %v687, 0.0
    %689 = vadd.xlane.f32.xlu0 %v688
    %v690 = vpop.xlane.xlu0 %689
    %v691 = vrcp.pop %v690
    %v692 = vmul.f32 %v687, %v691
    %693 = vrot.lane.b32.xlu0 %v243, 64
    %v694 = vpop.permute.xlu0 %693
    %v697 = vsel %vm333, %v692, 0
    %699 = vmatprep.subr.mxu0 0.0
    %700 = vmatpush1.msra.mxu0 %v694
    %701 = vmatprep.subr.mxu0 0.0
    %702 = vmatpush1.msra.mxu0 0.0
    %703 = vmatprep.subr.mxu0 0.0
    %704 = vmatpush1.msra.mxu0 0.0
    %705 = vmatprep.subr.mxu0 0.0
    %706 = vmatpush1.msra.mxu0 0.0
    %707 = vmatprep.subr.mxu0 0.0
    %708 = vmatpush1.msra.mxu0 0.0
    %709 = vmatprep.subr.mxu0 0.0
    %710 = vmatpush1.msra.mxu0 0.0
    %711 = vmatprep.subr.mxu0 0.0
    %712 = vmatpush1.msra.mxu0 0.0
    %713 = vmatprep.subr.mxu0 0.0
    %714 = vmatpush1.msra.mxu0 0.0
    %715 = vmatprep.subr.mxu0 0.0
    %716 = vmatpush1.msra.mxu0 0.0
    %717 = vmatprep.subr.mxu0 0.0
    %718 = vmatpush1.msra.mxu0 0.0
    %719 = vmatprep.subr.mxu0 0.0
    %720 = vmatpush1.msra.mxu0 0.0
    %721 = vmatprep.subr.mxu0 0.0
    %722 = vmatpush1.msra.mxu0 0.0
    %723 = vmatprep.subr.mxu0 0.0
    %724 = vmatpush1.msra.mxu0 0.0
    %725 = vmatprep.subr.mxu0 0.0
    %726 = vmatpush1.msra.mxu0 0.0
    %727 = vmatprep.subr.mxu0 0.0
    %728 = vmatpush1.msra.mxu0 0.0
    %729 = vmatprep.subr.mxu0 0.0
    %730 = vmatpush1.msra.mxu0 0.0
    %731 = vmatprep.subr.mxu0 0.0
    %732 = vmatpush1.msra.mxu0 0.0
    %733 = vmatprep.subr.mxu0 0.0
    %734 = vmatpush1.msra.mxu0 0.0
    %735 = vmatprep.subr.mxu0 0.0
    %736 = vmatpush1.msra.mxu0 0.0
    %737 = vmatprep.subr.mxu0 0.0
    %738 = vmatpush1.msra.mxu0 0.0
    %739 = vmatprep.subr.mxu0 0.0
    %740 = vmatpush1.msra.mxu0 0.0
    %741 = vmatprep.subr.mxu0 0.0
    %742 = vmatpush1.msra.mxu0 0.0
    %743 = vmatprep.subr.mxu0 0.0
    %744 = vmatpush1.msra.mxu0 0.0
    %745 = vmatprep.subr.mxu0 0.0
    %746 = vmatpush1.msra.mxu0 0.0
    %747 = vmatprep.subr.mxu0 0.0
    %748 = vmatpush1.msra.mxu0 0.0
    %749 = vmatprep.subr.mxu0 0.0
    %750 = vmatpush1.msra.mxu0 0.0
    %751 = vmatprep.subr.mxu0 0.0
    %752 = vmatpush1.msra.mxu0 0.0
    %753 = vmatprep.subr.mxu0 0.0
    %754 = vmatpush1.msra.mxu0 0.0
    %755 = vmatprep.subr.mxu0 0.0
    %756 = vmatpush1.msra.mxu0 0.0
    %757 = vmatprep.subr.mxu0 0.0
    %758 = vmatpush1.msra.mxu0 0.0
    %759 = vmatprep.subr.mxu0 0.0
    %760 = vmatpush1.msra.mxu0 0.0
    %761 = vmatprep.subr.mxu0 0.0
    %762 = vmatpush1.msra.mxu0 0.0
    %763 = vmatprep.mubr.f32.mxu0 0.0
    %764 = vmatmul.mubr.f32.gmra.mrb[0].mxu0 %v697
    %v765 = vpop.f32.mrb[0].mxu0
    %v766 = vadd.f32 0.0, %v765
    %v767 = vpop.f32.mrb[0].mxu0
    %768 = vdwg.mxu0
    %769 = vst.msk [vmem:[#allocation2 + $0x8] sm:$0xff] %vm250, %v766
    %770 = vrot.lane.b32.xlu0 %v243, 112
    %v771 = vpop.permute.xlu0 %770
    %772 = vrot.lane.b32.xlu0 %v243, 80
    %v773 = vpop.permute.xlu0 %772
    %v774 = vsel %vm250, %v771, 0
    %v776 = vsel %vm250, %v773, 0
    %778 = vmatprep.subr.mxu0 0.0
    %779 = vmatpush1.xpose.msra.mxu0 %v776
    %780 = vmatprep.subr.mxu0 0.0
    %781 = vmatpush1.xpose.msra.mxu0 0.0
    %782 = vmatprep.subr.mxu0 0.0
    %783 = vmatpush1.xpose.msra.mxu0 0.0
    %784 = vmatprep.subr.mxu0 0.0
    %785 = vmatpush1.xpose.msra.mxu0 0.0
    %786 = vmatprep.subr.mxu0 0.0
    %787 = vmatpush1.xpose.msra.mxu0 0.0
    %788 = vmatprep.subr.mxu0 0.0
    %789 = vmatpush1.xpose.msra.mxu0 0.0
    %790 = vmatprep.subr.mxu0 0.0
    %791 = vmatpush1.xpose.msra.mxu0 0.0
    %792 = vmatprep.subr.mxu0 0.0
    %793 = vmatpush1.xpose.msra.mxu0 0.0
    %794 = vmatprep.subr.mxu0 0.0
    %795 = vmatpush1.xpose.msra.mxu0 0.0
    %796 = vmatprep.subr.mxu0 0.0
    %797 = vmatpush1.xpose.msra.mxu0 0.0
    %798 = vmatprep.subr.mxu0 0.0
    %799 = vmatpush1.xpose.msra.mxu0 0.0
    %800 = vmatprep.subr.mxu0 0.0
    %801 = vmatpush1.xpose.msra.mxu0 0.0
    %802 = vmatprep.subr.mxu0 0.0
    %803 = vmatpush1.xpose.msra.mxu0 0.0
    %804 = vmatprep.subr.mxu0 0.0
    %805 = vmatpush1.xpose.msra.mxu0 0.0
    %806 = vmatprep.subr.mxu0 0.0
    %807 = vmatpush1.xpose.msra.mxu0 0.0
    %808 = vmatprep.subr.mxu0 0.0
    %809 = vmatpush1.xpose.msra.mxu0 0.0
    %810 = vmatprep.subr.mxu0 0.0
    %811 = vmatpush1.xpose.msra.mxu0 0.0
    %812 = vmatprep.subr.mxu0 0.0
    %813 = vmatpush1.xpose.msra.mxu0 0.0
    %814 = vmatprep.subr.mxu0 0.0
    %815 = vmatpush1.xpose.msra.mxu0 0.0
    %816 = vmatprep.subr.mxu0 0.0
    %817 = vmatpush1.xpose.msra.mxu0 0.0
    %818 = vmatprep.subr.mxu0 0.0
    %819 = vmatpush1.xpose.msra.mxu0 0.0
    %820 = vmatprep.subr.mxu0 0.0
    %821 = vmatpush1.xpose.msra.mxu0 0.0
    %822 = vmatprep.subr.mxu0 0.0
    %823 = vmatpush1.xpose.msra.mxu0 0.0
    %824 = vmatprep.subr.mxu0 0.0
    %825 = vmatpush1.xpose.msra.mxu0 0.0
    %826 = vmatprep.subr.mxu0 0.0
    %827 = vmatpush1.xpose.msra.mxu0 0.0
    %828 = vmatprep.subr.mxu0 0.0
    %829 = vmatpush1.xpose.msra.mxu0 0.0
    %830 = vmatprep.subr.mxu0 0.0
    %831 = vmatpush1.xpose.msra.mxu0 0.0
    %832 = vmatprep.subr.mxu0 0.0
    %833 = vmatpush1.xpose.msra.mxu0 0.0
    %834 = vmatprep.subr.mxu0 0.0
    %835 = vmatpush1.xpose.msra.mxu0 0.0
    %836 = vmatprep.subr.mxu0 0.0
    %837 = vmatpush1.xpose.msra.mxu0 0.0
    %838 = vmatprep.subr.mxu0 0.0
    %839 = vmatpush1.xpose.msra.mxu0 0.0
    %840 = vmatprep.subr.mxu0 0.0
    %841 = vmatpush1.xpose.msra.mxu0 0.0
    %842 = vmatprep.mubr.f32.mxu0 0.0
    %843 = vmatmul.mubr.f32.gmra.mrb[0].mxu0 %v774
    %v844 = vpop.f32.mrb[0].mxu0
    %v845 = vadd.f32 0.0, %v844
    %v846 = vpop.f32.mrb[0].mxu0
    %847 = vdwg.mxu0
    %v848 = vmul.f32 %v845, 0.25
    %v849 = vadd.f32 %v848, %v679
    %v850 = vsel %vm333, %v849, -inf
    %851 = vmax.xlane.f32.xlu0 %v850
    %v852 = vpop.xlane.xlu0 %851
    %v853 = vsub.f32 %v849, %v852
    %v854 = vmul.f32 %v853, 1.442695
    %v855 = vpow.pop %v854
    %v856 = vsel %vm333, %v855, 0.0
    %857 = vadd.xlane.f32.xlu0 %v856
    %v858 = vpop.xlane.xlu0 %857
    %v859 = vrcp.pop %v858
    %v860 = vmul.f32 %v855, %v859
    %861 = vrot.lane.b32.xlu0 %v243, 48
    %v862 = vpop.permute.xlu0 %861
    %v865 = vsel %vm333, %v860, 0
    %867 = vmatprep.subr.mxu0 0.0
    %868 = vmatpush1.msra.mxu0 %v862
    %869 = vmatprep.subr.mxu0 0.0
    %870 = vmatpush1.msra.mxu0 0.0
    %871 = vmatprep.subr.mxu0 0.0
    %872 = vmatpush1.msra.mxu0 0.0
    %873 = vmatprep.subr.mxu0 0.0
    %874 = vmatpush1.msra.mxu0 0.0
    %875 = vmatprep.subr.mxu0 0.0
    %876 = vmatpush1.msra.mxu0 0.0
    %877 = vmatprep.subr.mxu0 0.0
    %878 = vmatpush1.msra.mxu0 0.0
    %879 = vmatprep.subr.mxu0 0.0
    %880 = vmatpush1.msra.mxu0 0.0
    %881 = vmatprep.subr.mxu0 0.0
    %882 = vmatpush1.msra.mxu0 0.0
    %883 = vmatprep.subr.mxu0 0.0
    %884 = vmatpush1.msra.mxu0 0.0
    %885 = vmatprep.subr.mxu0 0.0
    %886 = vmatpush1.msra.mxu0 0.0
    %887 = vmatprep.subr.mxu0 0.0
    %888 = vmatpush1.msra.mxu0 0.0
    %889 = vmatprep.subr.mxu0 0.0
    %890 = vmatpush1.msra.mxu0 0.0
    %891 = vmatprep.subr.mxu0 0.0
    %892 = vmatpush1.msra.mxu0 0.0
    %893 = vmatprep.subr.mxu0 0.0
    %894 = vmatpush1.msra.mxu0 0.0
    %895 = vmatprep.subr.mxu0 0.0
    %896 = vmatpush1.msra.mxu0 0.0
    %897 = vmatprep.subr.mxu0 0.0
    %898 = vmatpush1.msra.mxu0 0.0
    %899 = vmatprep.subr.mxu0 0.0
    %900 = vmatpush1.msra.mxu0 0.0
    %901 = vmatprep.subr.mxu0 0.0
    %902 = vmatpush1.msra.mxu0 0.0
    %903 = vmatprep.subr.mxu0 0.0
    %904 = vmatpush1.msra.mxu0 0.0
    %905 = vmatprep.subr.mxu0 0.0
    %906 = vmatpush1.msra.mxu0 0.0
    %907 = vmatprep.subr.mxu0 0.0
    %908 = vmatpush1.msra.mxu0 0.0
    %909 = vmatprep.subr.mxu0 0.0
    %910 = vmatpush1.msra.mxu0 0.0
    %911 = vmatprep.subr.mxu0 0.0
    %912 = vmatpush1.msra.mxu0 0.0
    %913 = vmatprep.subr.mxu0 0.0
    %914 = vmatpush1.msra.mxu0 0.0
    %915 = vmatprep.subr.mxu0 0.0
    %916 = vmatpush1.msra.mxu0 0.0
    %917 = vmatprep.subr.mxu0 0.0
    %918 = vmatpush1.msra.mxu0 0.0
    %919 = vmatprep.subr.mxu0 0.0
    %920 = vmatpush1.msra.mxu0 0.0
    %921 = vmatprep.subr.mxu0 0.0
    %922 = vmatpush1.msra.mxu0 0.0
    %923 = vmatprep.subr.mxu0 0.0
    %924 = vmatpush1.msra.mxu0 0.0
    %925 = vmatprep.subr.mxu0 0.0
    %926 = vmatpush1.msra.mxu0 0.0
    %927 = vmatprep.subr.mxu0 0.0
    %928 = vmatpush1.msra.mxu0 0.0
    %929 = vmatprep.subr.mxu0 0.0
    %930 = vmatpush1.msra.mxu0 0.0
    %931 = vmatprep.mubr.f32.mxu0 0.0
    %932 = vmatmul.mubr.f32.gmra.mrb[0].mxu0 %v865
    %v933 = vpop.f32.mrb[0].mxu0
    %v934 = vadd.f32 0.0, %v933
    %v935 = vpop.f32.mrb[0].mxu0
    %936 = vdwg.mxu0
    %938 = vrot.lane.b32.xlu0 %v934, 16
    %v939 = vpop.permute.xlu0 %938
    %941 = vst.msk [vmem:[#allocation2 + $0x8] sm:$0xff] %vm593, %v939
    %v942 = vld [vmem:[#allocation2] sm:$0xff]
    %v943 = vld [vmem:[#allocation2 + $0x8] sm:$0xff]
    %v944 = vld [vmem:[%s6] sm:$0xff]
    %v945 = vld [vmem:[%s6 + $0x8] sm:$0xff]
    %v946 = vld [vmem:[%s6 + $0x10] sm:$0xff]
    %v947 = vld [vmem:[%s6 + $0x18] sm:$0xff]
    %v948 = vld [vmem:[%s7] sm:$0x1]
    %v950 = vlaneseq
    %v951 = vshrl.u32 %v950, 7
    %v952 = vsub.s32 0, %v951
    %v953 = vrot.slane %v948, %v952
    %v956 = vsel %vm110, %v942, 0
    %v959 = vsel %vm110, %v943, 0
    %961 = vmatprep.subr.mxu0 0.0
    %962 = vmatpush1.msra.mxu0 %v944
    %963 = vmatprep.subr.mxu0 0.0
    %964 = vmatpush1.msra.mxu0 %v945
    %965 = vmatprep.subr.mxu0 0.0
    %966 = vmatpush1.msra.mxu0 %v946
    %967 = vmatprep.subr.mxu0 0.0
    %968 = vmatpush1.msra.mxu0 %v947
    %969 = vmatprep.subr.mxu0 0.0
    %970 = vmatpush1.msra.mxu0 0.0
    %971 = vmatprep.subr.mxu0 0.0
    %972 = vmatpush1.msra.mxu0 0.0
    %973 = vmatprep.subr.mxu0 0.0
    %974 = vmatpush1.msra.mxu0 0.0
    %975 = vmatprep.subr.mxu0 0.0
    %976 = vmatpush1.msra.mxu0 0.0
    %977 = vmatprep.subr.mxu0 0.0
    %978 = vmatpush1.msra.mxu0 0.0
    %979 = vmatprep.subr.mxu0 0.0
    %980 = vmatpush1.msra.mxu0 0.0
    %981 = vmatprep.subr.mxu0 0.0
    %982 = vmatpush1.msra.mxu0 0.0
    %983 = vmatprep.subr.mxu0 0.0
    %984 = vmatpush1.msra.mxu0 0.0
    %985 = vmatprep.subr.mxu0 0.0
    %986 = vmatpush1.msra.mxu0 0.0
    %987 = vmatprep.subr.mxu0 0.0
    %988 = vmatpush1.msra.mxu0 0.0
    %989 = vmatprep.subr.mxu0 0.0
    %990 = vmatpush1.msra.mxu0 0.0
    %991 = vmatprep.subr.mxu0 0.0
    %992 = vmatpush1.msra.mxu0 0.0
    %993 = vmatprep.subr.mxu0 0.0
    %994 = vmatpush1.msra.mxu0 0.0
    %995 = vmatprep.subr.mxu0 0.0
    %996 = vmatpush1.msra.mxu0 0.0
    %997 = vmatprep.subr.mxu0 0.0
    %998 = vmatpush1.msra.mxu0 0.0
    %999 = vmatprep.subr.mxu0 0.0
    %1000 = vmatpush1.msra.mxu0 0.0
    %1001 = vmatprep.subr.mxu0 0.0
    %1002 = vmatpush1.msra.mxu0 0.0
    %1003 = vmatprep.subr.mxu0 0.0
    %1004 = vmatpush1.msra.mxu0 0.0
    %1005 = vmatprep.subr.mxu0 0.0
    %1006 = vmatpush1.msra.mxu0 0.0
    %1007 = vmatprep.subr.mxu0 0.0
    %1008 = vmatpush1.msra.mxu0 0.0
    %1009 = vmatprep.subr.mxu0 0.0
    %1010 = vmatpush1.msra.mxu0 0.0
    %1011 = vmatprep.subr.mxu0 0.0
    %1012 = vmatpush1.msra.mxu0 0.0
    %1013 = vmatprep.subr.mxu0 0.0
    %1014 = vmatpush1.msra.mxu0 0.0
    %1015 = vmatprep.subr.mxu0 0.0
    %1016 = vmatpush1.msra.mxu0 0.0
    %1017 = vmatprep.subr.mxu0 0.0
    %1018 = vmatpush1.msra.mxu0 0.0
    %1019 = vmatprep.subr.mxu0 0.0
    %1020 = vmatpush1.msra.mxu0 0.0
    %1021 = vmatprep.subr.mxu0 0.0
    %1022 = vmatpush1.msra.mxu0 0.0
    %1023 = vmatprep.subr.mxu0 0.0
    %1024 = vmatpush1.msra.mxu0 0.0
    %1025 = vmatprep.mubr.f32.mxu0 0.0
    %1026 = vmatmul.mubr.f32.gmra.mrb[0].mxu0 %v956
    %v1027 = vpop.f32.mrb[0].mxu0
    %v1028 = vadd.f32 %v953, %v1027
    %v1029 = vpop.f32.mrb[0].mxu0
    %1030 = vmatprep.mubr.f32.mxu0 0.0
    %1031 = vmatmul.mubr.f32.gmra.mrb[0].mxu0 %v959
    %v1032 = vpop.f32.mrb[0].mxu0
    %v1033 = vadd.f32 %v953, %v1032
    %v1034 = vpop.f32.mrb[0].mxu0
    %1035 = vdwg.mxu0
    %v1036 = vadd.f32 %v1028, %v152
    %v1037 = vadd.f32 %v1033, %v153
    %v1038 = vld [vmem:[%s8] sm:$0x1]
    %v1039 = vld [vmem:[%s9] sm:$0x1]
    %v1040 = vsel %vm110, %v1036, 0.0
    %1041 = vadd.xlane.f32.xlu0 %v1040
    %v1042 = vpop.xlane.xlu0 %1041
    %v1043 = vsel %vm110, %v1037, 0.0
    %1044 = vadd.xlane.f32.xlu0 %v1043
    %v1045 = vpop.xlane.xlu0 %1044
    %v1046 = vmul.f32 %v1042, %v117
    %v1047 = vmul.f32 %v1045, %v117
    %v1048 = vsub.f32 %v1036, %v1046
    %v1049 = vsub.f32 %v1037, %v1047
    %v1050 = vmul.f32 %v1048, %v1048
    %v1051 = vmul.f32 %v1049, %v1049
    %v1052 = vsel %vm110, %v1050, 0.0
    %1053 = vadd.xlane.f32.xlu0 %v1052
    %v1054 = vpop.xlane.xlu0 %1053
    %v1055 = vsel %vm110, %v1051, 0.0
    %1056 = vadd.xlane.f32.xlu0 %v1055
    %v1057 = vpop.xlane.xlu0 %1056
    %v1058 = vmul.f32 %v1054, %v117
    %v1059 = vmul.f32 %v1057, %v117
    %v1060 = vadd.f32 %v1058, 1e-12
    %v1061 = vadd.f32 %v1059, 1e-12
    %v1062 = vrsqrt.pop %v1060
    %v1063 = vrsqrt.pop %v1061
    %v1064 = vmul.f32 %v1048, %v1062
    %v1065 = vmul.f32 %v1049, %v1063
    %v1067 = vlaneseq
    %v1068 = vshrl.u32 %v1067, 7
    %v1069 = vsub.s32 0, %v1068
    %v1070 = vrot.slane %v1038, %v1069
    %v1072 = vmul.f32 %v1064, %v1070
    %v1073 = vmul.f32 %v1065, %v1070
    %v1075 = vlaneseq
    %v1076 = vshrl.u32 %v1075, 7
    %v1077 = vsub.s32 0, %v1076
    %v1078 = vrot.slane %v1039, %v1077
    %v1080 = vadd.f32 %v1072, %v1078
    %v1081 = vadd.f32 %v1073, %v1078
    %v1082 = vld [vmem:[%s10] sm:$0xff]
    %v1083 = vld [vmem:[%s10 + $0x8] sm:$0xff]
    %v1084 = vld [vmem:[%s10 + $0x10] sm:$0xff]
    %v1085 = vld [vmem:[%s10 + $0x18] sm:$0xff]
    %v1086 = vld [vmem:[%s11] sm:$0x1]
    %v1088 = vlaneseq
    %v1089 = vshrl.u32 %v1088, 7
    %v1090 = vsub.s32 0, %v1089
    %v1091 = vrot.slane %v1086, %v1090
    %v1094 = vsel %vm110, %v1080, 0
    %v1097 = vsel %vm110, %v1081, 0
    %1099 = vmatprep.subr.mxu0 0.0
    %1100 = vmatpush1.msra.mxu0 %v1082
    %1101 = vmatprep.subr.mxu0 0.0
    %1102 = vmatpush1.msra.mxu0 %v1083
    %1103 = vmatprep.subr.mxu0 0.0
    %1104 = vmatpush1.msra.mxu0 %v1084
    %1105 = vmatprep.subr.mxu0 0.0
    %1106 = vmatpush1.msra.mxu0 %v1085
    %1107 = vmatprep.subr.mxu0 0.0
    %1108 = vmatpush1.msra.mxu0 0.0
    %1109 = vmatprep.subr.mxu0 0.0
    %1110 = vmatpush1.msra.mxu0 0.0
    %1111 = vmatprep.subr.mxu0 0.0
    %1112 = vmatpush1.msra.mxu0 0.0
    %1113 = vmatprep.subr.mxu0 0.0
    %1114 = vmatpush1.msra.mxu0 0.0
    %1115 = vmatprep.subr.mxu0 0.0
    %1116 = vmatpush1.msra.mxu0 0.0
    %1117 = vmatprep.subr.mxu0 0.0
    %1118 = vmatpush1.msra.mxu0 0.0
    %1119 = vmatprep.subr.mxu0 0.0
    %1120 = vmatpush1.msra.mxu0 0.0
    %1121 = vmatprep.subr.mxu0 0.0
    %1122 = vmatpush1.msra.mxu0 0.0
    %1123 = vmatprep.subr.mxu0 0.0
    %1124 = vmatpush1.msra.mxu0 0.0
    %1125 = vmatprep.subr.mxu0 0.0
    %1126 = vmatpush1.msra.mxu0 0.0
    %1127 = vmatprep.subr.mxu0 0.0
    %1128 = vmatpush1.msra.mxu0 0.0
    %1129 = vmatprep.subr.mxu0 0.0
    %1130 = vmatpush1.msra.mxu0 0.0
    %1131 = vmatprep.subr.mxu0 0.0
    %1132 = vmatpush1.msra.mxu0 0.0
    %1133 = vmatprep.subr.mxu0 0.0
    %1134 = vmatpush1.msra.mxu0 0.0
    %1135 = vmatprep.subr.mxu0 0.0
    %1136 = vmatpush1.msra.mxu0 0.0
    %1137 = vmatprep.subr.mxu0 0.0
    %1138 = vmatpush1.msra.mxu0 0.0
    %1139 = vmatprep.subr.mxu0 0.0
    %1140 = vmatpush1.msra.mxu0 0.0
    %1141 = vmatprep.subr.mxu0 0.0
    %1142 = vmatpush1.msra.mxu0 0.0
    %1143 = vmatprep.subr.mxu0 0.0
    %1144 = vmatpush1.msra.mxu0 0.0
    %1145 = vmatprep.subr.mxu0 0.0
    %1146 = vmatpush1.msra.mxu0 0.0
    %1147 = vmatprep.subr.mxu0 0.0
    %1148 = vmatpush1.msra.mxu0 0.0
    %1149 = vmatprep.subr.mxu0 0.0
    %1150 = vmatpush1.msra.mxu0 0.0
    %1151 = vmatprep.subr.mxu0 0.0
    %1152 = vmatpush1.msra.mxu0 0.0
    %1153 = vmatprep.subr.mxu0 0.0
    %1154 = vmatpush1.msra.mxu0 0.0
    %1155 = vmatprep.subr.mxu0 0.0
    %1156 = vmatpush1.msra.mxu0 0.0
    %1157 = vmatprep.subr.mxu0 0.0
    %1158 = vmatpush1.msra.mxu0 0.0
    %1159 = vmatprep.subr.mxu0 0.0
    %1160 = vmatpush1.msra.mxu0 0.0
    %1161 = vmatprep.subr.mxu0 0.0
    %1162 = vmatpush1.msra.mxu0 0.0
    %1163 = vmatprep.mubr.f32.mxu0 0.0
    %1164 = vmatmul.mubr.f32.gmra.mrb[0].mxu0 %v1094
    %v1165 = vpop.f32.mrb[0].mxu0
    %v1166 = vadd.f32 %v1091, %v1165
    %v1167 = vpop.f32.mrb[0].mxu0
    %1168 = vmatprep.mubr.f32.mxu0 0.0
    %1169 = vmatmul.mubr.f32.gmra.mrb[0].mxu0 %v1097
    %v1170 = vpop.f32.mrb[0].mxu0
    %v1171 = vadd.f32 %v1091, %v1170
    %v1172 = vpop.f32.mrb[0].mxu0
    %1173 = vdwg.mxu0
    %v1174 = vmul.f32 %v1166, %v1166
    %v1175 = vmul.f32 %v1171, %v1171
    %v1176 = vmul.f32 %v1166, %v1174
    %v1177 = vmul.f32 %v1171, %v1175
    %v1178 = vmul.f32 %v1176, 0.044715
    %v1179 = vmul.f32 %v1177, 0.044715
    %v1180 = vadd.f32 %v1166, %v1178
    %v1181 = vadd.f32 %v1171, %v1179
    %v1182 = vmul.f32 %v1180, 0.7978846
    %v1183 = vmul.f32 %v1181, 0.7978846
    %v1184 = vtanh.pop %v1182
    %v1185 = vtanh.pop %v1183
    %v1186 = vadd.f32 %v1184, 1.0
    %v1187 = vadd.f32 %v1185, 1.0
    %v1188 = vmul.f32 %v1186, 0.5
    %v1189 = vmul.f32 %v1187, 0.5
    %v1190 = vmul.f32 %v1166, %v1188
    %v1191 = vmul.f32 %v1171, %v1189
    %v1192 = vld [vmem:[%s12] sm:$0xff]
    %v1193 = vld [vmem:[%s12 + $0x8] sm:$0xff]
    %v1194 = vld [vmem:[%s12 + $0x10] sm:$0xff]
    %v1195 = vld [vmem:[%s12 + $0x18] sm:$0xff]
    %v1196 = vld [vmem:[%s12 + $0x20] sm:$0xff]
    %v1197 = vld [vmem:[%s12 + $0x28] sm:$0xff]
    %v1198 = vld [vmem:[%s12 + $0x30] sm:$0xff]
    %v1199 = vld [vmem:[%s12 + $0x38] sm:$0xff]
    %v1200 = vld [vmem:[%s13] sm:$0x1]
    %v1202 = vlaneseq
    %v1203 = vshrl.u32 %v1202, 7
    %v1204 = vsub.s32 0, %v1203
    %v1205 = vrot.slane %v1200, %v1204
    %vm1207 = vcmask 523264
    %v1209 = vsel %vm1207, %v1190, 0
    %v1212 = vsel %vm1207, %v1191, 0
    %1214 = vmatprep.subr.mxu0 0.0
    %1215 = vmatpush1.msra.mxu0 %v1192
    %1216 = vmatprep.subr.mxu0 0.0
    %1217 = vmatpush1.msra.mxu0 %v1193
    %1218 = vmatprep.subr.mxu0 0.0
    %1219 = vmatpush1.msra.mxu0 %v1194
    %1220 = vmatprep.subr.mxu0 0.0
    %1221 = vmatpush1.msra.mxu0 %v1195
    %1222 = vmatprep.subr.mxu0 0.0
    %1223 = vmatpush1.msra.mxu0 %v1196
    %1224 = vmatprep.subr.mxu0 0.0
    %1225 = vmatpush1.msra.mxu0 %v1197
    %1226 = vmatprep.subr.mxu0 0.0
    %1227 = vmatpush1.msra.mxu0 %v1198
    %1228 = vmatprep.subr.mxu0 0.0
    %1229 = vmatpush1.msra.mxu0 %v1199
    %1230 = vmatprep.subr.mxu0 0.0
    %1231 = vmatpush1.msra.mxu0 0.0
    %1232 = vmatprep.subr.mxu0 0.0
    %1233 = vmatpush1.msra.mxu0 0.0
    %1234 = vmatprep.subr.mxu0 0.0
    %1235 = vmatpush1.msra.mxu0 0.0
    %1236 = vmatprep.subr.mxu0 0.0
    %1237 = vmatpush1.msra.mxu0 0.0
    %1238 = vmatprep.subr.mxu0 0.0
    %1239 = vmatpush1.msra.mxu0 0.0
    %1240 = vmatprep.subr.mxu0 0.0
    %1241 = vmatpush1.msra.mxu0 0.0
    %1242 = vmatprep.subr.mxu0 0.0
    %1243 = vmatpush1.msra.mxu0 0.0
    %1244 = vmatprep.subr.mxu0 0.0
    %1245 = vmatpush1.msra.mxu0 0.0
    %1246 = vmatprep.subr.mxu0 0.0
    %1247 = vmatpush1.msra.mxu0 0.0
    %1248 = vmatprep.subr.mxu0 0.0
    %1249 = vmatpush1.msra.mxu0 0.0
    %1250 = vmatprep.subr.mxu0 0.0
    %1251 = vmatpush1.msra.mxu0 0.0
    %1252 = vmatprep.subr.mxu0 0.0
    %1253 = vmatpush1.msra.mxu0 0.0
    %1254 = vmatprep.subr.mxu0 0.0
    %1255 = vmatpush1.msra.mxu0 0.0
    %1256 = vmatprep.subr.mxu0 0.0
    %1257 = vmatpush1.msra.mxu0 0.0
    %1258 = vmatprep.subr.mxu0 0.0
    %1259 = vmatpush1.msra.mxu0 0.0
    %1260 = vmatprep.subr.mxu0 0.0
    %1261 = vmatpush1.msra.mxu0 0.0
    %1262 = vmatprep.subr.mxu0 0.0
    %1263 = vmatpush1.msra.mxu0 0.0
    %1264 = vmatprep.subr.mxu0 0.0
    %1265 = vmatpush1.msra.mxu0 0.0
    %1266 = vmatprep.subr.mxu0 0.0
    %1267 = vmatpush1.msra.mxu0 0.0
    %1268 = vmatprep.subr.mxu0 0.0
    %1269 = vmatpush1.msra.mxu0 0.0
    %1270 = vmatprep.subr.mxu0 0.0
    %1271 = vmatpush1.msra.mxu0 0.0
    %1272 = vmatprep.subr.mxu0 0.0
    %1273 = vmatpush1.msra.mxu0 0.0
    %1274 = vmatprep.subr.mxu0 0.0
    %1275 = vmatpush1.msra.mxu0 0.0
    %1276 = vmatprep.subr.mxu0 0.0
    %1277 = vmatpush1.msra.mxu0 0.0
    %1278 = vmatprep.mubr.f32.mxu0 0.0
    %1279 = vmatmul.mubr.f32.gmra.mrb[0].mxu0 %v1209
    %v1280 = vpop.f32.mrb[0].mxu0
    %v1281 = vadd.f32 %v1205, %v1280
    %v1282 = vpop.f32.mrb[0].mxu0
    %1283 = vmatprep.mubr.f32.mxu0 0.0
    %1284 = vmatmul.mubr.f32.gmra.mrb[0].mxu0 %v1212
    %v1285 = vpop.f32.mrb[0].mxu0
    %v1286 = vadd.f32 %v1205, %v1285
    %v1287 = vpop.f32.mrb[0].mxu0
    %1288 = vdwg.mxu0
    %v1289 = vadd.f32 %v1281, %v1080
    %v1290 = vadd.f32 %v1286, %v1081
    %v1291 = vld [vmem:[%s14] sm:$0x1]
    %v1292 = vld [vmem:[%s15] sm:$0x1]
    %v1293 = vsel %vm110, %v1289, 0.0
    %1294 = vadd.xlane.f32.xlu0 %v1293
    %v1295 = vpop.xlane.xlu0 %1294
    %v1296 = vsel %vm110, %v1290, 0.0
    %1297 = vadd.xlane.f32.xlu0 %v1296
    %v1298 = vpop.xlane.xlu0 %1297
    %v1299 = vmul.f32 %v1295, %v117
    %v1300 = vmul.f32 %v1298, %v117
    %v1301 = vsub.f32 %v1289, %v1299
    %v1302 = vsub.f32 %v1290, %v1300
    %v1303 = vmul.f32 %v1301, %v1301
    %v1304 = vmul.f32 %v1302, %v1302
    %v1305 = vsel %vm110, %v1303, 0.0
    %1306 = vadd.xlane.f32.xlu0 %v1305
    %v1307 = vpop.xlane.xlu0 %1306
    %v1308 = vsel %vm110, %v1304, 0.0
    %1309 = vadd.xlane.f32.xlu0 %v1308
    %v1310 = vpop.xlane.xlu0 %1309
    %v1311 = vmul.f32 %v1307, %v117
    %v1312 = vmul.f32 %v1310, %v117
    %v1313 = vadd.f32 %v1311, 1e-12
    %v1314 = vadd.f32 %v1312, 1e-12
    %v1315 = vrsqrt.pop %v1313
    %v1316 = vrsqrt.pop %v1314
    %v1317 = vmul.f32 %v1301, %v1315
    %v1318 = vmul.f32 %v1302, %v1316
    %v1320 = vlaneseq
    %v1321 = vshrl.u32 %v1320, 7
    %v1322 = vsub.s32 0, %v1321
    %v1323 = vrot.slane %v1291, %v1322
    %v1325 = vmul.f32 %v1317, %v1323
    %v1326 = vmul.f32 %v1318, %v1323
    %v1328 = vlaneseq
    %v1329 = vshrl.u32 %v1328, 7
    %v1330 = vsub.s32 0, %v1329
    %v1331 = vrot.slane %v1292, %v1330
    %v1333 = vadd.f32 %v1325, %v1331
    %v1334 = vadd.f32 %v1326, %v1331
    %s1335 = scalar_lea.vmem [#allocation3], 32
    %v1336 = vld [vmem:[%s1335] sm:$0xff]
    %v1337 = vld [vmem:[%s1335 + $0x8] sm:$0xff]
    %v1338 = vld [vmem:[%s1335 + $0x10] sm:$0xff]
    %v1339 = vld [vmem:[%s1335 + $0x18] sm:$0xff]
    %s1340 = scalar_lea.vmem %s5, 1
    %v1341 = vld [vmem:[%s1340] sm:$0x1]
    %v1343 = vlaneseq
    %v1344 = vshrl.u32 %v1343, 7
    %v1345 = vsub.s32 0, %v1344
    %v1346 = vrot.slane %v1341, %v1345
    %v1349 = vsel %vm110, %v1333, 0
    %v1352 = vsel %vm110, %v1334, 0
    %1354 = vmatprep.subr.mxu0 0.0
    %1355 = vmatpush1.msra.mxu0 %v1336
    %1356 = vmatprep.subr.mxu0 0.0
    %1357 = vmatpush1.msra.mxu0 %v1337
    %1358 = vmatprep.subr.mxu0 0.0
    %1359 = vmatpush1.msra.mxu0 %v1338
    %1360 = vmatprep.subr.mxu0 0.0
    %1361 = vmatpush1.msra.mxu0 %v1339
    %1362 = vmatprep.subr.mxu0 0.0
    %1363 = vmatpush1.msra.mxu0 0.0
    %1364 = vmatprep.subr.mxu0 0.0
    %1365 = vmatpush1.msra.mxu0 0.0
    %1366 = vmatprep.subr.mxu0 0.0
    %1367 = vmatpush1.msra.mxu0 0.0
    %1368 = vmatprep.subr.mxu0 0.0
    %1369 = vmatpush1.msra.mxu0 0.0
    %1370 = vmatprep.subr.mxu0 0.0
    %1371 = vmatpush1.msra.mxu0 0.0
    %1372 = vmatprep.subr.mxu0 0.0
    %1373 = vmatpush1.msra.mxu0 0.0
    %1374 = vmatprep.subr.mxu0 0.0
    %1375 = vmatpush1.msra.mxu0 0.0
    %1376 = vmatprep.subr.mxu0 0.0
    %1377 = vmatpush1.msra.mxu0 0.0
    %1378 = vmatprep.subr.mxu0 0.0
    %1379 = vmatpush1.msra.mxu0 0.0
    %1380 = vmatprep.subr.mxu0 0.0
    %1381 = vmatpush1.msra.mxu0 0.0
    %1382 = vmatprep.subr.mxu0 0.0
    %1383 = vmatpush1.msra.mxu0 0.0
    %1384 = vmatprep.subr.mxu0 0.0
    %1385 = vmatpush1.msra.mxu0 0.0
    %1386 = vmatprep.subr.mxu0 0.0
    %1387 = vmatpush1.msra.mxu0 0.0
    %1388 = vmatprep.subr.mxu0 0.0
    %1389 = vmatpush1.msra.mxu0 0.0
    %1390 = vmatprep.subr.mxu0 0.0
    %1391 = vmatpush1.msra.mxu0 0.0
    %1392 = vmatprep.subr.mxu0 0.0
    %1393 = vmatpush1.msra.mxu0 0.0
    %1394 = vmatprep.subr.mxu0 0.0
    %1395 = vmatpush1.msra.mxu0 0.0
    %1396 = vmatprep.subr.mxu0 0.0
    %1397 = vmatpush1.msra.mxu0 0.0
    %1398 = vmatprep.subr.mxu0 0.0
    %1399 = vmatpush1.msra.mxu0 0.0
    %1400 = vmatprep.subr.mxu0 0.0
    %1401 = vmatpush1.msra.mxu0 0.0
    %1402 = vmatprep.subr.mxu0 0.0
    %1403 = vmatpush1.msra.mxu0 0.0
    %1404 = vmatprep.subr.mxu0 0.0
    %1405 = vmatpush1.msra.mxu0 0.0
    %1406 = vmatprep.subr.mxu0 0.0
    %1407 = vmatpush1.msra.mxu0 0.0
    %1408 = vmatprep.subr.mxu0 0.0
    %1409 = vmatpush1.msra.mxu0 0.0
    %1410 = vmatprep.subr.mxu0 0.0
    %1411 = vmatpush1.msra.mxu0 0.0
    %1412 = vmatprep.subr.mxu0 0.0
    %1413 = vmatpush1.msra.mxu0 0.0
    %1414 = vmatprep.subr.mxu0 0.0
    %1415 = vmatpush1.msra.mxu0 0.0
    %1416 = vmatprep.subr.mxu0 0.0
    %1417 = vmatpush1.msra.mxu0 0.0
    %1418 = vmatprep.mubr.f32.mxu0 0.0
    %1419 = vmatmul.mubr.f32.gmra.mrb[0].mxu0 %v1349
    %v1420 = vpop.f32.mrb[0].mxu0
    %v1421 = vadd.f32 %v1346, %v1420
    %v1422 = vpop.f32.mrb[0].mxu0
    %1423 = vmatprep.mubr.f32.mxu0 0.0
    %1424 = vmatmul.mubr.f32.gmra.mrb[0].mxu0 %v1352
    %v1425 = vpop.f32.mrb[0].mxu0
    %v1426 = vadd.f32 %v1346, %v1425
    %v1427 = vpop.f32.mrb[0].mxu0
    %1428 = vdwg.mxu0
    %v1429 = vld [vmem:[%s1] sm:$0x1]
    %1431 = vrot.lane.b32.xlu0 %v1421, 96
    %v1432 = vpop.permute.xlu0 %1431
    %v1433 = vsel %vm250, %v1421, 0
    %v1435 = vsel %vm250, %v1432, 0
    %1437 = vmatprep.subr.mxu0 0.0
    %1438 = vmatpush1.xpose.msra.mxu0 %v1435
    %1439 = vmatprep.subr.mxu0 0.0
    %1440 = vmatpush1.xpose.msra.mxu0 0.0
    %1441 = vmatprep.subr.mxu0 0.0
    %1442 = vmatpush1.xpose.msra.mxu0 0.0
    %1443 = vmatprep.subr.mxu0 0.0
    %1444 = vmatpush1.xpose.msra.mxu0 0.0
    %1445 = vmatprep.subr.mxu0 0.0
    %1446 = vmatpush1.xpose.msra.mxu0 0.0
    %1447 = vmatprep.subr.mxu0 0.0
    %1448 = vmatpush1.xpose.msra.mxu0 0.0
    %1449 = vmatprep.subr.mxu0 0.0
    %1450 = vmatpush1.xpose.msra.mxu0 0.0
    %1451 = vmatprep.subr.mxu0 0.0
    %1452 = vmatpush1.xpose.msra.mxu0 0.0
    %1453 = vmatprep.subr.mxu0 0.0
    %1454 = vmatpush1.xpose.msra.mxu0 0.0
    %1455 = vmatprep.subr.mxu0 0.0
    %1456 = vmatpush1.xpose.msra.mxu0 0.0
    %1457 = vmatprep.subr.mxu0 0.0
    %1458 = vmatpush1.xpose.msra.mxu0 0.0
    %1459 = vmatprep.subr.mxu0 0.0
    %1460 = vmatpush1.xpose.msra.mxu0 0.0
    %1461 = vmatprep.subr.mxu0 0.0
    %1462 = vmatpush1.xpose.msra.mxu0 0.0
    %1463 = vmatprep.subr.mxu0 0.0
    %1464 = vmatpush1.xpose.msra.mxu0 0.0
    %1465 = vmatprep.subr.mxu0 0.0
    %1466 = vmatpush1.xpose.msra.mxu0 0.0
    %1467 = vmatprep.subr.mxu0 0.0
    %1468 = vmatpush1.xpose.msra.mxu0 0.0
    %1469 = vmatprep.subr.mxu0 0.0
    %1470 = vmatpush1.xpose.msra.mxu0 0.0
    %1471 = vmatprep.subr.mxu0 0.0
    %1472 = vmatpush1.xpose.msra.mxu0 0.0
    %1473 = vmatprep.subr.mxu0 0.0
    %1474 = vmatpush1.xpose.msra.mxu0 0.0
    %1475 = vmatprep.subr.mxu0 0.0
    %1476 = vmatpush1.xpose.msra.mxu0 0.0
    %1477 = vmatprep.subr.mxu0 0.0
    %1478 = vmatpush1.xpose.msra.mxu0 0.0
    %1479 = vmatprep.subr.mxu0 0.0
    %1480 = vmatpush1.xpose.msra.mxu0 0.0
    %1481 = vmatprep.subr.mxu0 0.0
    %1482 = vmatpush1.xpose.msra.mxu0 0.0
    %1483 = vmatprep.subr.mxu0 0.0
    %1484 = vmatpush1.xpose.msra.mxu0 0.0
    %1485 = vmatprep.subr.mxu0 0.0
    %1486 = vmatpush1.xpose.msra.mxu0 0.0
    %1487 = vmatprep.subr.mxu0 0.0
    %1488 = vmatpush1.xpose.msra.mxu0 0.0
    %1489 = vmatprep.subr.mxu0 0.0
    %1490 = vmatpush1.xpose.msra.mxu0 0.0
    %1491 = vmatprep.subr.mxu0 0.0
    %1492 = vmatpush1.xpose.msra.mxu0 0.0
    %1493 = vmatprep.subr.mxu0 0.0
    %1494 = vmatpush1.xpose.msra.mxu0 0.0
    %1495 = vmatprep.subr.mxu0 0.0
    %1496 = vmatpush1.xpose.msra.mxu0 0.0
    %1497 = vmatprep.subr.mxu0 0.0
    %1498 = vmatpush1.xpose.msra.mxu0 0.0
    %1499 = vmatprep.subr.mxu0 0.0
    %1500 = vmatpush1.xpose.msra.mxu0 0.0
    %1501 = vmatprep.mubr.f32.mxu0 0.0
    %1502 = vmatmul.mubr.f32.gmra.mrb[0].mxu0 %v1433
    %v1503 = vpop.f32.mrb[0].mxu0
    %v1504 = vadd.f32 0.0, %v1503
    %v1505 = vpop.f32.mrb[0].mxu0
    %1506 = vdwg.mxu0
    %v1507 = vmul.f32 %v1504, 0.25
    %v1509 = vlaneseq
    %v1510 = vshrl.u32 %v1509, 7
    %v1511 = vsub.s32 0, %v1510
    %v1512 = vrot.slane %v1429, %v1511
    %v1514 = vadd.f32 %v1507, %v1512
    %v1515 = vsel %vm333, %v1514, -inf
    %1516 = vmax.xlane.f32.xlu0 %v1515
    %v1517 = vpop.xlane.xlu0 %1516
    %v1518 = vsub.f32 %v1514, %v1517
    %v1519 = vmul.f32 %v1518, 1.442695
    %v1520 = vpow.pop %v1519
    %v1521 = vsel %vm333, %v1520, 0.0
    %1522 = vadd.xlane.f32.xlu0 %v1521
    %v1523 = vpop.xlane.xlu0 %1522
    %v1524 = vrcp.pop %v1523
    %v1525 = vmul.f32 %v1520, %v1524
    %1526 = vrot.lane.b32.xlu0 %v1421, 64
    %v1527 = vpop.permute.xlu0 %1526
    %v1530 = vsel %vm333, %v1525, 0
    %1532 = vmatprep.subr.mxu0 0.0
    %1533 = vmatpush1.msra.mxu0 %v1527
    %1534 = vmatprep.subr.mxu0 0.0
    %1535 = vmatpush1.msra.mxu0 0.0
    %1536 = vmatprep.subr.mxu0 0.0
    %1537 = vmatpush1.msra.mxu0 0.0
    %1538 = vmatprep.subr.mxu0 0.0
    %1539 = vmatpush1.msra.mxu0 0.0
    %1540 = vmatprep.subr.mxu0 0.0
    %1541 = vmatpush1.msra.mxu0 0.0
    %1542 = vmatprep.subr.mxu0 0.0
    %1543 = vmatpush1.msra.mxu0 0.0
    %1544 = vmatprep.subr.mxu0 0.0
    %1545 = vmatpush1.msra.mxu0 0.0
    %1546 = vmatprep.subr.mxu0 0.0
    %1547 = vmatpush1.msra.mxu0 0.0
    %1548 = vmatprep.subr.mxu0 0.0
    %1549 = vmatpush1.msra.mxu0 0.0
    %1550 = vmatprep.subr.mxu0 0.0
    %1551 = vmatpush1.msra.mxu0 0.0
    %1552 = vmatprep.subr.mxu0 0.0
    %1553 = vmatpush1.msra.mxu0 0.0
    %1554 = vmatprep.subr.mxu0 0.0
    %1555 = vmatpush1.msra.mxu0 0.0
    %1556 = vmatprep.subr.mxu0 0.0
    %1557 = vmatpush1.msra.mxu0 0.0
    %1558 = vmatprep.subr.mxu0 0.0
    %1559 = vmatpush1.msra.mxu0 0.0
    %1560 = vmatprep.subr.mxu0 0.0
    %1561 = vmatpush1.msra.mxu0 0.0
    %1562 = vmatprep.subr.mxu0 0.0
    %1563 = vmatpush1.msra.mxu0 0.0
    %1564 = vmatprep.subr.mxu0 0.0
    %1565 = vmatpush1.msra.mxu0 0.0
    %1566 = vmatprep.subr.mxu0 0.0
    %1567 = vmatpush1.msra.mxu0 0.0
    %1568 = vmatprep.subr.mxu0 0.0
    %1569 = vmatpush1.msra.mxu0 0.0
    %1570 = vmatprep.subr.mxu0 0.0
    %1571 = vmatpush1.msra.mxu0 0.0
    %1572 = vmatprep.subr.mxu0 0.0
    %1573 = vmatpush1.msra.mxu0 0.0
    %1574 = vmatprep.subr.mxu0 0.0
    %1575 = vmatpush1.msra.mxu0 0.0
    %1576 = vmatprep.subr.mxu0 0.0
    %1577 = vmatpush1.msra.mxu0 0.0
    %1578 = vmatprep.subr.mxu0 0.0
    %1579 = vmatpush1.msra.mxu0 0.0
    %1580 = vmatprep.subr.mxu0 0.0
    %1581 = vmatpush1.msra.mxu0 0.0
    %1582 = vmatprep.subr.mxu0 0.0
    %1583 = vmatpush1.msra.mxu0 0.0
    %1584 = vmatprep.subr.mxu0 0.0
    %1585 = vmatpush1.msra.mxu0 0.0
    %1586 = vmatprep.subr.mxu0 0.0
    %1587 = vmatpush1.msra.mxu0 0.0
    %1588 = vmatprep.subr.mxu0 0.0
    %1589 = vmatpush1.msra.mxu0 0.0
    %1590 = vmatprep.subr.mxu0 0.0
    %1591 = vmatpush1.msra.mxu0 0.0
    %1592 = vmatprep.subr.mxu0 0.0
    %1593 = vmatpush1.msra.mxu0 0.0
    %1594 = vmatprep.subr.mxu0 0.0
    %1595 = vmatpush1.msra.mxu0 0.0
    %1596 = vmatprep.mubr.f32.mxu0 0.0
    %1597 = vmatmul.mubr.f32.gmra.mrb[0].mxu0 %v1530
    %v1598 = vpop.f32.mrb[0].mxu0
    %v1599 = vadd.f32 0.0, %v1598
    %v1600 = vpop.f32.mrb[0].mxu0
    %1601 = vdwg.mxu0
    %1602 = vst.msk [vmem:[#allocation2] sm:$0xff] %vm250, %v1599
    %1603 = vrot.lane.b32.xlu0 %v1421, 112
    %v1604 = vpop.permute.xlu0 %1603
    %1605 = vrot.lane.b32.xlu0 %v1421, 80
    %v1606 = vpop.permute.xlu0 %1605
    %v1607 = vsel %vm250, %v1604, 0
    %v1609 = vsel %vm250, %v1606, 0
    %1611 = vmatprep.subr.mxu0 0.0
    %1612 = vmatpush1.xpose.msra.mxu0 %v1609
    %1613 = vmatprep.subr.mxu0 0.0
    %1614 = vmatpush1.xpose.msra.mxu0 0.0
    %1615 = vmatprep.subr.mxu0 0.0
    %1616 = vmatpush1.xpose.msra.mxu0 0.0
    %1617 = vmatprep.subr.mxu0 0.0
    %1618 = vmatpush1.xpose.msra.mxu0 0.0
    %1619 = vmatprep.subr.mxu0 0.0
    %1620 = vmatpush1.xpose.msra.mxu0 0.0
    %1621 = vmatprep.subr.mxu0 0.0
    %1622 = vmatpush1.xpose.msra.mxu0 0.0
    %1623 = vmatprep.subr.mxu0 0.0
    %1624 = vmatpush1.xpose.msra.mxu0 0.0
    %1625 = vmatprep.subr.mxu0 0.0
    %1626 = vmatpush1.xpose.msra.mxu0 0.0
    %1627 = vmatprep.subr.mxu0 0.0
    %1628 = vmatpush1.xpose.msra.mxu0 0.0
    %1629 = vmatprep.subr.mxu0 0.0
    %1630 = vmatpush1.xpose.msra.mxu0 0.0
    %1631 = vmatprep.subr.mxu0 0.0
    %1632 = vmatpush1.xpose.msra.mxu0 0.0
    %1633 = vmatprep.subr.mxu0 0.0
    %1634 = vmatpush1.xpose.msra.mxu0 0.0
    %1635 = vmatprep.subr.mxu0 0.0
    %1636 = vmatpush1.xpose.msra.mxu0 0.0
    %1637 = vmatprep.subr.mxu0 0.0
    %1638 = vmatpush1.xpose.msra.mxu0 0.0
    %1639 = vmatprep.subr.mxu0 0.0
    %1640 = vmatpush1.xpose.msra.mxu0 0.0
    %1641 = vmatprep.subr.mxu0 0.0
    %1642 = vmatpush1.xpose.msra.mxu0 0.0
    %1643 = vmatprep.subr.mxu0 0.0
    %1644 = vmatpush1.xpose.msra.mxu0 0.0
    %1645 = vmatprep.subr.mxu0 0.0
    %1646 = vmatpush1.xpose.msra.mxu0 0.0
    %1647 = vmatprep.subr.mxu0 0.0
    %1648 = vmatpush1.xpose.msra.mxu0 0.0
    %1649 = vmatprep.subr.mxu0 0.0
    %1650 = vmatpush1.xpose.msra.mxu0 0.0
    %1651 = vmatprep.subr.mxu0 0.0
    %1652 = vmatpush1.xpose.msra.mxu0 0.0
    %1653 = vmatprep.subr.mxu0 0.0
    %1654 = vmatpush1.xpose.msra.mxu0 0.0
    %1655 = vmatprep.subr.mxu0 0.0
    %1656 = vmatpush1.xpose.msra.mxu0 0.0
    %1657 = vmatprep.subr.mxu0 0.0
    %1658 = vmatpush1.xpose.msra.mxu0 0.0
    %1659 = vmatprep.subr.mxu0 0.0
    %1660 = vmatpush1.xpose.msra.mxu0 0.0
    %1661 = vmatprep.subr.mxu0 0.0
    %1662 = vmatpush1.xpose.msra.mxu0 0.0
    %1663 = vmatprep.subr.mxu0 0.0
    %1664 = vmatpush1.xpose.msra.mxu0 0.0
    %1665 = vmatprep.subr.mxu0 0.0
    %1666 = vmatpush1.xpose.msra.mxu0 0.0
    %1667 = vmatprep.subr.mxu0 0.0
    %1668 = vmatpush1.xpose.msra.mxu0 0.0
    %1669 = vmatprep.subr.mxu0 0.0
    %1670 = vmatpush1.xpose.msra.mxu0 0.0
    %1671 = vmatprep.subr.mxu0 0.0
    %1672 = vmatpush1.xpose.msra.mxu0 0.0
    %1673 = vmatprep.subr.mxu0 0.0
    %1674 = vmatpush1.xpose.msra.mxu0 0.0
    %1675 = vmatprep.mubr.f32.mxu0 0.0
    %1676 = vmatmul.mubr.f32.gmra.mrb[0].mxu0 %v1607
    %v1677 = vpop.f32.mrb[0].mxu0
    %v1678 = vadd.f32 0.0, %v1677
    %v1679 = vpop.f32.mrb[0].mxu0
    %1680 = vdwg.mxu0
    %v1681 = vmul.f32 %v1678, 0.25
    %v1682 = vadd.f32 %v1681, %v1512
    %v1683 = vsel %vm333, %v1682, -inf
    %1684 = vmax.xlane.f32.xlu0 %v1683
    %v1685 = vpop.xlane.xlu0 %1684
    %v1686 = vsub.f32 %v1682, %v1685
    %v1687 = vmul.f32 %v1686, 1.442695
    %v1688 = vpow.pop %v1687
    %v1689 = vsel %vm333, %v1688, 0.0
    %1690 = vadd.xlane.f32.xlu0 %v1689
    %v1691 = vpop.xlane.xlu0 %1690
    %v1692 = vrcp.pop %v1691
    %v1693 = vmul.f32 %v1688, %v1692
    %1694 = vrot.lane.b32.xlu0 %v1421, 48
    %v1695 = vpop.permute.xlu0 %1694
    %v1698 = vsel %vm333, %v1693, 0
    %1700 = vmatprep.subr.mxu0 0.0
    %1701 = vmatpush1.msra.mxu0 %v1695
    %1702 = vmatprep.subr.mxu0 0.0
    %1703 = vmatpush1.msra.mxu0 0.0
    %1704 = vmatprep.subr.mxu0 0.0
    %1705 = vmatpush1.msra.mxu0 0.0
    %1706 = vmatprep.subr.mxu0 0.0
    %1707 = vmatpush1.msra.mxu0 0.0
    %1708 = vmatprep.subr.mxu0 0.0
    %1709 = vmatpush1.msra.mxu0 0.0
    %1710 = vmatprep.subr.mxu0 0.0
    %1711 = vmatpush1.msra.mxu0 0.0
    %1712 = vmatprep.subr.mxu0 0.0
    %1713 = vmatpush1.msra.mxu0 0.0
    %1714 = vmatprep.subr.mxu0 0.0
    %1715 = vmatpush1.msra.mxu0 0.0
    %1716 = vmatprep.subr.mxu0 0.0
    %1717 = vmatpush1.msra.mxu0 0.0
    %1718 = vmatprep.subr.mxu0 0.0
    %1719 = vmatpush1.msra.mxu0 0.0
    %1720 = vmatprep.subr.mxu0 0.0
    %1721 = vmatpush1.msra.mxu0 0.0
    %1722 = vmatprep.subr.mxu0 0.0
    %1723 = vmatpush1.msra.mxu0 0.0
    %1724 = vmatprep.subr.mxu0 0.0
    %1725 = vmatpush1.msra.mxu0 0.0
    %1726 = vmatprep.subr.mxu0 0.0
    %1727 = vmatpush1.msra.mxu0 0.0
    %1728 = vmatprep.subr.mxu0 0.0
    %1729 = vmatpush1.msra.mxu0 0.0
    %1730 = vmatprep.subr.mxu0 0.0
    %1731 = vmatpush1.msra.mxu0 0.0
    %1732 = vmatprep.subr.mxu0 0.0
    %1733 = vmatpush1.msra.mxu0 0.0
    %1734 = vmatprep.subr.mxu0 0.0
    %1735 = vmatpush1.msra.mxu0 0.0
    %1736 = vmatprep.subr.mxu0 0.0
    %1737 = vmatpush1.msra.mxu0 0.0
    %1738 = vmatprep.subr.mxu0 0.0
    %1739 = vmatpush1.msra.mxu0 0.0
    %1740 = vmatprep.subr.mxu0 0.0
    %1741 = vmatpush1.msra.mxu0 0.0
    %1742 = vmatprep.subr.mxu0 0.0
    %1743 = vmatpush1.msra.mxu0 0.0
    %1744 = vmatprep.subr.mxu0 0.0
    %1745 = vmatpush1.msra.mxu0 0.0
    %1746 = vmatprep.subr.mxu0 0.0
    %1747 = vmatpush1.msra.mxu0 0.0
    %1748 = vmatprep.subr.mxu0 0.0
    %1749 = vmatpush1.msra.mxu0 0.0
    %1750 = vmatprep.subr.mxu0 0.0
    %1751 = vmatpush1.msra.mxu0 0.0
    %1752 = vmatprep.subr.mxu0 0.0
    %1753 = vmatpush1.msra.mxu0 0.0
    %1754 = vmatprep.subr.mxu0 0.0
    %1755 = vmatpush1.msra.mxu0 0.0
    %1756 = vmatprep.subr.mxu0 0.0
    %1757 = vmatpush1.msra.mxu0 0.0
    %1758 = vmatprep.subr.mxu0 0.0
    %1759 = vmatpush1.msra.mxu0 0.0
    %1760 = vmatprep.subr.mxu0 0.0
    %1761 = vmatpush1.msra.mxu0 0.0
    %1762 = vmatprep.subr.mxu0 0.0
    %1763 = vmatpush1.msra.mxu0 0.0
    %1764 = vmatprep.mubr.f32.mxu0 0.0
    %1765 = vmatmul.mubr.f32.gmra.mrb[0].mxu0 %v1698
    %v1766 = vpop.f32.mrb[0].mxu0
    %v1767 = vadd.f32 0.0, %v1766
    %v1768 = vpop.f32.mrb[0].mxu0
    %1769 = vdwg.mxu0
    %1771 = vrot.lane.b32.xlu0 %v1767, 16
    %v1772 = vpop.permute.xlu0 %1771
    %1774 = vst.msk [vmem:[#allocation2] sm:$0xff] %vm593, %v1772
    %v1775 = vld [vmem:[%s595] sm:$0x1]
    %1777 = vrot.lane.b32.xlu0 %v1426, 96
    %v1778 = vpop.permute.xlu0 %1777
    %v1779 = vsel %vm250, %v1426, 0
    %v1781 = vsel %vm250, %v1778, 0
    %1783 = vmatprep.subr.mxu0 0.0
    %1784 = vmatpush1.xpose.msra.mxu0 %v1781
    %1785 = vmatprep.subr.mxu0 0.0
    %1786 = vmatpush1.xpose.msra.mxu0 0.0
    %1787 = vmatprep.subr.mxu0 0.0
    %1788 = vmatpush1.xpose.msra.mxu0 0.0
    %1789 = vmatprep.subr.mxu0 0.0
    %1790 = vmatpush1.xpose.msra.mxu0 0.0
    %1791 = vmatprep.subr.mxu0 0.0
    %1792 = vmatpush1.xpose.msra.mxu0 0.0
    %1793 = vmatprep.subr.mxu0 0.0
    %1794 = vmatpush1.xpose.msra.mxu0 0.0
    %1795 = vmatprep.subr.mxu0 0.0
    %1796 = vmatpush1.xpose.msra.mxu0 0.0
    %1797 = vmatprep.subr.mxu0 0.0
    %1798 = vmatpush1.xpose.msra.mxu0 0.0
    %1799 = vmatprep.subr.mxu0 0.0
    %1800 = vmatpush1.xpose.msra.mxu0 0.0
    %1801 = vmatprep.subr.mxu0 0.0
    %1802 = vmatpush1.xpose.msra.mxu0 0.0
    %1803 = vmatprep.subr.mxu0 0.0
    %1804 = vmatpush1.xpose.msra.mxu0 0.0
    %1805 = vmatprep.subr.mxu0 0.0
    %1806 = vmatpush1.xpose.msra.mxu0 0.0
    %1807 = vmatprep.subr.mxu0 0.0
    %1808 = vmatpush1.xpose.msra.mxu0 0.0
    %1809 = vmatprep.subr.mxu0 0.0
    %1810 = vmatpush1.xpose.msra.mxu0 0.0
    %1811 = vmatprep.subr.mxu0 0.0
    %1812 = vmatpush1.xpose.msra.mxu0 0.0
    %1813 = vmatprep.subr.mxu0 0.0
    %1814 = vmatpush1.xpose.msra.mxu0 0.0
    %1815 = vmatprep.subr.mxu0 0.0
    %1816 = vmatpush1.xpose.msra.mxu0 0.0
    %1817 = vmatprep.subr.mxu0 0.0
    %1818 = vmatpush1.xpose.msra.mxu0 0.0
    %1819 = vmatprep.subr.mxu0 0.0
    %1820 = vmatpush1.xpose.msra.mxu0 0.0
    %1821 = vmatprep.subr.mxu0 0.0
    %1822 = vmatpush1.xpose.msra.mxu0 0.0
    %1823 = vmatprep.subr.mxu0 0.0
    %1824 = vmatpush1.xpose.msra.mxu0 0.0
    %1825 = vmatprep.subr.mxu0 0.0
    %1826 = vmatpush1.xpose.msra.mxu0 0.0
    %1827 = vmatprep.subr.mxu0 0.0
    %1828 = vmatpush1.xpose.msra.mxu0 0.0
    %1829 = vmatprep.subr.mxu0 0.0
    %1830 = vmatpush1.xpose.msra.mxu0 0.0
    %1831 = vmatprep.subr.mxu0 0.0
    %1832 = vmatpush1.xpose.msra.mxu0 0.0
    %1833 = vmatprep.subr.mxu0 0.0
    %1834 = vmatpush1.xpose.msra.mxu0 0.0
    %1835 = vmatprep.subr.mxu0 0.0
    %1836 = vmatpush1.xpose.msra.mxu0 0.0
    %1837 = vmatprep.subr.mxu0 0.0
    %1838 = vmatpush1.xpose.msra.mxu0 0.0
    %1839 = vmatprep.subr.mxu0 0.0
    %1840 = vmatpush1.xpose.msra.mxu0 0.0
    %1841 = vmatprep.subr.mxu0 0.0
    %1842 = vmatpush1.xpose.msra.mxu0 0.0
    %1843 = vmatprep.subr.mxu0 0.0
    %1844 = vmatpush1.xpose.msra.mxu0 0.0
    %1845 = vmatprep.subr.mxu0 0.0
    %1846 = vmatpush1.xpose.msra.mxu0 0.0
    %1847 = vmatprep.mubr.f32.mxu0 0.0
    %1848 = vmatmul.mubr.f32.gmra.mrb[0].mxu0 %v1779
    %v1849 = vpop.f32.mrb[0].mxu0
    %v1850 = vadd.f32 0.0, %v1849
    %v1851 = vpop.f32.mrb[0].mxu0
    %1852 = vdwg.mxu0
    %v1853 = vmul.f32 %v1850, 0.25
    %v1855 = vlaneseq
    %v1856 = vshrl.u32 %v1855, 7
    %v1857 = vsub.s32 0, %v1856
    %v1858 = vrot.slane %v1775, %v1857
    %v1860 = vadd.f32 %v1853, %v1858
    %v1861 = vsel %vm333, %v1860, -inf
    %1862 = vmax.xlane.f32.xlu0 %v1861
    %v1863 = vpop.xlane.xlu0 %1862
    %v1864 = vsub.f32 %v1860, %v1863
    %v1865 = vmul.f32 %v1864, 1.442695
    %v1866 = vpow.pop %v1865
    %v1867 = vsel %vm333, %v1866, 0.0
    %1868 = vadd.xlane.f32.xlu0 %v1867
    %v1869 = vpop.xlane.xlu0 %1868
    %v1870 = vrcp.pop %v1869
    %v1871 = vmul.f32 %v1866, %v1870
    %1872 = vrot.lane.b32.xlu0 %v1426, 64
    %v1873 = vpop.permute.xlu0 %1872
    %v1876 = vsel %vm333, %v1871, 0
    %1878 = vmatprep.subr.mxu0 0.0
    %1879 = vmatpush1.msra.mxu0 %v1873
    %1880 = vmatprep.subr.mxu0 0.0
    %1881 = vmatpush1.msra.mxu0 0.0
    %1882 = vmatprep.subr.mxu0 0.0
    %1883 = vmatpush1.msra.mxu0 0.0
    %1884 = vmatprep.subr.mxu0 0.0
    %1885 = vmatpush1.msra.mxu0 0.0
    %1886 = vmatprep.subr.mxu0 0.0
    %1887 = vmatpush1.msra.mxu0 0.0
    %1888 = vmatprep.subr.mxu0 0.0
    %1889 = vmatpush1.msra.mxu0 0.0
    %1890 = vmatprep.subr.mxu0 0.0
    %1891 = vmatpush1.msra.mxu0 0.0
    %1892 = vmatprep.subr.mxu0 0.0
    %1893 = vmatpush1.msra.mxu0 0.0
    %1894 = vmatprep.subr.mxu0 0.0
    %1895 = vmatpush1.msra.mxu0 0.0
    %1896 = vmatprep.subr.mxu0 0.0
    %1897 = vmatpush1.msra.mxu0 0.0
    %1898 = vmatprep.subr.mxu0 0.0
    %1899 = vmatpush1.msra.mxu0 0.0
    %1900 = vmatprep.subr.mxu0 0.0
    %1901 = vmatpush1.msra.mxu0 0.0
    %1902 = vmatprep.subr.mxu0 0.0
    %1903 = vmatpush1.msra.mxu0 0.0
    %1904 = vmatprep.subr.mxu0 0.0
    %1905 = vmatpush1.msra.mxu0 0.0
    %1906 = vmatprep.subr.mxu0 0.0
    %1907 = vmatpush1.msra.mxu0 0.0
    %1908 = vmatprep.subr.mxu0 0.0
    %1909 = vmatpush1.msra.mxu0 0.0
    %1910 = vmatprep.subr.mxu0 0.0
    %1911 = vmatpush1.msra.mxu0 0.0
    %1912 = vmatprep.subr.mxu0 0.0
    %1913 = vmatpush1.msra.mxu0 0.0
    %1914 = vmatprep.subr.mxu0 0.0
    %1915 = vmatpush1.msra.mxu0 0.0
    %1916 = vmatprep.subr.mxu0 0.0
    %1917 = vmatpush1.msra.mxu0 0.0
    %1918 = vmatprep.subr.mxu0 0.0
    %1919 = vmatpush1.msra.mxu0 0.0
    %1920 = vmatprep.subr.mxu0 0.0
    %1921 = vmatpush1.msra.mxu0 0.0
    %1922 = vmatprep.subr.mxu0 0.0
    %1923 = vmatpush1.msra.mxu0 0.0
    %1924 = vmatprep.subr.mxu0 0.0
    %1925 = vmatpush1.msra.mxu0 0.0
    %1926 = vmatprep.subr.mxu0 0.0
    %1927 = vmatpush1.msra.mxu0 0.0
    %1928 = vmatprep.subr.mxu0 0.0
    %1929 = vmatpush1.msra.mxu0 0.0
    %1930 = vmatprep.subr.mxu0 0.0
    %1931 = vmatpush1.msra.mxu0 0.0
    %1932 = vmatprep.subr.mxu0 0.0
    %1933 = vmatpush1.msra.mxu0 0.0
    %1934 = vmatprep.subr.mxu0 0.0
    %1935 = vmatpush1.msra.mxu0 0.0
    %1936 = vmatprep.subr.mxu0 0.0
    %1937 = vmatpush1.msra.mxu0 0.0
    %1938 = vmatprep.subr.mxu0 0.0
    %1939 = vmatpush1.msra.mxu0 0.0
    %1940 = vmatprep.subr.mxu0 0.0
    %1941 = vmatpush1.msra.mxu0 0.0
    %1942 = vmatprep.mubr.f32.mxu0 0.0
    %1943 = vmatmul.mubr.f32.gmra.mrb[0].mxu0 %v1876
    %v1944 = vpop.f32.mrb[0].mxu0
    %v1945 = vadd.f32 0.0, %v1944
    %v1946 = vpop.f32.mrb[0].mxu0
    %1947 = vdwg.mxu0
    %1948 = vst.msk [vmem:[#allocation2 + $0x8] sm:$0xff] %vm250, %v1945
    %1949 = vrot.lane.b32.xlu0 %v1426, 112
    %v1950 = vpop.permute.xlu0 %1949
    %1951 = vrot.lane.b32.xlu0 %v1426, 80
    %v1952 = vpop.permute.xlu0 %1951
    %v1953 = vsel %vm250, %v1950, 0
    %v1955 = vsel %vm250, %v1952, 0
    %1957 = vmatprep.subr.mxu0 0.0
    %1958 = vmatpush1.xpose.msra.mxu0 %v1955
    %1959 = vmatprep.subr.mxu0 0.0
    %1960 = vmatpush1.xpose.msra.mxu0 0.0
    %1961 = vmatprep.subr.mxu0 0.0
    %1962 = vmatpush1.xpose.msra.mxu0 0.0
    %1963 = vmatprep.subr.mxu0 0.0
    %1964 = vmatpush1.xpose.msra.mxu0 0.0
    %1965 = vmatprep.subr.mxu0 0.0
    %1966 = vmatpush1.xpose.msra.mxu0 0.0
    %1967 = vmatprep.subr.mxu0 0.0
    %1968 = vmatpush1.xpose.msra.mxu0 0.0
    %1969 = vmatprep.subr.mxu0 0.0
    %1970 = vmatpush1.xpose.msra.mxu0 0.0
    %1971 = vmatprep.subr.mxu0 0.0
    %1972 = vmatpush1.xpose.msra.mxu0 0.0
    %1973 = vmatprep.subr.mxu0 0.0
    %1974 = vmatpush1.xpose.msra.mxu0 0.0
    %1975 = vmatprep.subr.mxu0 0.0
    %1976 = vmatpush1.xpose.msra.mxu0 0.0
    %1977 = vmatprep.subr.mxu0 0.0
    %1978 = vmatpush1.xpose.msra.mxu0 0.0
    %1979 = vmatprep.subr.mxu0 0.0
    %1980 = vmatpush1.xpose.msra.mxu0 0.0
    %1981 = vmatprep.subr.mxu0 0.0
    %1982 = vmatpush1.xpose.msra.mxu0 0.0
    %1983 = vmatprep.subr.mxu0 0.0
    %1984 = vmatpush1.xpose.msra.mxu0 0.0
    %1985 = vmatprep.subr.mxu0 0.0
    %1986 = vmatpush1.xpose.msra.mxu0 0.0
    %1987 = vmatprep.subr.mxu0 0.0
    %1988 = vmatpush1.xpose.msra.mxu0 0.0
    %1989 = vmatprep.subr.mxu0 0.0
    %1990 = vmatpush1.xpose.msra.mxu0 0.0
    %1991 = vmatprep.subr.mxu0 0.0
    %1992 = vmatpush1.xpose.msra.mxu0 0.0
    %1993 = vmatprep.subr.mxu0 0.0
    %1994 = vmatpush1.xpose.msra.mxu0 0.0
    %1995 = vmatprep.subr.mxu0 0.0
    %1996 = vmatpush1.xpose.msra.mxu0 0.0
    %1997 = vmatprep.subr.mxu0 0.0
    %1998 = vmatpush1.xpose.msra.mxu0 0.0
    %1999 = vmatprep.subr.mxu0 0.0
    %2000 = vmatpush1.xpose.msra.mxu0 0.0
    %2001 = vmatprep.subr.mxu0 0.0
    %2002 = vmatpush1.xpose.msra.mxu0 0.0
    %2003 = vmatprep.subr.mxu0 0.0
    %2004 = vmatpush1.xpose.msra.mxu0 0.0
    %2005 = vmatprep.subr.mxu0 0.0
    %2006 = vmatpush1.xpose.msra.mxu0 0.0
    %2007 = vmatprep.subr.mxu0 0.0
    %2008 = vmatpush1.xpose.msra.mxu0 0.0
    %2009 = vmatprep.subr.mxu0 0.0
    %2010 = vmatpush1.xpose.msra.mxu0 0.0
    %2011 = vmatprep.subr.mxu0 0.0
    %2012 = vmatpush1.xpose.msra.mxu0 0.0
    %2013 = vmatprep.subr.mxu0 0.0
    %2014 = vmatpush1.xpose.msra.mxu0 0.0
    %2015 = vmatprep.subr.mxu0 0.0
    %2016 = vmatpush1.xpose.msra.mxu0 0.0
    %2017 = vmatprep.subr.mxu0 0.0
    %2018 = vmatpush1.xpose.msra.mxu0 0.0
    %2019 = vmatprep.subr.mxu0 0.0
    %2020 = vmatpush1.xpose.msra.mxu0 0.0
    %2021 = vmatprep.mubr.f32.mxu0 0.0
    %2022 = vmatmul.mubr.f32.gmra.mrb[0].mxu0 %v1953
    %v2023 = vpop.f32.mrb[0].mxu0
    %v2024 = vadd.f32 0.0, %v2023
    %v2025 = vpop.f32.mrb[0].mxu0
    %2026 = vdwg.mxu0
    %v2027 = vmul.f32 %v2024, 0.25
    %v2028 = vadd.f32 %v2027, %v1858
    %v2029 = vsel %vm333, %v2028, -inf
    %2030 = vmax.xlane.f32.xlu0 %v2029
    %v2031 = vpop.xlane.xlu0 %2030
    %v2032 = vsub.f32 %v2028, %v2031
    %v2033 = vmul.f32 %v2032, 1.442695
    %v2034 = vpow.pop %v2033
    %v2035 = vsel %vm333, %v2034, 0.0
    %2036 = vadd.xlane.f32.xlu0 %v2035
    %v2037 = vpop.xlane.xlu0 %2036
    %v2038 = vrcp.pop %v2037
    %v2039 = vmul.f32 %v2034, %v2038
    %2040 = vrot.lane.b32.xlu0 %v1426, 48
    %v2041 = vpop.permute.xlu0 %2040
    %v2044 = vsel %vm333, %v2039, 0
    %2046 = vmatprep.subr.mxu0 0.0
    %2047 = vmatpush1.msra.mxu0 %v2041
    %2048 = vmatprep.subr.mxu0 0.0
    %2049 = vmatpush1.msra.mxu0 0.0
    %2050 = vmatprep.subr.mxu0 0.0
    %2051 = vmatpush1.msra.mxu0 0.0
    %2052 = vmatprep.subr.mxu0 0.0
    %2053 = vmatpush1.msra.mxu0 0.0
    %2054 = vmatprep.subr.mxu0 0.0
    %2055 = vmatpush1.msra.mxu0 0.0
    %2056 = vmatprep.subr.mxu0 0.0
    %2057 = vmatpush1.msra.mxu0 0.0
    %2058 = vmatprep.subr.mxu0 0.0
    %2059 = vmatpush1.msra.mxu0 0.0
    %2060 = vmatprep.subr.mxu0 0.0
    %2061 = vmatpush1.msra.mxu0 0.0
    %2062 = vmatprep.subr.mxu0 0.0
    %2063 = vmatpush1.msra.mxu0 0.0
    %2064 = vmatprep.subr.mxu0 0.0
    %2065 = vmatpush1.msra.mxu0 0.0
    %2066 = vmatprep.subr.mxu0 0.0
    %2067 = vmatpush1.msra.mxu0 0.0
    %2068 = vmatprep.subr.mxu0 0.0
    %2069 = vmatpush1.msra.mxu0 0.0
    %2070 = vmatprep.subr.mxu0 0.0
    %2071 = vmatpush1.msra.mxu0 0.0
    %2072 = vmatprep.subr.mxu0 0.0
    %2073 = vmatpush1.msra.mxu0 0.0
    %2074 = vmatprep.subr.mxu0 0.0
    %2075 = vmatpush1.msra.mxu0 0.0
    %2076 = vmatprep.subr.mxu0 0.0
    %2077 = vmatpush1.msra.mxu0 0.0
    %2078 = vmatprep.subr.mxu0 0.0
    %2079 = vmatpush1.msra.mxu0 0.0
    %2080 = vmatprep.subr.mxu0 0.0
    %2081 = vmatpush1.msra.mxu0 0.0
    %2082 = vmatprep.subr.mxu0 0.0
    %2083 = vmatpush1.msra.mxu0 0.0
    %2084 = vmatprep.subr.mxu0 0.0
    %2085 = vmatpush1.msra.mxu0 0.0
    %2086 = vmatprep.subr.mxu0 0.0
    %2087 = vmatpush1.msra.mxu0 0.0
    %2088 = vmatprep.subr.mxu0 0.0
    %2089 = vmatpush1.msra.mxu0 0.0
    %2090 = vmatprep.subr.mxu0 0.0
    %2091 = vmatpush1.msra.mxu0 0.0
    %2092 = vmatprep.subr.mxu0 0.0
    %2093 = vmatpush1.msra.mxu0 0.0
    %2094 = vmatprep.subr.mxu0 0.0
    %2095 = vmatpush1.msra.mxu0 0.0
    %2096 = vmatprep.subr.mxu0 0.0
    %2097 = vmatpush1.msra.mxu0 0.0
    %2098 = vmatprep.subr.mxu0 0.0
    %2099 = vmatpush1.msra.mxu0 0.0
    %2100 = vmatprep.subr.mxu0 0.0
    %2101 = vmatpush1.msra.mxu0 0.0
    %2102 = vmatprep.subr.mxu0 0.0
    %2103 = vmatpush1.msra.mxu0 0.0
    %2104 = vmatprep.subr.mxu0 0.0
    %2105 = vmatpush1.msra.mxu0 0.0
    %2106 = vmatprep.subr.mxu0 0.0
    %2107 = vmatpush1.msra.mxu0 0.0
    %2108 = vmatprep.subr.mxu0 0.0
    %2109 = vmatpush1.msra.mxu0 0.0
    %2110 = vmatprep.mubr.f32.mxu0 0.0
    %2111 = vmatmul.mubr.f32.gmra.mrb[0].mxu0 %v2044
    %v2112 = vpop.f32.mrb[0].mxu0
    %v2113 = vadd.f32 0.0, %v2112
    %v2114 = vpop.f32.mrb[0].mxu0
    %2115 = vdwg.mxu0
    %2117 = vrot.lane.b32.xlu0 %v2113, 16
    %v2118 = vpop.permute.xlu0 %2117
    %2120 = vst.msk [vmem:[#allocation2 + $0x8] sm:$0xff] %vm593, %v2118
    %v2121 = vld [vmem:[#allocation2] sm:$0xff]
    %v2122 = vld [vmem:[#allocation2 + $0x8] sm:$0xff]
    %s2123 = scalar_lea.vmem %s6, 32
    %v2124 = vld [vmem:[%s2123] sm:$0xff]
    %v2125 = vld [vmem:[%s2123 + $0x8] sm:$0xff]
    %v2126 = vld [vmem:[%s2123 + $0x10] sm:$0xff]
    %v2127 = vld [vmem:[%s2123 + $0x18] sm:$0xff]
    %s2128 = scalar_lea.vmem %s7, 1
    %v2129 = vld [vmem:[%s2128] sm:$0x1]
    %v2131 = vlaneseq
    %v2132 = vshrl.u32 %v2131, 7
    %v2133 = vsub.s32 0, %v2132
    %v2134 = vrot.slane %v2129, %v2133
    %v2137 = vsel %vm110, %v2121, 0
    %v2140 = vsel %vm110, %v2122, 0
    %2142 = vmatprep.subr.mxu0 0.0
    %2143 = vmatpush1.msra.mxu0 %v2124
    %2144 = vmatprep.subr.mxu0 0.0
    %2145 = vmatpush1.msra.mxu0 %v2125
    %2146 = vmatprep.subr.mxu0 0.0
    %2147 = vmatpush1.msra.mxu0 %v2126
    %2148 = vmatprep.subr.mxu0 0.0
    %2149 = vmatpush1.msra.mxu0 %v2127
    %2150 = vmatprep.subr.mxu0 0.0
    %2151 = vmatpush1.msra.mxu0 0.0
    %2152 = vmatprep.subr.mxu0 0.0
    %2153 = vmatpush1.msra.mxu0 0.0
    %2154 = vmatprep.subr.mxu0 0.0
    %2155 = vmatpush1.msra.mxu0 0.0
    %2156 = vmatprep.subr.mxu0 0.0
    %2157 = vmatpush1.msra.mxu0 0.0
    %2158 = vmatprep.subr.mxu0 0.0
    %2159 = vmatpush1.msra.mxu0 0.0
    %2160 = vmatprep.subr.mxu0 0.0
    %2161 = vmatpush1.msra.mxu0 0.0
    %2162 = vmatprep.subr.mxu0 0.0
    %2163 = vmatpush1.msra.mxu0 0.0
    %2164 = vmatprep.subr.mxu0 0.0
    %2165 = vmatpush1.msra.mxu0 0.0
    %2166 = vmatprep.subr.mxu0 0.0
    %2167 = vmatpush1.msra.mxu0 0.0
    %2168 = vmatprep.subr.mxu0 0.0
    %2169 = vmatpush1.msra.mxu0 0.0
    %2170 = vmatprep.subr.mxu0 0.0
    %2171 = vmatpush1.msra.mxu0 0.0
    %2172 = vmatprep.subr.mxu0 0.0
    %2173 = vmatpush1.msra.mxu0 0.0
    %2174 = vmatprep.subr.mxu0 0.0
    %2175 = vmatpush1.msra.mxu0 0.0
    %2176 = vmatprep.subr.mxu0 0.0
    %2177 = vmatpush1.msra.mxu0 0.0
    %2178 = vmatprep.subr.mxu0 0.0
    %2179 = vmatpush1.msra.mxu0 0.0
    %2180 = vmatprep.subr.mxu0 0.0
    %2181 = vmatpush1.msra.mxu0 0.0
    %2182 = vmatprep.subr.mxu0 0.0
    %2183 = vmatpush1.msra.mxu0 0.0
    %2184 = vmatprep.subr.mxu0 0.0
    %2185 = vmatpush1.msra.mxu0 0.0
    %2186 = vmatprep.subr.mxu0 0.0
    %2187 = vmatpush1.msra.mxu0 0.0
    %2188 = vmatprep.subr.mxu0 0.0
    %2189 = vmatpush1.msra.mxu0 0.0
    %2190 = vmatprep.subr.mxu0 0.0
    %2191 = vmatpush1.msra.mxu0 0.0
    %2192 = vmatprep.subr.mxu0 0.0
    %2193 = vmatpush1.msra.mxu0 0.0
    %2194 = vmatprep.subr.mxu0 0.0
    %2195 = vmatpush1.msra.mxu0 0.0
    %2196 = vmatprep.subr.mxu0 0.0
    %2197 = vmatpush1.msra.mxu0 0.0
    %2198 = vmatprep.subr.mxu0 0.0
    %2199 = vmatpush1.msra.mxu0 0.0
    %2200 = vmatprep.subr.mxu0 0.0
    %2201 = vmatpush1.msra.mxu0 0.0
    %2202 = vmatprep.subr.mxu0 0.0
    %2203 = vmatpush1.msra.mxu0 0.0
    %2204 = vmatprep.subr.mxu0 0.0
    %2205 = vmatpush1.msra.mxu0 0.0
    %2206 = vmatprep.mubr.f32.mxu0 0.0
    %2207 = vmatmul.mubr.f32.gmra.mrb[0].mxu0 %v2137
    %v2208 = vpop.f32.mrb[0].mxu0
    %v2209 = vadd.f32 %v2134, %v2208
    %v2210 = vpop.f32.mrb[0].mxu0
    %2211 = vmatprep.mubr.f32.mxu0 0.0
    %2212 = vmatmul.mubr.f32.gmra.mrb[0].mxu0 %v2140
    %v2213 = vpop.f32.mrb[0].mxu0
    %v2214 = vadd.f32 %v2134, %v2213
    %v2215 = vpop.f32.mrb[0].mxu0
    %2216 = vdwg.mxu0
    %v2217 = vadd.f32 %v2209, %v1333
    %v2218 = vadd.f32 %v2214, %v1334
    %s2219 = scalar_lea.vmem %s8, 1
    %v2220 = vld [vmem:[%s2219] sm:$0x1]
    %s2221 = scalar_lea.vmem %s9, 1
    %v2222 = vld [vmem:[%s2221] sm:$0x1]
    %v2223 = vsel %vm110, %v2217, 0.0
    %2224 = vadd.xlane.f32.xlu0 %v2223
    %v2225 = vpop.xlane.xlu0 %2224
    %v2226 = vsel %vm110, %v2218, 0.0
    %2227 = vadd.xlane.f32.xlu0 %v2226
    %v2228 = vpop.xlane.xlu0 %2227
    %v2229 = vmul.f32 %v2225, %v117
    %v2230 = vmul.f32 %v2228, %v117
    %v2231 = vsub.f32 %v2217, %v2229
    %v2232 = vsub.f32 %v2218, %v2230
    %v2233 = vmul.f32 %v2231, %v2231
    %v2234 = vmul.f32 %v2232, %v2232
    %v2235 = vsel %vm110, %v2233, 0.0
    %2236 = vadd.xlane.f32.xlu0 %v2235
    %v2237 = vpop.xlane.xlu0 %2236
    %v2238 = vsel %vm110, %v2234, 0.0
    %2239 = vadd.xlane.f32.xlu0 %v2238
    %v2240 = vpop.xlane.xlu0 %2239
    %v2241 = vmul.f32 %v2237, %v117
    %v2242 = vmul.f32 %v2240, %v117
    %v2243 = vadd.f32 %v2241, 1e-12
    %v2244 = vadd.f32 %v2242, 1e-12
    %v2245 = vrsqrt.pop %v2243
    %v2246 = vrsqrt.pop %v2244
    %v2247 = vmul.f32 %v2231, %v2245
    %v2248 = vmul.f32 %v2232, %v2246
    %v2250 = vlaneseq
    %v2251 = vshrl.u32 %v2250, 7
    %v2252 = vsub.s32 0, %v2251
    %v2253 = vrot.slane %v2220, %v2252
    %v2255 = vmul.f32 %v2247, %v2253
    %v2256 = vmul.f32 %v2248, %v2253
    %v2258 = vlaneseq
    %v2259 = vshrl.u32 %v2258, 7
    %v2260 = vsub.s32 0, %v2259
    %v2261 = vrot.slane %v2222, %v2260
    %v2263 = vadd.f32 %v2255, %v2261
    %v2264 = vadd.f32 %v2256, %v2261
    %s2265 = scalar_lea.vmem %s10, 32
    %v2266 = vld [vmem:[%s2265] sm:$0xff]
    %v2267 = vld [vmem:[%s2265 + $0x8] sm:$0xff]
    %v2268 = vld [vmem:[%s2265 + $0x10] sm:$0xff]
    %v2269 = vld [vmem:[%s2265 + $0x18] sm:$0xff]
    %s2270 = scalar_lea.vmem %s11, 1
    %v2271 = vld [vmem:[%s2270] sm:$0x1]
    %v2273 = vlaneseq
    %v2274 = vshrl.u32 %v2273, 7
    %v2275 = vsub.s32 0, %v2274
    %v2276 = vrot.slane %v2271, %v2275
    %v2279 = vsel %vm110, %v2263, 0
    %v2282 = vsel %vm110, %v2264, 0
    %2284 = vmatprep.subr.mxu0 0.0
    %2285 = vmatpush1.msra.mxu0 %v2266
    %2286 = vmatprep.subr.mxu0 0.0
    %2287 = vmatpush1.msra.mxu0 %v2267
    %2288 = vmatprep.subr.mxu0 0.0
    %2289 = vmatpush1.msra.mxu0 %v2268
    %2290 = vmatprep.subr.mxu0 0.0
    %2291 = vmatpush1.msra.mxu0 %v2269
    %2292 = vmatprep.subr.mxu0 0.0
    %2293 = vmatpush1.msra.mxu0 0.0
    %2294 = vmatprep.subr.mxu0 0.0
    %2295 = vmatpush1.msra.mxu0 0.0
    %2296 = vmatprep.subr.mxu0 0.0
    %2297 = vmatpush1.msra.mxu0 0.0
    %2298 = vmatprep.subr.mxu0 0.0
    %2299 = vmatpush1.msra.mxu0 0.0
    %2300 = vmatprep.subr.mxu0 0.0
    %2301 = vmatpush1.msra.mxu0 0.0
    %2302 = vmatprep.subr.mxu0 0.0
    %2303 = vmatpush1.msra.mxu0 0.0
    %2304 = vmatprep.subr.mxu0 0.0
    %2305 = vmatpush1.msra.mxu0 0.0
    %2306 = vmatprep.subr.mxu0 0.0
    %2307 = vmatpush1.msra.mxu0 0.0
    %2308 = vmatprep.subr.mxu0 0.0
    %2309 = vmatpush1.msra.mxu0 0.0
    %2310 = vmatprep.subr.mxu0 0.0
    %2311 = vmatpush1.msra.mxu0 0.0
    %2312 = vmatprep.subr.mxu0 0.0
    %2313 = vmatpush1.msra.mxu0 0.0
    %2314 = vmatprep.subr.mxu0 0.0
    %2315 = vmatpush1.msra.mxu0 0.0
    %2316 = vmatprep.subr.mxu0 0.0
    %2317 = vmatpush1.msra.mxu0 0.0
    %2318 = vmatprep.subr.mxu0 0.0
    %2319 = vmatpush1.msra.mxu0 0.0
    %2320 = vmatprep.subr.mxu0 0.0
    %2321 = vmatpush1.msra.mxu0 0.0
    %2322 = vmatprep.subr.mxu0 0.0
    %2323 = vmatpush1.msra.mxu0 0.0
    %2324 = vmatprep.subr.mxu0 0.0
    %2325 = vmatpush1.msra.mxu0 0.0
    %2326 = vmatprep.subr.mxu0 0.0
    %2327 = vmatpush1.msra.mxu0 0.0
    %2328 = vmatprep.subr.mxu0 0.0
    %2329 = vmatpush1.msra.mxu0 0.0
    %2330 = vmatprep.subr.mxu0 0.0
    %2331 = vmatpush1.msra.mxu0 0.0
    %2332 = vmatprep.subr.mxu0 0.0
    %2333 = vmatpush1.msra.mxu0 0.0
    %2334 = vmatprep.subr.mxu0 0.0
    %2335 = vmatpush1.msra.mxu0 0.0
    %2336 = vmatprep.subr.mxu0 0.0
    %2337 = vmatpush1.msra.mxu0 0.0
    %2338 = vmatprep.subr.mxu0 0.0
    %2339 = vmatpush1.msra.mxu0 0.0
    %2340 = vmatprep.subr.mxu0 0.0
    %2341 = vmatpush1.msra.mxu0 0.0
    %2342 = vmatprep.subr.mxu0 0.0
    %2343 = vmatpush1.msra.mxu0 0.0
    %2344 = vmatprep.subr.mxu0 0.0
    %2345 = vmatpush1.msra.mxu0 0.0
    %2346 = vmatprep.subr.mxu0 0.0
    %2347 = vmatpush1.msra.mxu0 0.0
    %2348 = vmatprep.mubr.f32.mxu0 0.0
    %2349 = vmatmul.mubr.f32.gmra.mrb[0].mxu0 %v2279
    %v2350 = vpop.f32.mrb[0].mxu0
    %v2351 = vadd.f32 %v2276, %v2350
    %v2352 = vpop.f32.mrb[0].mxu0
    %2353 = vmatprep.mubr.f32.mxu0 0.0
    %2354 = vmatmul.mubr.f32.gmra.mrb[0].mxu0 %v2282
    %v2355 = vpop.f32.mrb[0].mxu0
    %v2356 = vadd.f32 %v2276, %v2355
    %v2357 = vpop.f32.mrb[0].mxu0
    %2358 = vdwg.mxu0
    %v2359 = vmul.f32 %v2351, %v2351
    %v2360 = vmul.f32 %v2356, %v2356
    %v2361 = vmul.f32 %v2351, %v2359
    %v2362 = vmul.f32 %v2356, %v2360
    %v2363 = vmul.f32 %v2361, 0.044715
    %v2364 = vmul.f32 %v2362, 0.044715
    %v2365 = vadd.f32 %v2351, %v2363
    %v2366 = vadd.f32 %v2356, %v2364
    %v2367 = vmul.f32 %v2365, 0.7978846
    %v2368 = vmul.f32 %v2366, 0.7978846
    %v2369 = vtanh.pop %v2367
    %v2370 = vtanh.pop %v2368
    %v2371 = vadd.f32 %v2369, 1.0
    %v2372 = vadd.f32 %v2370, 1.0
    %v2373 = vmul.f32 %v2371, 0.5
    %v2374 = vmul.f32 %v2372, 0.5
    %v2375 = vmul.f32 %v2351, %v2373
    %v2376 = vmul.f32 %v2356, %v2374
    %s2377 = scalar_lea.vmem %s12, 64
    %v2378 = vld [vmem:[%s2377] sm:$0xff]
    %v2379 = vld [vmem:[%s2377 + $0x8] sm:$0xff]
    %v2380 = vld [vmem:[%s2377 + $0x10] sm:$0xff]
    %v2381 = vld [vmem:[%s2377 + $0x18] sm:$0xff]
    %v2382 = vld [vmem:[%s2377 + $0x20] sm:$0xff]
    %v2383 = vld [vmem:[%s2377 + $0x28] sm:$0xff]
    %v2384 = vld [vmem:[%s2377 + $0x30] sm:$0xff]
    %v2385 = vld [vmem:[%s2377 + $0x38] sm:$0xff]
    %s2386 = scalar_lea.vmem %s13, 1
    %v2387 = vld [vmem:[%s2386] sm:$0x1]
    %v2389 = vlaneseq
    %v2390 = vshrl.u32 %v2389, 7
    %v2391 = vsub.s32 0, %v2390
    %v2392 = vrot.slane %v2387, %v2391
    %v2395 = vsel %vm1207, %v2375, 0
    %v2398 = vsel %vm1207, %v2376, 0
    %2400 = vmatprep.subr.mxu0 0.0
    %2401 = vmatpush1.msra.mxu0 %v2378
    %2402 = vmatprep.subr.mxu0 0.0
    %2403 = vmatpush1.msra.mxu0 %v2379
    %2404 = vmatprep.subr.mxu0 0.0
    %2405 = vmatpush1.msra.mxu0 %v2380
    %2406 = vmatprep.subr.mxu0 0.0
    %2407 = vmatpush1.msra.mxu0 %v2381
    %2408 = vmatprep.subr.mxu0 0.0
    %2409 = vmatpush1.msra.mxu0 %v2382
    %2410 = vmatprep.subr.mxu0 0.0
    %2411 = vmatpush1.msra.mxu0 %v2383
    %2412 = vmatprep.subr.mxu0 0.0
    %2413 = vmatpush1.msra.mxu0 %v2384
    %2414 = vmatprep.subr.mxu0 0.0
    %2415 = vmatpush1.msra.mxu0 %v2385
    %2416 = vmatprep.subr.mxu0 0.0
    %2417 = vmatpush1.msra.mxu0 0.0
    %2418 = vmatprep.subr.mxu0 0.0
    %2419 = vmatpush1.msra.mxu0 0.0
    %2420 = vmatprep.subr.mxu0 0.0
    %2421 = vmatpush1.msra.mxu0 0.0
    %2422 = vmatprep.subr.mxu0 0.0
    %2423 = vmatpush1.msra.mxu0 0.0
    %2424 = vmatprep.subr.mxu0 0.0
    %2425 = vmatpush1.msra.mxu0 0.0
    %2426 = vmatprep.subr.mxu0 0.0
    %2427 = vmatpush1.msra.mxu0 0.0
    %2428 = vmatprep.subr.mxu0 0.0
    %2429 = vmatpush1.msra.mxu0 0.0
    %2430 = vmatprep.subr.mxu0 0.0
    %2431 = vmatpush1.msra.mxu0 0.0
    %2432 = vmatprep.subr.mxu0 0.0
    %2433 = vmatpush1.msra.mxu0 0.0
    %2434 = vmatprep.subr.mxu0 0.0
    %2435 = vmatpush1.msra.mxu0 0.0
    %2436 = vmatprep.subr.mxu0 0.0
    %2437 = vmatpush1.msra.mxu0 0.0
    %2438 = vmatprep.subr.mxu0 0.0
    %2439 = vmatpush1.msra.mxu0 0.0
    %2440 = vmatprep.subr.mxu0 0.0
    %2441 = vmatpush1.msra.mxu0 0.0
    %2442 = vmatprep.subr.mxu0 0.0
    %2443 = vmatpush1.msra.mxu0 0.0
    %2444 = vmatprep.subr.mxu0 0.0
    %2445 = vmatpush1.msra.mxu0 0.0
    %2446 = vmatprep.subr.mxu0 0.0
    %2447 = vmatpush1.msra.mxu0 0.0
    %2448 = vmatprep.subr.mxu0 0.0
    %2449 = vmatpush1.msra.mxu0 0.0
    %2450 = vmatprep.subr.mxu0 0.0
    %2451 = vmatpush1.msra.mxu0 0.0
    %2452 = vmatprep.subr.mxu0 0.0
    %2453 = vmatpush1.msra.mxu0 0.0
    %2454 = vmatprep.subr.mxu0 0.0
    %2455 = vmatpush1.msra.mxu0 0.0
    %2456 = vmatprep.subr.mxu0 0.0
    %2457 = vmatpush1.msra.mxu0 0.0
    %2458 = vmatprep.subr.mxu0 0.0
    %2459 = vmatpush1.msra.mxu0 0.0
    %2460 = vmatprep.subr.mxu0 0.0
    %2461 = vmatpush1.msra.mxu0 0.0
    %2462 = vmatprep.subr.mxu0 0.0
    %2463 = vmatpush1.msra.mxu0 0.0
    %2464 = vmatprep.mubr.f32.mxu0 0.0
    %2465 = vmatmul.mubr.f32.gmra.mrb[0].mxu0 %v2395
    %v2466 = vpop.f32.mrb[0].mxu0
    %v2467 = vadd.f32 %v2392, %v2466
    %v2468 = vpop.f32.mrb[0].mxu0
    %2469 = vmatprep.mubr.f32.mxu0 0.0
    %2470 = vmatmul.mubr.f32.gmra.mrb[0].mxu0 %v2398
    %v2471 = vpop.f32.mrb[0].mxu0
    %v2472 = vadd.f32 %v2392, %v2471
    %v2473 = vpop.f32.mrb[0].mxu0
    %2474 = vdwg.mxu0
    %v2475 = vadd.f32 %v2467, %v2263
    %v2476 = vadd.f32 %v2472, %v2264
    %s2477 = scalar_lea.vmem %s14, 1
    %v2478 = vld [vmem:[%s2477] sm:$0x1]
    %s2479 = scalar_lea.vmem %s15, 1
    %v2480 = vld [vmem:[%s2479] sm:$0x1]
    %v2481 = vsel %vm110, %v2475, 0.0
    %2482 = vadd.xlane.f32.xlu0 %v2481
    %v2483 = vpop.xlane.xlu0 %2482
    %v2484 = vsel %vm110, %v2476, 0.0
    %2485 = vadd.xlane.f32.xlu0 %v2484
    %v2486 = vpop.xlane.xlu0 %2485
    %v2487 = vmul.f32 %v2483, %v117
    %v2488 = vmul.f32 %v2486, %v117
    %v2489 = vsub.f32 %v2475, %v2487
    %v2490 = vsub.f32 %v2476, %v2488
    %v2491 = vmul.f32 %v2489, %v2489
    %v2492 = vmul.f32 %v2490, %v2490
    %v2493 = vsel %vm110, %v2491, 0.0
    %2494 = vadd.xlane.f32.xlu0 %v2493
    %v2495 = vpop.xlane.xlu0 %2494
    %v2496 = vsel %vm110, %v2492, 0.0
    %2497 = vadd.xlane.f32.xlu0 %v2496
    %v2498 = vpop.xlane.xlu0 %2497
    %v2499 = vmul.f32 %v2495, %v117
    %v2500 = vmul.f32 %v2498, %v117
    %v2501 = vadd.f32 %v2499, 1e-12
    %v2502 = vadd.f32 %v2500, 1e-12
    %v2503 = vrsqrt.pop %v2501
    %v2504 = vrsqrt.pop %v2502
    %v2505 = vmul.f32 %v2489, %v2503
    %v2506 = vmul.f32 %v2490, %v2504
    %v2508 = vlaneseq
    %v2509 = vshrl.u32 %v2508, 7
    %v2510 = vsub.s32 0, %v2509
    %v2511 = vrot.slane %v2478, %v2510
    %v2513 = vmul.f32 %v2505, %v2511
    %v2514 = vmul.f32 %v2506, %v2511
    %v2516 = vlaneseq
    %v2517 = vshrl.u32 %v2516, 7
    %v2518 = vsub.s32 0, %v2517
    %v2519 = vrot.slane %v2480, %v2518
    %v2521 = vadd.f32 %v2513, %v2519
    %v2522 = vadd.f32 %v2514, %v2519
    %v2523 = vld [vmem:[#allocation5] sm:$0xff]
    %v2524 = vld [vmem:[#allocation5 + $0x8] sm:$0xff]
    %v2525 = vld [vmem:[#allocation5 + $0x10] sm:$0xff]
    %v2526 = vld [vmem:[#allocation5 + $0x18] sm:$0xff]
    %v2527 = vld [vmem:[%s17] sm:$0x1]
    %v2529 = vlaneseq
    %v2530 = vshrl.u32 %v2529, 7
    %v2531 = vsub.s32 0, %v2530
    %v2532 = vrot.slane %v2527, %v2531
    %v2535 = vsel %vm110, %v2521, 0
    %v2538 = vsel %vm110, %v2522, 0
    %2540 = vmatprep.subr.mxu0 0.0
    %2541 = vmatpush1.msra.mxu0 %v2523
    %2542 = vmatprep.subr.mxu0 0.0
    %2543 = vmatpush1.msra.mxu0 %v2524
    %2544 = vmatprep.subr.mxu0 0.0
    %2545 = vmatpush1.msra.mxu0 %v2525
    %2546 = vmatprep.subr.mxu0 0.0
    %2547 = vmatpush1.msra.mxu0 %v2526
    %2548 = vmatprep.subr.mxu0 0.0
    %2549 = vmatpush1.msra.mxu0 0.0
    %2550 = vmatprep.subr.mxu0 0.0
    %2551 = vmatpush1.msra.mxu0 0.0
    %2552 = vmatprep.subr.mxu0 0.0
    %2553 = vmatpush1.msra.mxu0 0.0
    %2554 = vmatprep.subr.mxu0 0.0
    %2555 = vmatpush1.msra.mxu0 0.0
    %2556 = vmatprep.subr.mxu0 0.0
    %2557 = vmatpush1.msra.mxu0 0.0
    %2558 = vmatprep.subr.mxu0 0.0
    %2559 = vmatpush1.msra.mxu0 0.0
    %2560 = vmatprep.subr.mxu0 0.0
    %2561 = vmatpush1.msra.mxu0 0.0
    %2562 = vmatprep.subr.mxu0 0.0
    %2563 = vmatpush1.msra.mxu0 0.0
    %2564 = vmatprep.subr.mxu0 0.0
    %2565 = vmatpush1.msra.mxu0 0.0
    %2566 = vmatprep.subr.mxu0 0.0
    %2567 = vmatpush1.msra.mxu0 0.0
    %2568 = vmatprep.subr.mxu0 0.0
    %2569 = vmatpush1.msra.mxu0 0.0
    %2570 = vmatprep.subr.mxu0 0.0
    %2571 = vmatpush1.msra.mxu0 0.0
    %2572 = vmatprep.subr.mxu0 0.0
    %2573 = vmatpush1.msra.mxu0 0.0
    %2574 = vmatprep.subr.mxu0 0.0
    %2575 = vmatpush1.msra.mxu0 0.0
    %2576 = vmatprep.subr.mxu0 0.0
    %2577 = vmatpush1.msra.mxu0 0.0
    %2578 = vmatprep.subr.mxu0 0.0
    %2579 = vmatpush1.msra.mxu0 0.0
    %2580 = vmatprep.subr.mxu0 0.0
    %2581 = vmatpush1.msra.mxu0 0.0
    %2582 = vmatprep.subr.mxu0 0.0
    %2583 = vmatpush1.msra.mxu0 0.0
    %2584 = vmatprep.subr.mxu0 0.0
    %2585 = vmatpush1.msra.mxu0 0.0
    %2586 = vmatprep.subr.mxu0 0.0
    %2587 = vmatpush1.msra.mxu0 0.0
    %2588 = vmatprep.subr.mxu0 0.0
    %2589 = vmatpush1.msra.mxu0 0.0
    %2590 = vmatprep.subr.mxu0 0.0
    %2591 = vmatpush1.msra.mxu0 0.0
    %2592 = vmatprep.subr.mxu0 0.0
    %2593 = vmatpush1.msra.mxu0 0.0
    %2594 = vmatprep.subr.mxu0 0.0
    %2595 = vmatpush1.msra.mxu0 0.0
    %2596 = vmatprep.subr.mxu0 0.0
    %2597 = vmatpush1.msra.mxu0 0.0
    %2598 = vmatprep.subr.mxu0 0.0
    %2599 = vmatpush1.msra.mxu0 0.0
    %2600 = vmatprep.subr.mxu0 0.0
    %2601 = vmatpush1.msra.mxu0 0.0
    %2602 = vmatprep.subr.mxu0 0.0
    %2603 = vmatpush1.msra.mxu0 0.0
    %2604 = vmatprep.mubr.f32.mxu0 0.0
    %2605 = vmatmul.mubr.f32.gmra.mrb[0].mxu0 %v2535
    %v2606 = vpop.f32.mrb[0].mxu0
    %v2607 = vadd.f32 %v2532, %v2606
    %v2608 = vpop.f32.mrb[0].mxu0
    %2609 = vmatprep.mubr.f32.mxu0 0.0
    %2610 = vmatmul.mubr.f32.gmra.mrb[0].mxu0 %v2538
    %v2611 = vpop.f32.mrb[0].mxu0
    %v2612 = vadd.f32 %v2532, %v2611
    %v2613 = vpop.f32.mrb[0].mxu0
    %2614 = vdwg.mxu0
    %v2615 = vtanh.pop %v2607
    %v2616 = vtanh.pop %v2612
    %v2617 = vld [vmem:[#allocation7] sm:$0xff]
    %v2618 = vld [vmem:[#allocation7 + $0x8] sm:$0xff]
    %v2619 = vld [vmem:[#allocation7 + $0x10] sm:$0xff]
    %v2620 = vld [vmem:[#allocation7 + $0x18] sm:$0xff]
    %v2621 = vld [vmem:[%s19] sm:$0x1]
    %v2623 = vlaneseq
    %v2624 = vshrl.u32 %v2623, 7
    %v2625 = vsub.s32 0, %v2624
    %v2626 = vrot.slane %v2621, %v2625
    %v2629 = vsel %vm110, %v2615, 0
    %v2632 = vsel %vm110, %v2616, 0
    %2634 = vmatprep.subr.mxu0 0.0
    %2635 = vmatpush1.msra.mxu0 %v2617
    %2636 = vmatprep.subr.mxu0 0.0
    %2637 = vmatpush1.msra.mxu0 %v2618
    %2638 = vmatprep.subr.mxu0 0.0
    %2639 = vmatpush1.msra.mxu0 %v2619
    %2640 = vmatprep.subr.mxu0 0.0
    %2641 = vmatpush1.msra.mxu0 %v2620
    %2642 = vmatprep.subr.mxu0 0.0
    %2643 = vmatpush1.msra.mxu0 0.0
    %2644 = vmatprep.subr.mxu0 0.0
    %2645 = vmatpush1.msra.mxu0 0.0
    %2646 = vmatprep.subr.mxu0 0.0
    %2647 = vmatpush1.msra.mxu0 0.0
    %2648 = vmatprep.subr.mxu0 0.0
    %2649 = vmatpush1.msra.mxu0 0.0
    %2650 = vmatprep.subr.mxu0 0.0
    %2651 = vmatpush1.msra.mxu0 0.0
    %2652 = vmatprep.subr.mxu0 0.0
    %2653 = vmatpush1.msra.mxu0 0.0
    %2654 = vmatprep.subr.mxu0 0.0
    %2655 = vmatpush1.msra.mxu0 0.0
    %2656 = vmatprep.subr.mxu0 0.0
    %2657 = vmatpush1.msra.mxu0 0.0
    %2658 = vmatprep.subr.mxu0 0.0
    %2659 = vmatpush1.msra.mxu0 0.0
    %2660 = vmatprep.subr.mxu0 0.0
    %2661 = vmatpush1.msra.mxu0 0.0
    %2662 = vmatprep.subr.mxu0 0.0
    %2663 = vmatpush1.msra.mxu0 0.0
    %2664 = vmatprep.subr.mxu0 0.0
    %2665 = vmatpush1.msra.mxu0 0.0
    %2666 = vmatprep.subr.mxu0 0.0
    %2667 = vmatpush1.msra.mxu0 0.0
    %2668 = vmatprep.subr.mxu0 0.0
    %2669 = vmatpush1.msra.mxu0 0.0
    %2670 = vmatprep.subr.mxu0 0.0
    %2671 = vmatpush1.msra.mxu0 0.0
    %2672 = vmatprep.subr.mxu0 0.0
    %2673 = vmatpush1.msra.mxu0 0.0
    %2674 = vmatprep.subr.mxu0 0.0
    %2675 = vmatpush1.msra.mxu0 0.0
    %2676 = vmatprep.subr.mxu0 0.0
    %2677 = vmatpush1.msra.mxu0 0.0
    %2678 = vmatprep.subr.mxu0 0.0
    %2679 = vmatpush1.msra.mxu0 0.0
    %2680 = vmatprep.subr.mxu0 0.0
    %2681 = vmatpush1.msra.mxu0 0.0
    %2682 = vmatprep.subr.mxu0 0.0
    %2683 = vmatpush1.msra.mxu0 0.0
    %2684 = vmatprep.subr.mxu0 0.0
    %2685 = vmatpush1.msra.mxu0 0.0
    %2686 = vmatprep.subr.mxu0 0.0
    %2687 = vmatpush1.msra.mxu0 0.0
    %2688 = vmatprep.subr.mxu0 0.0
    %2689 = vmatpush1.msra.mxu0 0.0
    %2690 = vmatprep.subr.mxu0 0.0
    %2691 = vmatpush1.msra.mxu0 0.0
    %2692 = vmatprep.subr.mxu0 0.0
    %2693 = vmatpush1.msra.mxu0 0.0
    %2694 = vmatprep.subr.mxu0 0.0
    %2695 = vmatpush1.msra.mxu0 0.0
    %2696 = vmatprep.subr.mxu0 0.0
    %2697 = vmatpush1.msra.mxu0 0.0
    %2698 = vmatprep.mubr.f32.mxu0 0.0
    %2699 = vmatmul.mubr.f32.gmra.mrb[0].mxu0 %v2629
    %v2700 = vpop.f32.mrb[0].mxu0
    %v2701 = vadd.f32 %v2626, %v2700
    %v2702 = vpop.f32.mrb[0].mxu0
    %2703 = vmatprep.mubr.f32.mxu0 0.0
    %2704 = vmatmul.mubr.f32.gmra.mrb[0].mxu0 %v2632
    %v2705 = vpop.f32.mrb[0].mxu0
    %v2706 = vadd.f32 %v2626, %v2705
    %v2707 = vpop.f32.mrb[0].mxu0
    %2708 = vdwg.mxu0
    %2709 = vst [vmem:[%s20] sm:$0xff] %v2701
    %2710 = vst [vmem:[%s20 + $0x8] sm:$0xff] %v2706
    // Predicated region
    $region94: #{_lambda_.1} parent=1 // pred_check
      _
    $region95: #{_lambda_.1} parent=1 // pred_check_branch
      %2712 = sbr.rel (0) target = $region97
    $region96: #{_lambda_.1} parent=1 // pred_region
      _
    $region97: #{_lambda_.1} parent=1 // pred_fallthru
      _
    // Predicated region
    $region98: #{_lambda_.1} parent=1 // pred_check
      _
    $region99: #{_lambda_.1} parent=1 // pred_check_branch
      %2714 = sbr.rel (0) target = $region101
    $region100: #{_lambda_.1} parent=1 // pred_region
      _
    $region101: #{_lambda_.1} parent=1 // pred_fallthru
      _
    %2715 = vsyncpa [#allocation4], 1
    %2716 = vsyncpa [#allocation6], 1

</llo_original>
